<compile_context>
chip_gen: v7x
topology: tpu7x:2x2x1
jax: 0.10.0
libtpu: 0.0.40
codegen_flags: <defaults>
</compile_context>

<pallas_src>
import functools

import jax
import jax.numpy as jnp
from jax.experimental import pallas as pl
from jax.experimental.pallas import tpu as pltpu


# ----------------------------------------------------------------------------
# Cell step (g-gate pre-scaled by 2 in the weights -> single sigmoid covers all gates)
# ----------------------------------------------------------------------------
def _cell_step(x_proj, h_prev, c_prev, whh_v, H):
    gates = x_proj + jnp.dot(h_prev, whh_v, preferred_element_type=jnp.float32)  # (B, 4H)
    sig = jax.nn.sigmoid(gates)                     # one whole-vreg EUP op
    i_g = sig[:, 0 * H:1 * H]
    f_g = sig[:, 1 * H:2 * H]
    g_g = 2.0 * sig[:, 2 * H:3 * H] - 1.0           # tanh(x) = 2*sigmoid(2x) - 1 (x doubled at init)
    o_g = sig[:, 3 * H:4 * H]
    c_new = f_g * c_prev + i_g * g_g
    h_new = o_g * jnp.tanh(c_new)                   # only remaining tanh per step
    return h_new, c_new


# ----------------------------------------------------------------------------
# Fused kernel (grid=(1,))
# ----------------------------------------------------------------------------
def _fused_lstm_kernel(seq_len, batch, hidden, n_layers, feat, *refs):
    """ref order:
      tok [S*B, 1] int32 (t-major),
      table0 [feat, 4H] (embedding @ W_ih0^T + b_ih0 + b_hh0, g-cols x2),
      whh0 [H, 4H],
      for each l=1..L-1: wih_l [H,4H], whh_l [H,4H], b_l [1,4H],
      h0 [L,B,H], c0 [L,B,H], fc_w [1,H], fc_b [1,1],
      outputs: sig_out [B,1], h_n [L,B,H], c_n [L,B,H]
    """
    S, B, H, L, F = seq_len, batch, hidden, n_layers, feat
    idx = 0
    tok = refs[idx]; idx += 1
    table0 = refs[idx]; idx += 1
    whh_v = [None] * L
    wih_v = [None] * L
    b_v = [None] * L
    whh_v[0] = refs[idx][...]; idx += 1
    for l in range(1, L):
        wih_v[l] = refs[idx][...]; idx += 1
        whh_v[l] = refs[idx][...]; idx += 1
        b_v[l] = refs[idx][...]; idx += 1
    h0 = refs[idx]; idx += 1
    c0 = refs[idx]; idx += 1
    fc_w = refs[idx]; idx += 1
    fc_b = refs[idx]; idx += 1
    sig_out = refs[idx]; idx += 1
    h_n = refs[idx]; idx += 1
    c_n = refs[idx]; idx += 1

    # ---- layer-0 input projections, hoisted: one-hot(tokens) @ folded table (off h-chain)
    one_hot = (tok[...] ==
               jax.lax.broadcasted_iota(jnp.int32, (S * B, F), 1)).astype(jnp.float32)
    xp0_all = jnp.dot(one_hot, table0[...],
                      preferred_element_type=jnp.float32)          # (S*B, 4H), t-major

    # ---- wavefront over (layer, time): wave w runs layer l's step t = w - l.
    # Cells within a wave are mutually independent -> scheduler overlaps their latency.
    h_state = [h0[l] for l in range(L)]
    c_state = [c0[l] for l in range(L)]
    for w in range(S + L - 1):                      # static, fully unrolled
        prev_h = list(h_state)                      # layer outputs as of the previous wave
        new_h = list(h_state)
        new_c = list(c_state)
        for l in range(L):
            t = w - l
            if 0 <= t < S:
                if l == 0:
                    xp = xp0_all[t * B:(t + 1) * B, :]              # static slice (B, 4H)
                else:
                    xp = jnp.dot(prev_h[l - 1], wih_v[l],
                                 preferred_element_type=jnp.float32) + b_v[l]
                new_h[l], new_c[l] = _cell_step(xp, h_state[l], c_state[l], whh_v[l], H)
        h_state = new_h
        c_state = new_c

    for l in range(L):
        h_n[l] = h_state[l]
        c_n[l] = c_state[l]

    # ---- fc + sigmoid on the last-step hidden of the top layer (== sigmoid_last)
    z = jnp.sum(h_state[L - 1] * fc_w[...], axis=-1, keepdims=True) + fc_b[...]   # (B, 1)
    sig_out[...] = jax.nn.sigmoid(z)


# ----------------------------------------------------------------------------
# Wrapper
# ----------------------------------------------------------------------------
def lstm_model_forward(params, x_tokens, hidden):
    """x_tokens: int32 [B, S]; hidden: (h0, c0) each f32 [L, B, H].
    Returns (sigmoid_last [B], (h_n, c_n))."""
    h0, c0 = hidden
    L, B, H = h0.shape
    S = x_tokens.shape[1]
    F = params["table0"].shape[0]

    # t-major flattened tokens (row t*B + b) so each step's x_proj is a static slice.
    tok_flat = x_tokens.T.reshape(S * B, 1).astype(jnp.int32)

    inputs = [tok_flat, params["table0"], params["whh0"]]
    in_specs = [
        pl.BlockSpec((S * B, 1), lambda i: (0, 0)),
        pl.BlockSpec((F, 4 * H), lambda i: (0, 0)),
        pl.BlockSpec((H, 4 * H), lambda i: (0, 0)),
    ]
    for (wih, whh, b) in params["upper"]:
        inputs += [wih, whh, b]
        in_specs += [
            pl.BlockSpec((H, 4 * H), lambda i: (0, 0)),
            pl.BlockSpec((H, 4 * H), lambda i: (0, 0)),
            pl.BlockSpec((1, 4 * H), lambda i: (0, 0)),
        ]
    inputs += [h0, c0, params["fc_w"], params["fc_b"]]
    in_specs += [
        pl.BlockSpec((L, B, H), lambda i: (0, 0, 0)),
        pl.BlockSpec((L, B, H), lambda i: (0, 0, 0)),
        pl.BlockSpec((1, H), lambda i: (0, 0)),
        pl.BlockSpec((1, 1), lambda i: (0, 0)),
    ]

    out_shape = (
        jax.ShapeDtypeStruct((B, 1), jnp.float32),
        jax.ShapeDtypeStruct((L, B, H), jnp.float32),
        jax.ShapeDtypeStruct((L, B, H), jnp.float32),
    )
    out_specs = (
        pl.BlockSpec((B, 1), lambda i: (0, 0)),
        pl.BlockSpec((L, B, H), lambda i: (0, 0, 0)),
        pl.BlockSpec((L, B, H), lambda i: (0, 0, 0)),
    )

    kernel = functools.partial(_fused_lstm_kernel, S, B, H, L, F)
    sig, h_n, c_n = pl.pallas_call(
        kernel,
        out_shape=out_shape,
        grid_spec=pltpu.PrefetchScalarGridSpec(
            num_scalar_prefetch=0,
            grid=(1,),
            in_specs=in_specs,
            out_specs=out_specs,
        ),
        compiler_params=pltpu.CompilerParams(
            dimension_semantics=("arbitrary",)),
    )(*inputs)

    return sig[:, 0], (h_n, c_n)


# ----------------------------------------------------------------------------
# Parameter init: PyTorch-shaped raw params + pre-folded / pre-transposed kernel params
# ----------------------------------------------------------------------------
def _scale_g(arr, H):
    """Scale the g-gate (3rd) column block by 2 (tanh(x) = 2*sigmoid(2x) - 1 trick)."""
    return arr.at[..., 2 * H:3 * H].multiply(2.0)


def init_params(key, feat_size, embed_size, hidden_size, n_layers):
    keys = jax.random.split(key, 3 + 4 * n_layers)
    k_emb, k_fcw, k_fcb = keys[0], keys[1], keys[2]
    lstm_keys = keys[3:]

    embedding = jax.random.normal(k_emb, (feat_size, embed_size), dtype=jnp.float32)

    bound = 1.0 / jnp.sqrt(hidden_size)
    raw_layers = []
    for l in range(n_layers):
        in_size = embed_size if l == 0 else hidden_size
        kw1, kw2, kb1, kb2 = lstm_keys[4 * l: 4 * l + 4]
        w_ih = jax.random.uniform(kw1, (4 * hidden_size, in_size),
                                  minval=-bound, maxval=bound, dtype=jnp.float32)
        w_hh = jax.random.uniform(kw2, (4 * hidden_size, hidden_size),
                                  minval=-bound, maxval=bound, dtype=jnp.float32)
        b_ih = jax.random.uniform(kb1, (4 * hidden_size,),
                                  minval=-bound, maxval=bound, dtype=jnp.float32)
        b_hh = jax.random.uniform(kb2, (4 * hidden_size,),
                                  minval=-bound, maxval=bound, dtype=jnp.float32)
        raw_layers.append((w_ih, w_hh, b_ih, b_hh))

    fc_bound = 1.0 / jnp.sqrt(hidden_size)
    fc_w = jax.random.uniform(k_fcw, (1, hidden_size),
                              minval=-fc_bound, maxval=fc_bound, dtype=jnp.float32)
    fc_b = jax.random.uniform(k_fcb, (1,),
                              minval=-fc_bound, maxval=fc_bound, dtype=jnp.float32)

    raw = {"embedding": embedding, "lstm": raw_layers, "fc_w": fc_w, "fc_b": fc_b}

    H = hidden_size
    kp = {}
    # Layer 0: fold embedding @ W_ih0^T + (b_ih0 + b_hh0) into one [feat, 4H] table.
    w_ih0, w_hh0, b_ih0, b_hh0 = raw_layers[0]
    kp["table0"] = _scale_g(embedding @ w_ih0.T + (b_ih0 + b_hh0)[None, :], H)  # [feat, 4H]
    kp["whh0"] = _scale_g(w_hh0.T, H)                                           # [H, 4H]
    upper = []
    for l in range(1, n_layers):
        w_ih, w_hh, b_ih, b_hh = raw_layers[l]
        upper.append((_scale_g(w_ih.T, H),
                      _scale_g(w_hh.T, H),
                      _scale_g((b_ih + b_hh)[None, :], H)))       # [H,4H], [H,4H], [1,4H]
    kp["upper"] = upper
    kp["fc_w"] = fc_w                   # [1, H]
    kp["fc_b"] = fc_b[None, :]          # [1, 1]
    return kp, raw


# ----------------------------------------------------------------------------
# Pure-JAX reference with RAW (PyTorch-semantics) params — validates folding + g-scaling
# ----------------------------------------------------------------------------
def _reference_forward(raw, x_tokens, hidden):
    h_all, c_all = hidden
    L, B, H = h_all.shape
    S = x_tokens.shape[1]

    layer_in = raw["embedding"][x_tokens]              # (B, S, E)
    h_fin, c_fin = [], []
    for l, (w_ih, w_hh, b_ih, b_hh) in enumerate(raw["lstm"]):
        h, c = h_all[l], c_all[l]
        outs = []
        for t in range(S):
            gates = layer_in[:, t, :] @ w_ih.T + b_ih + h @ w_hh.T + b_hh
            i_g = jax.nn.sigmoid(gates[:, 0 * H:1 * H])
            f_g = jax.nn.sigmoid(gates[:, 1 * H:2 * H])
            g_g = jnp.tanh(gates[:, 2 * H:3 * H])
            o_g = jax.nn.sigmoid(gates[:, 3 * H:4 * H])
            c = f_g * c + i_g * g_g
            h = o_g * jnp.tanh(c)
            outs.append(h)
        layer_in = jnp.stack(outs, axis=1)              # (B, S, H)
        h_fin.append(h)
        c_fin.append(c)
    # dropout is identity in eval mode
    lstm_out = layer_in.reshape(-1, H)                  # (B*S, H)
    fc_out = lstm_out @ raw["fc_w"].T + raw["fc_b"]     # (B*S, 1)
    sig = jax.nn.sigmoid(fc_out).reshape(B, S)
    return sig[:, -1], (jnp.stack(h_fin, 0), jnp.stack(c_fin, 0))


# ----------------------------------------------------------------------------
# Main
# ----------------------------------------------------------------------------
if __name__ == "__main__":
    feat_size = 40
    embed_size = 32
    hidden_size = 32
    n_layers = 2
    batch_size = 2
    seq_len = 8

    key = jax.random.PRNGKey(0)
    k_params, k_x = jax.random.split(key)

    params, raw = init_params(k_params, feat_size, embed_size, hidden_size, n_layers)

    x_tokens = jax.random.randint(k_x, (batch_size, seq_len), 0, feat_size,
                                  dtype=jnp.int32)
    h0 = jnp.zeros((n_layers, batch_size, hidden_size), dtype=jnp.float32)
    c0 = jnp.zeros((n_layers, batch_size, hidden_size), dtype=jnp.float32)

    fwd = jax.jit(lstm_model_forward)
    sigmoid_last, (h_n, c_n) = fwd(params, x_tokens, (h0, c0))
    jax.block_until_ready((sigmoid_last, h_n, c_n))

    assert sigmoid_last.shape == (batch_size,)
    assert h_n.shape == (n_layers, batch_size, hidden_size)
    assert c_n.shape == (n_layers, batch_size, hidden_size)

    # Sanity-check against a raw-parameter (PyTorch-semantics) reference.
    ref_sig, (ref_h, ref_c) = _reference_forward(raw, x_tokens, (h0, c0))
    assert float(jnp.max(jnp.abs(sigmoid_last - ref_sig))) < 2e-3
    assert float(jnp.max(jnp.abs(h_n - ref_h))) < 2e-3
    assert float(jnp.max(jnp.abs(c_n - ref_c))) < 2e-3

    print("KERNEL_OK")
</pallas_src>

<mosaic_0001>
module attributes {stable_mosaic.version = 11 : i64} {
  func.func @_fused_lstm_kernel(%arg0: i32, %arg1: memref<16x1xi32, #tpu.memory_space<vmem>>, %arg2: memref<40x128xf32, #tpu.memory_space<vmem>>, %arg3: memref<32x128xf32, #tpu.memory_space<vmem>>, %arg4: memref<32x128xf32, #tpu.memory_space<vmem>>, %arg5: memref<32x128xf32, #tpu.memory_space<vmem>>, %arg6: memref<1x128xf32, #tpu.memory_space<vmem>>, %arg7: memref<2x2x32xf32, #tpu.memory_space<vmem>>, %arg8: memref<2x2x32xf32, #tpu.memory_space<vmem>>, %arg9: memref<1x32xf32, #tpu.memory_space<vmem>>, %arg10: memref<1x1xf32, #tpu.memory_space<vmem>>, %arg11: memref<2x1xf32, #tpu.memory_space<vmem>>, %arg12: memref<2x2x32xf32, #tpu.memory_space<vmem>>, %arg13: memref<2x2x32xf32, #tpu.memory_space<vmem>>) attributes {dimension_semantics = [#tpu.dimension_semantics<arbitrary>], iteration_bounds = array<i64: 1>, scalar_prefetch = 0 : i64, scratch_operands = 0 : i64, tpu.core_type = #tpu.core_type<tc>, window_params = [{pipeline_mode = #tpu.pipeline_mode<synchronous>, transform_indices = @transform_0, window_bounds = array<i64: 16, 1>}, {pipeline_mode = #tpu.pipeline_mode<synchronous>, transform_indices = @transform_1, window_bounds = array<i64: 40, 128>}, {pipeline_mode = #tpu.pipeline_mode<synchronous>, transform_indices = @transform_2, window_bounds = array<i64: 32, 128>}, {pipeline_mode = #tpu.pipeline_mode<synchronous>, transform_indices = @transform_3, window_bounds = array<i64: 32, 128>}, {pipeline_mode = #tpu.pipeline_mode<synchronous>, transform_indices = @transform_4, window_bounds = array<i64: 32, 128>}, {pipeline_mode = #tpu.pipeline_mode<synchronous>, transform_indices = @transform_5, window_bounds = array<i64: 1, 128>}, {pipeline_mode = #tpu.pipeline_mode<synchronous>, transform_indices = @transform_6, window_bounds = array<i64: 2, 2, 32>}, {pipeline_mode = #tpu.pipeline_mode<synchronous>, transform_indices = @transform_7, window_bounds = array<i64: 2, 2, 32>}, {pipeline_mode = #tpu.pipeline_mode<synchronous>, transform_indices = @transform_8, window_bounds = array<i64: 1, 32>}, {pipeline_mode = #tpu.pipeline_mode<synchronous>, transform_indices = @transform_9, window_bounds = array<i64: 1, 1>}, {pipeline_mode = #tpu.pipeline_mode<synchronous>, transform_indices = @transform_10, window_bounds = array<i64: 2, 1>}, {pipeline_mode = #tpu.pipeline_mode<synchronous>, transform_indices = @transform_11, window_bounds = array<i64: 2, 2, 32>}, {pipeline_mode = #tpu.pipeline_mode<synchronous>, transform_indices = @transform_12, window_bounds = array<i64: 2, 2, 32>}]} {
    %c0 = arith.constant 0 : index
    %c0_0 = arith.constant 0 : index
    %0 = vector.load %arg3[%c0, %c0_0] : memref<32x128xf32, #tpu.memory_space<vmem>>, vector<32x128xf32>
    %c0_1 = arith.constant 0 : index
    %c0_2 = arith.constant 0 : index
    %1 = vector.load %arg4[%c0_1, %c0_2] : memref<32x128xf32, #tpu.memory_space<vmem>>, vector<32x128xf32>
    %c0_3 = arith.constant 0 : index
    %c0_4 = arith.constant 0 : index
    %2 = vector.load %arg5[%c0_3, %c0_4] : memref<32x128xf32, #tpu.memory_space<vmem>>, vector<32x128xf32>
    %c0_5 = arith.constant 0 : index
    %c0_6 = arith.constant 0 : index
    %3 = vector.load %arg6[%c0_5, %c0_6] : memref<1x128xf32, #tpu.memory_space<vmem>>, vector<1x128xf32>
    %c0_7 = arith.constant 0 : index
    %c0_8 = arith.constant 0 : index
    %4 = vector.load %arg1[%c0_7, %c0_8] : memref<16x1xi32, #tpu.memory_space<vmem>>, vector<16x1xi32>
    %5 = tpu.iota {dimensions = array<i32: 1>} : vector<16x40xi32>
    %6 = vector.broadcast %4 : vector<16x1xi32> to vector<16x40xi32>
    %7 = arith.cmpi eq, %6, %5 : vector<16x40xi32>
    %8 = arith.extui %7 : vector<16x40xi1> to vector<16x40xi32>
    %9 = arith.sitofp %8 : vector<16x40xi32> to vector<16x40xf32>
    %c0_9 = arith.constant 0 : index
    %c0_10 = arith.constant 0 : index
    %10 = vector.load %arg2[%c0_9, %c0_10] : memref<40x128xf32, #tpu.memory_space<vmem>>, vector<40x128xf32>
    %cst = arith.constant dense<0.000000e+00> : vector<16x128xf32>
    %11 = tpu.matmul %9, %10, %cst {dimension_numbers = #tpu.dot_dimension_numbers<[1], [0], [0], [1], [0, 0, 1, 1], [], []>} : vector<16x40xf32>, vector<40x128xf32>, vector<16x128xf32> -> vector<16x128xf32>
    %c0_11 = arith.constant 0 : index
    %c0_12 = arith.constant 0 : index
    %c0_13 = arith.constant 0 : index
    %12 = vector.load %arg7[%c0_11, %c0_12, %c0_13] : memref<2x2x32xf32, #tpu.memory_space<vmem>>, vector<1x2x32xf32>
    %13 = vector.shape_cast %12 : vector<1x2x32xf32> to vector<2x32xf32>
    %c1 = arith.constant 1 : index
    %c0_14 = arith.constant 0 : index
    %c0_15 = arith.constant 0 : index
    %14 = vector.load %arg7[%c1, %c0_14, %c0_15] : memref<2x2x32xf32, #tpu.memory_space<vmem>>, vector<1x2x32xf32>
    %15 = vector.shape_cast %14 : vector<1x2x32xf32> to vector<2x32xf32>
    %c0_16 = arith.constant 0 : index
    %c0_17 = arith.constant 0 : index
    %c0_18 = arith.constant 0 : index
    %16 = vector.load %arg8[%c0_16, %c0_17, %c0_18] : memref<2x2x32xf32, #tpu.memory_space<vmem>>, vector<1x2x32xf32>
    %17 = vector.shape_cast %16 : vector<1x2x32xf32> to vector<2x32xf32>
    %c1_19 = arith.constant 1 : index
    %c0_20 = arith.constant 0 : index
    %c0_21 = arith.constant 0 : index
    %18 = vector.load %arg8[%c1_19, %c0_20, %c0_21] : memref<2x2x32xf32, #tpu.memory_space<vmem>>, vector<1x2x32xf32>
    %19 = vector.shape_cast %18 : vector<1x2x32xf32> to vector<2x32xf32>
    %20 = vector.extract_strided_slice %11 {offsets = [0, 0], sizes = [2, 128], strides = [1, 1]} : vector<16x128xf32> to vector<2x128xf32>
    %cst_22 = arith.constant dense<0.000000e+00> : vector<2x128xf32>
    %21 = tpu.matmul %13, %0, %cst_22 {dimension_numbers = #tpu.dot_dimension_numbers<[1], [0], [0], [1], [0, 0, 1, 1], [], []>} : vector<2x32xf32>, vector<32x128xf32>, vector<2x128xf32> -> vector<2x128xf32>
    %22 = arith.addf %20, %21 : vector<2x128xf32>
    %23 = arith.negf %22 : vector<2x128xf32>
    %24 = math.exp %23 : vector<2x128xf32>
    %cst_23 = arith.constant 1.000000e+00 : f32
    %25 = vector.broadcast %cst_23 : f32 to vector<2x128xf32>
    %26 = arith.addf %25, %24 : vector<2x128xf32>
    %27 = arith.divf %25, %26 : vector<2x128xf32>
    %28 = vector.extract_strided_slice %27 {offsets = [0, 0], sizes = [2, 32], strides = [1, 1]} : vector<2x128xf32> to vector<2x32xf32>
    %29 = vector.extract_strided_slice %27 {offsets = [0, 32], sizes = [2, 32], strides = [1, 1]} : vector<2x128xf32> to vector<2x32xf32>
    %30 = vector.extract_strided_slice %27 {offsets = [0, 64], sizes = [2, 32], strides = [1, 1]} : vector<2x128xf32> to vector<2x32xf32>
    %cst_24 = arith.constant 2.000000e+00 : f32
    %31 = vector.broadcast %cst_24 : f32 to vector<2x32xf32>
    %32 = arith.mulf %31, %30 : vector<2x32xf32>
    %cst_25 = arith.constant 1.000000e+00 : f32
    %33 = vector.broadcast %cst_25 : f32 to vector<2x32xf32>
    %34 = arith.subf %32, %33 : vector<2x32xf32>
    %35 = vector.extract_strided_slice %27 {offsets = [0, 96], sizes = [2, 32], strides = [1, 1]} : vector<2x128xf32> to vector<2x32xf32>
    %36 = arith.mulf %29, %17 : vector<2x32xf32>
    %37 = arith.mulf %28, %34 : vector<2x32xf32>
    %38 = arith.addf %36, %37 : vector<2x32xf32>
    %39 = math.tanh %38 : vector<2x32xf32>
    %40 = arith.mulf %35, %39 : vector<2x32xf32>
    %41 = vector.extract_strided_slice %11 {offsets = [2, 0], sizes = [2, 128], strides = [1, 1]} : vector<16x128xf32> to vector<2x128xf32>
    %cst_26 = arith.constant dense<0.000000e+00> : vector<2x128xf32>
    %42 = tpu.matmul %40, %0, %cst_26 {dimension_numbers = #tpu.dot_dimension_numbers<[1], [0], [0], [1], [0, 0, 1, 1], [], []>} : vector<2x32xf32>, vector<32x128xf32>, vector<2x128xf32> -> vector<2x128xf32>
    %43 = arith.addf %41, %42 : vector<2x128xf32>
    %44 = arith.negf %43 : vector<2x128xf32>
    %45 = math.exp %44 : vector<2x128xf32>
    %cst_27 = arith.constant 1.000000e+00 : f32
    %46 = vector.broadcast %cst_27 : f32 to vector<2x128xf32>
    %47 = arith.addf %46, %45 : vector<2x128xf32>
    %48 = arith.divf %46, %47 : vector<2x128xf32>
    %49 = vector.extract_strided_slice %48 {offsets = [0, 0], sizes = [2, 32], strides = [1, 1]} : vector<2x128xf32> to vector<2x32xf32>
    %50 = vector.extract_strided_slice %48 {offsets = [0, 32], sizes = [2, 32], strides = [1, 1]} : vector<2x128xf32> to vector<2x32xf32>
    %51 = vector.extract_strided_slice %48 {offsets = [0, 64], sizes = [2, 32], strides = [1, 1]} : vector<2x128xf32> to vector<2x32xf32>
    %cst_28 = arith.constant 2.000000e+00 : f32
    %52 = vector.broadcast %cst_28 : f32 to vector<2x32xf32>
    %53 = arith.mulf %52, %51 : vector<2x32xf32>
    %cst_29 = arith.constant 1.000000e+00 : f32
    %54 = vector.broadcast %cst_29 : f32 to vector<2x32xf32>
    %55 = arith.subf %53, %54 : vector<2x32xf32>
    %56 = vector.extract_strided_slice %48 {offsets = [0, 96], sizes = [2, 32], strides = [1, 1]} : vector<2x128xf32> to vector<2x32xf32>
    %57 = arith.mulf %50, %38 : vector<2x32xf32>
    %58 = arith.mulf %49, %55 : vector<2x32xf32>
    %59 = arith.addf %57, %58 : vector<2x32xf32>
    %60 = math.tanh %59 : vector<2x32xf32>
    %61 = arith.mulf %56, %60 : vector<2x32xf32>
    %cst_30 = arith.constant dense<0.000000e+00> : vector<2x128xf32>
    %62 = tpu.matmul %40, %1, %cst_30 {dimension_numbers = #tpu.dot_dimension_numbers<[1], [0], [0], [1], [0, 0, 1, 1], [], []>} : vector<2x32xf32>, vector<32x128xf32>, vector<2x128xf32> -> vector<2x128xf32>
    %63 = vector.broadcast %3 : vector<1x128xf32> to vector<2x128xf32>
    %64 = arith.addf %62, %63 : vector<2x128xf32>
    %cst_31 = arith.constant dense<0.000000e+00> : vector<2x128xf32>
    %65 = tpu.matmul %15, %2, %cst_31 {dimension_numbers = #tpu.dot_dimension_numbers<[1], [0], [0], [1], [0, 0, 1, 1], [], []>} : vector<2x32xf32>, vector<32x128xf32>, vector<2x128xf32> -> vector<2x128xf32>
    %66 = arith.addf %64, %65 : vector<2x128xf32>
    %67 = arith.negf %66 : vector<2x128xf32>
    %68 = math.exp %67 : vector<2x128xf32>
    %cst_32 = arith.constant 1.000000e+00 : f32
    %69 = vector.broadcast %cst_32 : f32 to vector<2x128xf32>
    %70 = arith.addf %69, %68 : vector<2x128xf32>
    %71 = arith.divf %69, %70 : vector<2x128xf32>
    %72 = vector.extract_strided_slice %71 {offsets = [0, 0], sizes = [2, 32], strides = [1, 1]} : vector<2x128xf32> to vector<2x32xf32>
    %73 = vector.extract_strided_slice %71 {offsets = [0, 32], sizes = [2, 32], strides = [1, 1]} : vector<2x128xf32> to vector<2x32xf32>
    %74 = vector.extract_strided_slice %71 {offsets = [0, 64], sizes = [2, 32], strides = [1, 1]} : vector<2x128xf32> to vector<2x32xf32>
    %cst_33 = arith.constant 2.000000e+00 : f32
    %75 = vector.broadcast %cst_33 : f32 to vector<2x32xf32>
    %76 = arith.mulf %75, %74 : vector<2x32xf32>
    %cst_34 = arith.constant 1.000000e+00 : f32
    %77 = vector.broadcast %cst_34 : f32 to vector<2x32xf32>
    %78 = arith.subf %76, %77 : vector<2x32xf32>
    %79 = vector.extract_strided_slice %71 {offsets = [0, 96], sizes = [2, 32], strides = [1, 1]} : vector<2x128xf32> to vector<2x32xf32>
    %80 = arith.mulf %73, %19 : vector<2x32xf32>
    %81 = arith.mulf %72, %78 : vector<2x32xf32>
    %82 = arith.addf %80, %81 : vector<2x32xf32>
    %83 = math.tanh %82 : vector<2x32xf32>
    %84 = arith.mulf %79, %83 : vector<2x32xf32>
    %85 = vector.extract_strided_slice %11 {offsets = [4, 0], sizes = [2, 128], strides = [1, 1]} : vector<16x128xf32> to vector<2x128xf32>
    %cst_35 = arith.constant dense<0.000000e+00> : vector<2x128xf32>
    %86 = tpu.matmul %61, %0, %cst_35 {dimension_numbers = #tpu.dot_dimension_numbers<[1], [0], [0], [1], [0, 0, 1, 1], [], []>} : vector<2x32xf32>, vector<32x128xf32>, vector<2x128xf32> -> vector<2x128xf32>
    %87 = arith.addf %85, %86 : vector<2x128xf32>
    %88 = arith.negf %87 : vector<2x128xf32>
    %89 = math.exp %88 : vector<2x128xf32>
    %cst_36 = arith.constant 1.000000e+00 : f32
    %90 = vector.broadcast %cst_36 : f32 to vector<2x128xf32>
    %91 = arith.addf %90, %89 : vector<2x128xf32>
    %92 = arith.divf %90, %91 : vector<2x128xf32>
    %93 = vector.extract_strided_slice %92 {offsets = [0, 0], sizes = [2, 32], strides = [1, 1]} : vector<2x128xf32> to vector<2x32xf32>
    %94 = vector.extract_strided_slice %92 {offsets = [0, 32], sizes = [2, 32], strides = [1, 1]} : vector<2x128xf32> to vector<2x32xf32>
    %95 = vector.extract_strided_slice %92 {offsets = [0, 64], sizes = [2, 32], strides = [1, 1]} : vector<2x128xf32> to vector<2x32xf32>
    %cst_37 = arith.constant 2.000000e+00 : f32
    %96 = vector.broadcast %cst_37 : f32 to vector<2x32xf32>
    %97 = arith.mulf %96, %95 : vector<2x32xf32>
    %cst_38 = arith.constant 1.000000e+00 : f32
    %98 = vector.broadcast %cst_38 : f32 to vector<2x32xf32>
    %99 = arith.subf %97, %98 : vector<2x32xf32>
    %100 = vector.extract_strided_slice %92 {offsets = [0, 96], sizes = [2, 32], strides = [1, 1]} : vector<2x128xf32> to vector<2x32xf32>
    %101 = arith.mulf %94, %59 : vector<2x32xf32>
    %102 = arith.mulf %93, %99 : vector<2x32xf32>
    %103 = arith.addf %101, %102 : vector<2x32xf32>
    %104 = math.tanh %103 : vector<2x32xf32>
    %105 = arith.mulf %100, %104 : vector<2x32xf32>
    %cst_39 = arith.constant dense<0.000000e+00> : vector<2x128xf32>
    %106 = tpu.matmul %61, %1, %cst_39 {dimension_numbers = #tpu.dot_dimension_numbers<[1], [0], [0], [1], [0, 0, 1, 1], [], []>} : vector<2x32xf32>, vector<32x128xf32>, vector<2x128xf32> -> vector<2x128xf32>
    %107 = vector.broadcast %3 : vector<1x128xf32> to vector<2x128xf32>
    %108 = arith.addf %106, %107 : vector<2x128xf32>
    %cst_40 = arith.constant dense<0.000000e+00> : vector<2x128xf32>
    %109 = tpu.matmul %84, %2, %cst_40 {dimension_numbers = #tpu.dot_dimension_numbers<[1], [0], [0], [1], [0, 0, 1, 1], [], []>} : vector<2x32xf32>, vector<32x128xf32>, vector<2x128xf32> -> vector<2x128xf32>
    %110 = arith.addf %108, %109 : vector<2x128xf32>
    %111 = arith.negf %110 : vector<2x128xf32>
    %112 = math.exp %111 : vector<2x128xf32>
    %cst_41 = arith.constant 1.000000e+00 : f32
    %113 = vector.broadcast %cst_41 : f32 to vector<2x128xf32>
    %114 = arith.addf %113, %112 : vector<2x128xf32>
    %115 = arith.divf %113, %114 : vector<2x128xf32>
    %116 = vector.extract_strided_slice %115 {offsets = [0, 0], sizes = [2, 32], strides = [1, 1]} : vector<2x128xf32> to vector<2x32xf32>
    %117 = vector.extract_strided_slice %115 {offsets = [0, 32], sizes = [2, 32], strides = [1, 1]} : vector<2x128xf32> to vector<2x32xf32>
    %118 = vector.extract_strided_slice %115 {offsets = [0, 64], sizes = [2, 32], strides = [1, 1]} : vector<2x128xf32> to vector<2x32xf32>
    %cst_42 = arith.constant 2.000000e+00 : f32
    %119 = vector.broadcast %cst_42 : f32 to vector<2x32xf32>
    %120 = arith.mulf %119, %118 : vector<2x32xf32>
    %cst_43 = arith.constant 1.000000e+00 : f32
    %121 = vector.broadcast %cst_43 : f32 to vector<2x32xf32>
    %122 = arith.subf %120, %121 : vector<2x32xf32>
    %123 = vector.extract_strided_slice %115 {offsets = [0, 96], sizes = [2, 32], strides = [1, 1]} : vector<2x128xf32> to vector<2x32xf32>
    %124 = arith.mulf %117, %82 : vector<2x32xf32>
    %125 = arith.mulf %116, %122 : vector<2x32xf32>
    %126 = arith.addf %124, %125 : vector<2x32xf32>
    %127 = math.tanh %126 : vector<2x32xf32>
    %128 = arith.mulf %123, %127 : vector<2x32xf32>
    %129 = vector.extract_strided_slice %11 {offsets = [6, 0], sizes = [2, 128], strides = [1, 1]} : vector<16x128xf32> to vector<2x128xf32>
    %cst_44 = arith.constant dense<0.000000e+00> : vector<2x128xf32>
    %130 = tpu.matmul %105, %0, %cst_44 {dimension_numbers = #tpu.dot_dimension_numbers<[1], [0], [0], [1], [0, 0, 1, 1], [], []>} : vector<2x32xf32>, vector<32x128xf32>, vector<2x128xf32> -> vector<2x128xf32>
    %131 = arith.addf %129, %130 : vector<2x128xf32>
    %132 = arith.negf %131 : vector<2x128xf32>
    %133 = math.exp %132 : vector<2x128xf32>
    %cst_45 = arith.constant 1.000000e+00 : f32
    %134 = vector.broadcast %cst_45 : f32 to vector<2x128xf32>
    %135 = arith.addf %134, %133 : vector<2x128xf32>
    %136 = arith.divf %134, %135 : vector<2x128xf32>
    %137 = vector.extract_strided_slice %136 {offsets = [0, 0], sizes = [2, 32], strides = [1, 1]} : vector<2x128xf32> to vector<2x32xf32>
    %138 = vector.extract_strided_slice %136 {offsets = [0, 32], sizes = [2, 32], strides = [1, 1]} : vector<2x128xf32> to vector<2x32xf32>
    %139 = vector.extract_strided_slice %136 {offsets = [0, 64], sizes = [2, 32], strides = [1, 1]} : vector<2x128xf32> to vector<2x32xf32>
    %cst_46 = arith.constant 2.000000e+00 : f32
    %140 = vector.broadcast %cst_46 : f32 to vector<2x32xf32>
    %141 = arith.mulf %140, %139 : vector<2x32xf32>
    %cst_47 = arith.constant 1.000000e+00 : f32
    %142 = vector.broadcast %cst_47 : f32 to vector<2x32xf32>
    %143 = arith.subf %141, %142 : vector<2x32xf32>
    %144 = vector.extract_strided_slice %136 {offsets = [0, 96], sizes = [2, 32], strides = [1, 1]} : vector<2x128xf32> to vector<2x32xf32>
    %145 = arith.mulf %138, %103 : vector<2x32xf32>
    %146 = arith.mulf %137, %143 : vector<2x32xf32>
    %147 = arith.addf %145, %146 : vector<2x32xf32>
    %148 = math.tanh %147 : vector<2x32xf32>
    %149 = arith.mulf %144, %148 : vector<2x32xf32>
    %cst_48 = arith.constant dense<0.000000e+00> : vector<2x128xf32>
    %150 = tpu.matmul %105, %1, %cst_48 {dimension_numbers = #tpu.dot_dimension_numbers<[1], [0], [0], [1], [0, 0, 1, 1], [], []>} : vector<2x32xf32>, vector<32x128xf32>, vector<2x128xf32> -> vector<2x128xf32>
    %151 = vector.broadcast %3 : vector<1x128xf32> to vector<2x128xf32>
    %152 = arith.addf %150, %151 : vector<2x128xf32>
    %cst_49 = arith.constant dense<0.000000e+00> : vector<2x128xf32>
    %153 = tpu.matmul %128, %2, %cst_49 {dimension_numbers = #tpu.dot_dimension_numbers<[1], [0], [0], [1], [0, 0, 1, 1], [], []>} : vector<2x32xf32>, vector<32x128xf32>, vector<2x128xf32> -> vector<2x128xf32>
    %154 = arith.addf %152, %153 : vector<2x128xf32>
    %155 = arith.negf %154 : vector<2x128xf32>
    %156 = math.exp %155 : vector<2x128xf32>
    %cst_50 = arith.constant 1.000000e+00 : f32
    %157 = vector.broadcast %cst_50 : f32 to vector<2x128xf32>
    %158 = arith.addf %157, %156 : vector<2x128xf32>
    %159 = arith.divf %157, %158 : vector<2x128xf32>
    %160 = vector.extract_strided_slice %159 {offsets = [0, 0], sizes = [2, 32], strides = [1, 1]} : vector<2x128xf32> to vector<2x32xf32>
    %161 = vector.extract_strided_slice %159 {offsets = [0, 32], sizes = [2, 32], strides = [1, 1]} : vector<2x128xf32> to vector<2x32xf32>
    %162 = vector.extract_strided_slice %159 {offsets = [0, 64], sizes = [2, 32], strides = [1, 1]} : vector<2x128xf32> to vector<2x32xf32>
    %cst_51 = arith.constant 2.000000e+00 : f32
    %163 = vector.broadcast %cst_51 : f32 to vector<2x32xf32>
    %164 = arith.mulf %163, %162 : vector<2x32xf32>
    %cst_52 = arith.constant 1.000000e+00 : f32
    %165 = vector.broadcast %cst_52 : f32 to vector<2x32xf32>
    %166 = arith.subf %164, %165 : vector<2x32xf32>
    %167 = vector.extract_strided_slice %159 {offsets = [0, 96], sizes = [2, 32], strides = [1, 1]} : vector<2x128xf32> to vector<2x32xf32>
    %168 = arith.mulf %161, %126 : vector<2x32xf32>
    %169 = arith.mulf %160, %166 : vector<2x32xf32>
    %170 = arith.addf %168, %169 : vector<2x32xf32>
    %171 = math.tanh %170 : vector<2x32xf32>
    %172 = arith.mulf %167, %171 : vector<2x32xf32>
    %173 = vector.extract_strided_slice %11 {offsets = [8, 0], sizes = [2, 128], strides = [1, 1]} : vector<16x128xf32> to vector<2x128xf32>
    %cst_53 = arith.constant dense<0.000000e+00> : vector<2x128xf32>
    %174 = tpu.matmul %149, %0, %cst_53 {dimension_numbers = #tpu.dot_dimension_numbers<[1], [0], [0], [1], [0, 0, 1, 1], [], []>} : vector<2x32xf32>, vector<32x128xf32>, vector<2x128xf32> -> vector<2x128xf32>
    %175 = arith.addf %173, %174 : vector<2x128xf32>
    %176 = arith.negf %175 : vector<2x128xf32>
    %177 = math.exp %176 : vector<2x128xf32>
    %cst_54 = arith.constant 1.000000e+00 : f32
    %178 = vector.broadcast %cst_54 : f32 to vector<2x128xf32>
    %179 = arith.addf %178, %177 : vector<2x128xf32>
    %180 = arith.divf %178, %179 : vector<2x128xf32>
    %181 = vector.extract_strided_slice %180 {offsets = [0, 0], sizes = [2, 32], strides = [1, 1]} : vector<2x128xf32> to vector<2x32xf32>
    %182 = vector.extract_strided_slice %180 {offsets = [0, 32], sizes = [2, 32], strides = [1, 1]} : vector<2x128xf32> to vector<2x32xf32>
    %183 = vector.extract_strided_slice %180 {offsets = [0, 64], sizes = [2, 32], strides = [1, 1]} : vector<2x128xf32> to vector<2x32xf32>
    %cst_55 = arith.constant 2.000000e+00 : f32
    %184 = vector.broadcast %cst_55 : f32 to vector<2x32xf32>
    %185 = arith.mulf %184, %183 : vector<2x32xf32>
    %cst_56 = arith.constant 1.000000e+00 : f32
    %186 = vector.broadcast %cst_56 : f32 to vector<2x32xf32>
    %187 = arith.subf %185, %186 : vector<2x32xf32>
    %188 = vector.extract_strided_slice %180 {offsets = [0, 96], sizes = [2, 32], strides = [1, 1]} : vector<2x128xf32> to vector<2x32xf32>
    %189 = arith.mulf %182, %147 : vector<2x32xf32>
    %190 = arith.mulf %181, %187 : vector<2x32xf32>
    %191 = arith.addf %189, %190 : vector<2x32xf32>
    %192 = math.tanh %191 : vector<2x32xf32>
    %193 = arith.mulf %188, %192 : vector<2x32xf32>
    %cst_57 = arith.constant dense<0.000000e+00> : vector<2x128xf32>
    %194 = tpu.matmul %149, %1, %cst_57 {dimension_numbers = #tpu.dot_dimension_numbers<[1], [0], [0], [1], [0, 0, 1, 1], [], []>} : vector<2x32xf32>, vector<32x128xf32>, vector<2x128xf32> -> vector<2x128xf32>
    %195 = vector.broadcast %3 : vector<1x128xf32> to vector<2x128xf32>
    %196 = arith.addf %194, %195 : vector<2x128xf32>
    %cst_58 = arith.constant dense<0.000000e+00> : vector<2x128xf32>
    %197 = tpu.matmul %172, %2, %cst_58 {dimension_numbers = #tpu.dot_dimension_numbers<[1], [0], [0], [1], [0, 0, 1, 1], [], []>} : vector<2x32xf32>, vector<32x128xf32>, vector<2x128xf32> -> vector<2x128xf32>
    %198 = arith.addf %196, %197 : vector<2x128xf32>
    %199 = arith.negf %198 : vector<2x128xf32>
    %200 = math.exp %199 : vector<2x128xf32>
    %cst_59 = arith.constant 1.000000e+00 : f32
    %201 = vector.broadcast %cst_59 : f32 to vector<2x128xf32>
    %202 = arith.addf %201, %200 : vector<2x128xf32>
    %203 = arith.divf %201, %202 : vector<2x128xf32>
    %204 = vector.extract_strided_slice %203 {offsets = [0, 0], sizes = [2, 32], strides = [1, 1]} : vector<2x128xf32> to vector<2x32xf32>
    %205 = vector.extract_strided_slice %203 {offsets = [0, 32], sizes = [2, 32], strides = [1, 1]} : vector<2x128xf32> to vector<2x32xf32>
    %206 = vector.extract_strided_slice %203 {offsets = [0, 64], sizes = [2, 32], strides = [1, 1]} : vector<2x128xf32> to vector<2x32xf32>
    %cst_60 = arith.constant 2.000000e+00 : f32
    %207 = vector.broadcast %cst_60 : f32 to vector<2x32xf32>
    %208 = arith.mulf %207, %206 : vector<2x32xf32>
    %cst_61 = arith.constant 1.000000e+00 : f32
    %209 = vector.broadcast %cst_61 : f32 to vector<2x32xf32>
    %210 = arith.subf %208, %209 : vector<2x32xf32>
    %211 = vector.extract_strided_slice %203 {offsets = [0, 96], sizes = [2, 32], strides = [1, 1]} : vector<2x128xf32> to vector<2x32xf32>
    %212 = arith.mulf %205, %170 : vector<2x32xf32>
    %213 = arith.mulf %204, %210 : vector<2x32xf32>
    %214 = arith.addf %212, %213 : vector<2x32xf32>
    %215 = math.tanh %214 : vector<2x32xf32>
    %216 = arith.mulf %211, %215 : vector<2x32xf32>
    %217 = vector.extract_strided_slice %11 {offsets = [10, 0], sizes = [2, 128], strides = [1, 1]} : vector<16x128xf32> to vector<2x128xf32>
    %cst_62 = arith.constant dense<0.000000e+00> : vector<2x128xf32>
    %218 = tpu.matmul %193, %0, %cst_62 {dimension_numbers = #tpu.dot_dimension_numbers<[1], [0], [0], [1], [0, 0, 1, 1], [], []>} : vector<2x32xf32>, vector<32x128xf32>, vector<2x128xf32> -> vector<2x128xf32>
    %219 = arith.addf %217, %218 : vector<2x128xf32>
    %220 = arith.negf %219 : vector<2x128xf32>
    %221 = math.exp %220 : vector<2x128xf32>
    %cst_63 = arith.constant 1.000000e+00 : f32
    %222 = vector.broadcast %cst_63 : f32 to vector<2x128xf32>
    %223 = arith.addf %222, %221 : vector<2x128xf32>
    %224 = arith.divf %222, %223 : vector<2x128xf32>
    %225 = vector.extract_strided_slice %224 {offsets = [0, 0], sizes = [2, 32], strides = [1, 1]} : vector<2x128xf32> to vector<2x32xf32>
    %226 = vector.extract_strided_slice %224 {offsets = [0, 32], sizes = [2, 32], strides = [1, 1]} : vector<2x128xf32> to vector<2x32xf32>
    %227 = vector.extract_strided_slice %224 {offsets = [0, 64], sizes = [2, 32], strides = [1, 1]} : vector<2x128xf32> to vector<2x32xf32>
    %cst_64 = arith.constant 2.000000e+00 : f32
    %228 = vector.broadcast %cst_64 : f32 to vector<2x32xf32>
    %229 = arith.mulf %228, %227 : vector<2x32xf32>
    %cst_65 = arith.constant 1.000000e+00 : f32
    %230 = vector.broadcast %cst_65 : f32 to vector<2x32xf32>
    %231 = arith.subf %229, %230 : vector<2x32xf32>
    %232 = vector.extract_strided_slice %224 {offsets = [0, 96], sizes = [2, 32], strides = [1, 1]} : vector<2x128xf32> to vector<2x32xf32>
    %233 = arith.mulf %226, %191 : vector<2x32xf32>
    %234 = arith.mulf %225, %231 : vector<2x32xf32>
    %235 = arith.addf %233, %234 : vector<2x32xf32>
    %236 = math.tanh %235 : vector<2x32xf32>
    %237 = arith.mulf %232, %236 : vector<2x32xf32>
    %cst_66 = arith.constant dense<0.000000e+00> : vector<2x128xf32>
    %238 = tpu.matmul %193, %1, %cst_66 {dimension_numbers = #tpu.dot_dimension_numbers<[1], [0], [0], [1], [0, 0, 1, 1], [], []>} : vector<2x32xf32>, vector<32x128xf32>, vector<2x128xf32> -> vector<2x128xf32>
    %239 = vector.broadcast %3 : vector<1x128xf32> to vector<2x128xf32>
    %240 = arith.addf %238, %239 : vector<2x128xf32>
    %cst_67 = arith.constant dense<0.000000e+00> : vector<2x128xf32>
    %241 = tpu.matmul %216, %2, %cst_67 {dimension_numbers = #tpu.dot_dimension_numbers<[1], [0], [0], [1], [0, 0, 1, 1], [], []>} : vector<2x32xf32>, vector<32x128xf32>, vector<2x128xf32> -> vector<2x128xf32>
    %242 = arith.addf %240, %241 : vector<2x128xf32>
    %243 = arith.negf %242 : vector<2x128xf32>
    %244 = math.exp %243 : vector<2x128xf32>
    %cst_68 = arith.constant 1.000000e+00 : f32
    %245 = vector.broadcast %cst_68 : f32 to vector<2x128xf32>
    %246 = arith.addf %245, %244 : vector<2x128xf32>
    %247 = arith.divf %245, %246 : vector<2x128xf32>
    %248 = vector.extract_strided_slice %247 {offsets = [0, 0], sizes = [2, 32], strides = [1, 1]} : vector<2x128xf32> to vector<2x32xf32>
    %249 = vector.extract_strided_slice %247 {offsets = [0, 32], sizes = [2, 32], strides = [1, 1]} : vector<2x128xf32> to vector<2x32xf32>
    %250 = vector.extract_strided_slice %247 {offsets = [0, 64], sizes = [2, 32], strides = [1, 1]} : vector<2x128xf32> to vector<2x32xf32>
    %cst_69 = arith.constant 2.000000e+00 : f32
    %251 = vector.broadcast %cst_69 : f32 to vector<2x32xf32>
    %252 = arith.mulf %251, %250 : vector<2x32xf32>
    %cst_70 = arith.constant 1.000000e+00 : f32
    %253 = vector.broadcast %cst_70 : f32 to vector<2x32xf32>
    %254 = arith.subf %252, %253 : vector<2x32xf32>
    %255 = vector.extract_strided_slice %247 {offsets = [0, 96], sizes = [2, 32], strides = [1, 1]} : vector<2x128xf32> to vector<2x32xf32>
    %256 = arith.mulf %249, %214 : vector<2x32xf32>
    %257 = arith.mulf %248, %254 : vector<2x32xf32>
    %258 = arith.addf %256, %257 : vector<2x32xf32>
    %259 = math.tanh %258 : vector<2x32xf32>
    %260 = arith.mulf %255, %259 : vector<2x32xf32>
    %261 = vector.extract_strided_slice %11 {offsets = [12, 0], sizes = [2, 128], strides = [1, 1]} : vector<16x128xf32> to vector<2x128xf32>
    %cst_71 = arith.constant dense<0.000000e+00> : vector<2x128xf32>
    %262 = tpu.matmul %237, %0, %cst_71 {dimension_numbers = #tpu.dot_dimension_numbers<[1], [0], [0], [1], [0, 0, 1, 1], [], []>} : vector<2x32xf32>, vector<32x128xf32>, vector<2x128xf32> -> vector<2x128xf32>
    %263 = arith.addf %261, %262 : vector<2x128xf32>
    %264 = arith.negf %263 : vector<2x128xf32>
    %265 = math.exp %264 : vector<2x128xf32>
    %cst_72 = arith.constant 1.000000e+00 : f32
    %266 = vector.broadcast %cst_72 : f32 to vector<2x128xf32>
    %267 = arith.addf %266, %265 : vector<2x128xf32>
    %268 = arith.divf %266, %267 : vector<2x128xf32>
    %269 = vector.extract_strided_slice %268 {offsets = [0, 0], sizes = [2, 32], strides = [1, 1]} : vector<2x128xf32> to vector<2x32xf32>
    %270 = vector.extract_strided_slice %268 {offsets = [0, 32], sizes = [2, 32], strides = [1, 1]} : vector<2x128xf32> to vector<2x32xf32>
    %271 = vector.extract_strided_slice %268 {offsets = [0, 64], sizes = [2, 32], strides = [1, 1]} : vector<2x128xf32> to vector<2x32xf32>
    %cst_73 = arith.constant 2.000000e+00 : f32
    %272 = vector.broadcast %cst_73 : f32 to vector<2x32xf32>
    %273 = arith.mulf %272, %271 : vector<2x32xf32>
    %cst_74 = arith.constant 1.000000e+00 : f32
    %274 = vector.broadcast %cst_74 : f32 to vector<2x32xf32>
    %275 = arith.subf %273, %274 : vector<2x32xf32>
    %276 = vector.extract_strided_slice %268 {offsets = [0, 96], sizes = [2, 32], strides = [1, 1]} : vector<2x128xf32> to vector<2x32xf32>
    %277 = arith.mulf %270, %235 : vector<2x32xf32>
    %278 = arith.mulf %269, %275 : vector<2x32xf32>
    %279 = arith.addf %277, %278 : vector<2x32xf32>
    %280 = math.tanh %279 : vector<2x32xf32>
    %281 = arith.mulf %276, %280 : vector<2x32xf32>
    %cst_75 = arith.constant dense<0.000000e+00> : vector<2x128xf32>
    %282 = tpu.matmul %237, %1, %cst_75 {dimension_numbers = #tpu.dot_dimension_numbers<[1], [0], [0], [1], [0, 0, 1, 1], [], []>} : vector<2x32xf32>, vector<32x128xf32>, vector<2x128xf32> -> vector<2x128xf32>
    %283 = vector.broadcast %3 : vector<1x128xf32> to vector<2x128xf32>
    %284 = arith.addf %282, %283 : vector<2x128xf32>
    %cst_76 = arith.constant dense<0.000000e+00> : vector<2x128xf32>
    %285 = tpu.matmul %260, %2, %cst_76 {dimension_numbers = #tpu.dot_dimension_numbers<[1], [0], [0], [1], [0, 0, 1, 1], [], []>} : vector<2x32xf32>, vector<32x128xf32>, vector<2x128xf32> -> vector<2x128xf32>
    %286 = arith.addf %284, %285 : vector<2x128xf32>
    %287 = arith.negf %286 : vector<2x128xf32>
    %288 = math.exp %287 : vector<2x128xf32>
    %cst_77 = arith.constant 1.000000e+00 : f32
    %289 = vector.broadcast %cst_77 : f32 to vector<2x128xf32>
    %290 = arith.addf %289, %288 : vector<2x128xf32>
    %291 = arith.divf %289, %290 : vector<2x128xf32>
    %292 = vector.extract_strided_slice %291 {offsets = [0, 0], sizes = [2, 32], strides = [1, 1]} : vector<2x128xf32> to vector<2x32xf32>
    %293 = vector.extract_strided_slice %291 {offsets = [0, 32], sizes = [2, 32], strides = [1, 1]} : vector<2x128xf32> to vector<2x32xf32>
    %294 = vector.extract_strided_slice %291 {offsets = [0, 64], sizes = [2, 32], strides = [1, 1]} : vector<2x128xf32> to vector<2x32xf32>
    %cst_78 = arith.constant 2.000000e+00 : f32
    %295 = vector.broadcast %cst_78 : f32 to vector<2x32xf32>
    %296 = arith.mulf %295, %294 : vector<2x32xf32>
    %cst_79 = arith.constant 1.000000e+00 : f32
    %297 = vector.broadcast %cst_79 : f32 to vector<2x32xf32>
    %298 = arith.subf %296, %297 : vector<2x32xf32>
    %299 = vector.extract_strided_slice %291 {offsets = [0, 96], sizes = [2, 32], strides = [1, 1]} : vector<2x128xf32> to vector<2x32xf32>
    %300 = arith.mulf %293, %258 : vector<2x32xf32>
    %301 = arith.mulf %292, %298 : vector<2x32xf32>
    %302 = arith.addf %300, %301 : vector<2x32xf32>
    %303 = math.tanh %302 : vector<2x32xf32>
    %304 = arith.mulf %299, %303 : vector<2x32xf32>
    %305 = vector.extract_strided_slice %11 {offsets = [14, 0], sizes = [2, 128], strides = [1, 1]} : vector<16x128xf32> to vector<2x128xf32>
    %cst_80 = arith.constant dense<0.000000e+00> : vector<2x128xf32>
    %306 = tpu.matmul %281, %0, %cst_80 {dimension_numbers = #tpu.dot_dimension_numbers<[1], [0], [0], [1], [0, 0, 1, 1], [], []>} : vector<2x32xf32>, vector<32x128xf32>, vector<2x128xf32> -> vector<2x128xf32>
    %307 = arith.addf %305, %306 : vector<2x128xf32>
    %308 = arith.negf %307 : vector<2x128xf32>
    %309 = math.exp %308 : vector<2x128xf32>
    %cst_81 = arith.constant 1.000000e+00 : f32
    %310 = vector.broadcast %cst_81 : f32 to vector<2x128xf32>
    %311 = arith.addf %310, %309 : vector<2x128xf32>
    %312 = arith.divf %310, %311 : vector<2x128xf32>
    %313 = vector.extract_strided_slice %312 {offsets = [0, 0], sizes = [2, 32], strides = [1, 1]} : vector<2x128xf32> to vector<2x32xf32>
    %314 = vector.extract_strided_slice %312 {offsets = [0, 32], sizes = [2, 32], strides = [1, 1]} : vector<2x128xf32> to vector<2x32xf32>
    %315 = vector.extract_strided_slice %312 {offsets = [0, 64], sizes = [2, 32], strides = [1, 1]} : vector<2x128xf32> to vector<2x32xf32>
    %cst_82 = arith.constant 2.000000e+00 : f32
    %316 = vector.broadcast %cst_82 : f32 to vector<2x32xf32>
    %317 = arith.mulf %316, %315 : vector<2x32xf32>
    %cst_83 = arith.constant 1.000000e+00 : f32
    %318 = vector.broadcast %cst_83 : f32 to vector<2x32xf32>
    %319 = arith.subf %317, %318 : vector<2x32xf32>
    %320 = vector.extract_strided_slice %312 {offsets = [0, 96], sizes = [2, 32], strides = [1, 1]} : vector<2x128xf32> to vector<2x32xf32>
    %321 = arith.mulf %314, %279 : vector<2x32xf32>
    %322 = arith.mulf %313, %319 : vector<2x32xf32>
    %323 = arith.addf %321, %322 : vector<2x32xf32>
    %324 = math.tanh %323 : vector<2x32xf32>
    %325 = arith.mulf %320, %324 : vector<2x32xf32>
    %cst_84 = arith.constant dense<0.000000e+00> : vector<2x128xf32>
    %326 = tpu.matmul %281, %1, %cst_84 {dimension_numbers = #tpu.dot_dimension_numbers<[1], [0], [0], [1], [0, 0, 1, 1], [], []>} : vector<2x32xf32>, vector<32x128xf32>, vector<2x128xf32> -> vector<2x128xf32>
    %327 = vector.broadcast %3 : vector<1x128xf32> to vector<2x128xf32>
    %328 = arith.addf %326, %327 : vector<2x128xf32>
    %cst_85 = arith.constant dense<0.000000e+00> : vector<2x128xf32>
    %329 = tpu.matmul %304, %2, %cst_85 {dimension_numbers = #tpu.dot_dimension_numbers<[1], [0], [0], [1], [0, 0, 1, 1], [], []>} : vector<2x32xf32>, vector<32x128xf32>, vector<2x128xf32> -> vector<2x128xf32>
    %330 = arith.addf %328, %329 : vector<2x128xf32>
    %331 = arith.negf %330 : vector<2x128xf32>
    %332 = math.exp %331 : vector<2x128xf32>
    %cst_86 = arith.constant 1.000000e+00 : f32
    %333 = vector.broadcast %cst_86 : f32 to vector<2x128xf32>
    %334 = arith.addf %333, %332 : vector<2x128xf32>
    %335 = arith.divf %333, %334 : vector<2x128xf32>
    %336 = vector.extract_strided_slice %335 {offsets = [0, 0], sizes = [2, 32], strides = [1, 1]} : vector<2x128xf32> to vector<2x32xf32>
    %337 = vector.extract_strided_slice %335 {offsets = [0, 32], sizes = [2, 32], strides = [1, 1]} : vector<2x128xf32> to vector<2x32xf32>
    %338 = vector.extract_strided_slice %335 {offsets = [0, 64], sizes = [2, 32], strides = [1, 1]} : vector<2x128xf32> to vector<2x32xf32>
    %cst_87 = arith.constant 2.000000e+00 : f32
    %339 = vector.broadcast %cst_87 : f32 to vector<2x32xf32>
    %340 = arith.mulf %339, %338 : vector<2x32xf32>
    %cst_88 = arith.constant 1.000000e+00 : f32
    %341 = vector.broadcast %cst_88 : f32 to vector<2x32xf32>
    %342 = arith.subf %340, %341 : vector<2x32xf32>
    %343 = vector.extract_strided_slice %335 {offsets = [0, 96], sizes = [2, 32], strides = [1, 1]} : vector<2x128xf32> to vector<2x32xf32>
    %344 = arith.mulf %337, %302 : vector<2x32xf32>
    %345 = arith.mulf %336, %342 : vector<2x32xf32>
    %346 = arith.addf %344, %345 : vector<2x32xf32>
    %347 = math.tanh %346 : vector<2x32xf32>
    %348 = arith.mulf %343, %347 : vector<2x32xf32>
    %cst_89 = arith.constant dense<0.000000e+00> : vector<2x128xf32>
    %349 = tpu.matmul %325, %1, %cst_89 {dimension_numbers = #tpu.dot_dimension_numbers<[1], [0], [0], [1], [0, 0, 1, 1], [], []>} : vector<2x32xf32>, vector<32x128xf32>, vector<2x128xf32> -> vector<2x128xf32>
    %350 = vector.broadcast %3 : vector<1x128xf32> to vector<2x128xf32>
    %351 = arith.addf %349, %350 : vector<2x128xf32>
    %cst_90 = arith.constant dense<0.000000e+00> : vector<2x128xf32>
    %352 = tpu.matmul %348, %2, %cst_90 {dimension_numbers = #tpu.dot_dimension_numbers<[1], [0], [0], [1], [0, 0, 1, 1], [], []>} : vector<2x32xf32>, vector<32x128xf32>, vector<2x128xf32> -> vector<2x128xf32>
    %353 = arith.addf %351, %352 : vector<2x128xf32>
    %354 = arith.negf %353 : vector<2x128xf32>
    %355 = math.exp %354 : vector<2x128xf32>
    %cst_91 = arith.constant 1.000000e+00 : f32
    %356 = vector.broadcast %cst_91 : f32 to vector<2x128xf32>
    %357 = arith.addf %356, %355 : vector<2x128xf32>
    %358 = arith.divf %356, %357 : vector<2x128xf32>
    %359 = vector.extract_strided_slice %358 {offsets = [0, 0], sizes = [2, 32], strides = [1, 1]} : vector<2x128xf32> to vector<2x32xf32>
    %360 = vector.extract_strided_slice %358 {offsets = [0, 32], sizes = [2, 32], strides = [1, 1]} : vector<2x128xf32> to vector<2x32xf32>
    %361 = vector.extract_strided_slice %358 {offsets = [0, 64], sizes = [2, 32], strides = [1, 1]} : vector<2x128xf32> to vector<2x32xf32>
    %cst_92 = arith.constant 2.000000e+00 : f32
    %362 = vector.broadcast %cst_92 : f32 to vector<2x32xf32>
    %363 = arith.mulf %362, %361 : vector<2x32xf32>
    %cst_93 = arith.constant 1.000000e+00 : f32
    %364 = vector.broadcast %cst_93 : f32 to vector<2x32xf32>
    %365 = arith.subf %363, %364 : vector<2x32xf32>
    %366 = vector.extract_strided_slice %358 {offsets = [0, 96], sizes = [2, 32], strides = [1, 1]} : vector<2x128xf32> to vector<2x32xf32>
    %367 = arith.mulf %360, %346 : vector<2x32xf32>
    %368 = arith.mulf %359, %365 : vector<2x32xf32>
    %369 = arith.addf %367, %368 : vector<2x32xf32>
    %370 = math.tanh %369 : vector<2x32xf32>
    %371 = arith.mulf %366, %370 : vector<2x32xf32>
    %c0_94 = arith.constant 0 : index
    %c0_95 = arith.constant 0 : index
    %c0_96 = arith.constant 0 : index
    %372 = vector.load %arg12[%c0_94, %c0_95, %c0_96] : memref<2x2x32xf32, #tpu.memory_space<vmem>>, vector<1x2x32xf32>
    %373 = vector.shape_cast %372 : vector<1x2x32xf32> to vector<2x32xf32>
    %374 = vector.shape_cast %325 : vector<2x32xf32> to vector<1x2x32xf32>
    tpu.vector_store %arg12[%c0_94, %c0_95, %c0_96], %374 {strides = array<i32>} : memref<2x2x32xf32, #tpu.memory_space<vmem>>, vector<1x2x32xf32>,
    %c0_97 = arith.constant 0 : index
    %c0_98 = arith.constant 0 : index
    %c0_99 = arith.constant 0 : index
    %375 = vector.load %arg13[%c0_97, %c0_98, %c0_99] : memref<2x2x32xf32, #tpu.memory_space<vmem>>, vector<1x2x32xf32>
    %376 = vector.shape_cast %375 : vector<1x2x32xf32> to vector<2x32xf32>
    %377 = vector.shape_cast %323 : vector<2x32xf32> to vector<1x2x32xf32>
    tpu.vector_store %arg13[%c0_97, %c0_98, %c0_99], %377 {strides = array<i32>} : memref<2x2x32xf32, #tpu.memory_space<vmem>>, vector<1x2x32xf32>,
    %c1_100 = arith.constant 1 : index
    %c0_101 = arith.constant 0 : index
    %c0_102 = arith.constant 0 : index
    %378 = vector.load %arg12[%c1_100, %c0_101, %c0_102] : memref<2x2x32xf32, #tpu.memory_space<vmem>>, vector<1x2x32xf32>
    %379 = vector.shape_cast %378 : vector<1x2x32xf32> to vector<2x32xf32>
    %380 = vector.shape_cast %371 : vector<2x32xf32> to vector<1x2x32xf32>
    tpu.vector_store %arg12[%c1_100, %c0_101, %c0_102], %380 {strides = array<i32>} : memref<2x2x32xf32, #tpu.memory_space<vmem>>, vector<1x2x32xf32>,
    %c1_103 = arith.constant 1 : index
    %c0_104 = arith.constant 0 : index
    %c0_105 = arith.constant 0 : index
    %381 = vector.load %arg13[%c1_103, %c0_104, %c0_105] : memref<2x2x32xf32, #tpu.memory_space<vmem>>, vector<1x2x32xf32>
    %382 = vector.shape_cast %381 : vector<1x2x32xf32> to vector<2x32xf32>
    %383 = vector.shape_cast %369 : vector<2x32xf32> to vector<1x2x32xf32>
    tpu.vector_store %arg13[%c1_103, %c0_104, %c0_105], %383 {strides = array<i32>} : memref<2x2x32xf32, #tpu.memory_space<vmem>>, vector<1x2x32xf32>,
    %c0_106 = arith.constant 0 : index
    %c0_107 = arith.constant 0 : index
    %384 = vector.load %arg9[%c0_106, %c0_107] : memref<1x32xf32, #tpu.memory_space<vmem>>, vector<1x32xf32>
    %385 = vector.broadcast %384 : vector<1x32xf32> to vector<2x32xf32>
    %386 = arith.mulf %371, %385 : vector<2x32xf32>
    %cst_108 = arith.constant dense<0.000000e+00> : vector<2xf32>
    %387 = vector.multi_reduction <add>, %386, %cst_108 [1] : vector<2x32xf32> to vector<2xf32>
    %388 = vector.shape_cast %387 : vector<2xf32> to vector<2x1xf32>
    %c0_109 = arith.constant 0 : index
    %c0_110 = arith.constant 0 : index
    %389 = vector.load %arg10[%c0_109, %c0_110] : memref<1x1xf32, #tpu.memory_space<vmem>>, vector<1x1xf32>
    %390 = vector.broadcast %389 : vector<1x1xf32> to vector<2x1xf32>
    %391 = arith.addf %388, %390 : vector<2x1xf32>
    %392 = arith.negf %391 : vector<2x1xf32>
    %393 = math.exp %392 : vector<2x1xf32>
    %cst_111 = arith.constant 1.000000e+00 : f32
    %394 = vector.broadcast %cst_111 : f32 to vector<2x1xf32>
    %395 = arith.addf %394, %393 : vector<2x1xf32>
    %396 = arith.divf %394, %395 : vector<2x1xf32>
    %c0_112 = arith.constant 0 : index
    %c0_113 = arith.constant 0 : index
    %397 = vector.load %arg11[%c0_112, %c0_113] : memref<2x1xf32, #tpu.memory_space<vmem>>, vector<2x1xf32>
    tpu.vector_store %arg11[%c0_112, %c0_113], %396 {strides = array<i32>} : memref<2x1xf32, #tpu.memory_space<vmem>>, vector<2x1xf32>,
    return
  }
  func.func @transform_0(%arg0: i32) -> (i32, i32) {
    %c0_i32 = arith.constant 0 : i32
    %c0_i32_0 = arith.constant 0 : i32
    %c0_i32_1 = arith.constant 0 : i32
    return %c0_i32, %c0_i32_0 : i32, i32
  }
  func.func @transform_1(%arg0: i32) -> (i32, i32) {
    %c0_i32 = arith.constant 0 : i32
    %c0_i32_0 = arith.constant 0 : i32
    %c0_i32_1 = arith.constant 0 : i32
    return %c0_i32, %c0_i32_0 : i32, i32
  }
  func.func @transform_2(%arg0: i32) -> (i32, i32) {
    %c0_i32 = arith.constant 0 : i32
    %c0_i32_0 = arith.constant 0 : i32
    %c0_i32_1 = arith.constant 0 : i32
    return %c0_i32, %c0_i32_0 : i32, i32
  }
  func.func @transform_3(%arg0: i32) -> (i32, i32) {
    %c0_i32 = arith.constant 0 : i32
    %c0_i32_0 = arith.constant 0 : i32
    %c0_i32_1 = arith.constant 0 : i32
    return %c0_i32, %c0_i32_0 : i32, i32
  }
  func.func @transform_4(%arg0: i32) -> (i32, i32) {
    %c0_i32 = arith.constant 0 : i32
    %c0_i32_0 = arith.constant 0 : i32
    %c0_i32_1 = arith.constant 0 : i32
    return %c0_i32, %c0_i32_0 : i32, i32
  }
  func.func @transform_5(%arg0: i32) -> (i32, i32) {
    %c0_i32 = arith.constant 0 : i32
    %c0_i32_0 = arith.constant 0 : i32
    %c0_i32_1 = arith.constant 0 : i32
    return %c0_i32, %c0_i32_0 : i32, i32
  }
  func.func @transform_6(%arg0: i32) -> (i32, i32, i32) {
    %c0_i32 = arith.constant 0 : i32
    %c0_i32_0 = arith.constant 0 : i32
    %c0_i32_1 = arith.constant 0 : i32
    %c0_i32_2 = arith.constant 0 : i32
    return %c0_i32, %c0_i32_0, %c0_i32_1 : i32, i32, i32
  }
  func.func @transform_7(%arg0: i32) -> (i32, i32, i32) {
    %c0_i32 = arith.constant 0 : i32
    %c0_i32_0 = arith.constant 0 : i32
    %c0_i32_1 = arith.constant 0 : i32
    %c0_i32_2 = arith.constant 0 : i32
    return %c0_i32, %c0_i32_0, %c0_i32_1 : i32, i32, i32
  }
  func.func @transform_8(%arg0: i32) -> (i32, i32) {
    %c0_i32 = arith.constant 0 : i32
    %c0_i32_0 = arith.constant 0 : i32
    %c0_i32_1 = arith.constant 0 : i32
    return %c0_i32, %c0_i32_0 : i32, i32
  }
  func.func @transform_9(%arg0: i32) -> (i32, i32) {
    %c0_i32 = arith.constant 0 : i32
    %c0_i32_0 = arith.constant 0 : i32
    %c0_i32_1 = arith.constant 0 : i32
    return %c0_i32, %c0_i32_0 : i32, i32
  }
  func.func @transform_10(%arg0: i32) -> (i32, i32) {
    %c0_i32 = arith.constant 0 : i32
    %c0_i32_0 = arith.constant 0 : i32
    %c0_i32_1 = arith.constant 0 : i32
    return %c0_i32, %c0_i32_0 : i32, i32
  }
  func.func @transform_11(%arg0: i32) -> (i32, i32, i32) {
    %c0_i32 = arith.constant 0 : i32
    %c0_i32_0 = arith.constant 0 : i32
    %c0_i32_1 = arith.constant 0 : i32
    %c0_i32_2 = arith.constant 0 : i32
    return %c0_i32, %c0_i32_0, %c0_i32_1 : i32, i32, i32
  }
  func.func @transform_12(%arg0: i32) -> (i32, i32, i32) {
    %c0_i32 = arith.constant 0 : i32
    %c0_i32_0 = arith.constant 0 : i32
    %c0_i32_1 = arith.constant 0 : i32
    %c0_i32_2 = arith.constant 0 : i32
    return %c0_i32, %c0_i32_0, %c0_i32_1 : i32, i32, i32
  }
}

</mosaic_0001>

<llo_original>
// kernel: lstm_model_forward.1
$region0: #{lstm_model_forward.1}
  #allocation0 [shape = 'u32[]', space=smem, size = 0x4, offset = 0x4, fixed_abs, tag = 'smem constant byte address 0x4 - core index']
  #allocation1 [shape = 'u32[144,128]{1,0:T(1,128)}', space=vmem, size = 0x12000, scoped, tag = 'internal scratch']
  #allocation2 [shape = 'f32[1,1]{1,0:T(1,128)S(1)}', space=vmem, size = 0x200, scoped, tag = 'scoped memory for lstm_model_forward.1']
  %s0 = inlined_call_operand.vmem [shape: s32[16,1], index: 0, kind: input, shape index: {}]
  %s1 = inlined_call_operand.vmem [shape: f32[40,128], index: 1, kind: input, shape index: {}]
  %s2 = inlined_call_operand.hbm [shape: f32[32,128], index: 2, kind: input, shape index: {}]
  %s3 = inlined_call_operand.hbm [shape: f32[32,128], index: 3, kind: input, shape index: {}]
  %s4 = inlined_call_operand.hbm [shape: f32[32,128], index: 4, kind: input, shape index: {}]
  %s5 = inlined_call_operand.vmem [shape: f32[1,128], index: 5, kind: input, shape index: {}]
  %s6 = inlined_call_operand.vmem [shape: f32[2,2,32], index: 6, kind: input, shape index: {}]
  %s7 = inlined_call_operand.vmem [shape: f32[2,2,32], index: 7, kind: input, shape index: {}]
  %s8 = inlined_call_operand.hbm [shape: f32[1,32], index: 8, kind: input, shape index: {}]
  %s9 = inlined_call_operand.<no memory space> [shape: f32[1,1], index: 9, kind: input, shape index: {}]
  %s10 = inlined_call_operand.vmem [shape: f32[2,1], index: 10, kind: output, shape index: {0}]
  %s11 = inlined_call_operand.hbm [shape: f32[2,2,32], index: 11, kind: output, shape index: {1}]
  %s12 = inlined_call_operand.hbm [shape: f32[2,2,32], index: 12, kind: output, shape index: {2}]
  %13 = xla_tuple %s10, %s11, %s12
  %s14 = sld [smem:[#allocation0]]
  $region82: #{lstm_model_forward.1} parent=0
    _
  %s16 = ssub.s32 1, %s14
  %s17 = scalar_select 0, %s16, %s14
  %v18 = vstv %s9
  %19 = vst [vmem:[#allocation2] sm:$0x1] %v18
  $region1: #{lstm_model_forward.1} parent=0
    #allocation3 [shape = 'u8[16384]{0}', space=vmem, size = 0x4000, scoped, tag = 'input window, operand 2, single buffered']
    #allocation4 [shape = 's32[1]{0}', space=sflag, size = 0x4, scoped, tag = 'scoped memory for lstm_model_forward.1']
    #allocation5 [shape = 's32[1]{0}', space=sflag, size = 0x4, scoped, tag = 'scoped memory for lstm_model_forward.1']
    #allocation6 [shape = 'u8[16384]{0}', space=vmem, size = 0x4000, scoped, tag = 'input window, operand 3, single buffered']
    #allocation7 [shape = 's32[1]{0}', space=sflag, size = 0x4, scoped, tag = 'scoped memory for lstm_model_forward.1']
    #allocation8 [shape = 'u8[16384]{0}', space=vmem, size = 0x4000, scoped, tag = 'input window, operand 4, single buffered']
    #allocation9 [shape = 'u8[512]{0}', space=vmem, size = 0x400, scoped, tag = 'input window, operand 8, single buffered']
    #allocation10 [shape = 's32[1]{0}', space=sflag, size = 0x4, scoped, tag = 'scoped memory for lstm_model_forward.1']
    #allocation11 [shape = 'u8[2048]{0}', space=vmem, size = 0x800, scoped, tag = 'output window, operand 1, single buffered']
    #allocation12 [shape = 'u8[2048]{0}', space=vmem, size = 0x800, scoped, tag = 'output window, operand 2, single buffered']
    #allocation13 [shape = 's32[1]{0}', space=sflag, size = 0x4, scoped, tag = 'scoped memory for lstm_model_forward.1']
    %20 = vsyncpa [#allocation4], 0
    %21 = vsyncpa [#allocation7], 0
    %22 = vsyncpa [#allocation10], 0
    %23 = vsyncpa [#allocation5], 0
    %24 = vsyncpa [#allocation13], 0
    // Predicated region
    $region2: #{lstm_model_forward.1} parent=1 // pred_check
      _
    $region3: #{lstm_model_forward.1} parent=1 // pred_check_branch
      %26 = sbr.rel (0) target = $region5
    $region4: #{lstm_model_forward.1} parent=1 // pred_region
      _
    $region5: #{lstm_model_forward.1} parent=1 // pred_fallthru
      _
    // Predicated region
    $region6: #{lstm_model_forward.1} parent=1 // pred_check
      _
    $region7: #{lstm_model_forward.1} parent=1 // pred_check_branch
      %28 = sbr.rel (0) target = $region9
    $region8: #{lstm_model_forward.1} parent=1 // pred_region
      _
    $region9: #{lstm_model_forward.1} parent=1 // pred_fallthru
      _
    // Predicated region
    $region10: #{lstm_model_forward.1} parent=1 // pred_check
      _
    $region11: #{lstm_model_forward.1} parent=1 // pred_check_branch
      %30 = sbr.rel (0) target = $region13
    $region12: #{lstm_model_forward.1} parent=1 // pred_region
      %s32 = ssub.s32 512, 512
      %33 = vsyncadd [#allocation4], %s32
      %s34 = sshll.u32 [#allocation3], 4
      %s35 = int_to_ptr.vmem [resolvable:$true] %s34
      %40 = dma.hbm_to_vmem [thread:$0]  %s2, 512, %s35, [#allocation4], 128, 128, 8
    $region13: #{lstm_model_forward.1} parent=1 // pred_fallthru
      _
    // Predicated region
    $region14: #{lstm_model_forward.1} parent=1 // pred_check
      _
    $region15: #{lstm_model_forward.1} parent=1 // pred_check_branch
      %42 = sbr.rel (0) target = $region17
    $region16: #{lstm_model_forward.1} parent=1 // pred_region
      %s44 = ssub.s32 512, 512
      %45 = vsyncadd [#allocation7], %s44
      %s46 = sshll.u32 [#allocation6], 4
      %s47 = int_to_ptr.vmem [resolvable:$true] %s46
      %52 = dma.hbm_to_vmem [thread:$0]  %s3, 512, %s47, [#allocation7], 128, 128, 8
    $region17: #{lstm_model_forward.1} parent=1 // pred_fallthru
      _
    // Predicated region
    $region18: #{lstm_model_forward.1} parent=1 // pred_check
      _
    $region19: #{lstm_model_forward.1} parent=1 // pred_check_branch
      %54 = sbr.rel (0) target = $region21
    $region20: #{lstm_model_forward.1} parent=1 // pred_region
      %s56 = ssub.s32 512, 512
      %57 = vsyncadd [#allocation7], %s56
      %s58 = sshll.u32 [#allocation8], 4
      %s59 = int_to_ptr.vmem [resolvable:$true] %s58
      %64 = dma.hbm_to_vmem [thread:$0]  %s4, 512, %s59, [#allocation7], 128, 128, 8
    $region21: #{lstm_model_forward.1} parent=1 // pred_fallthru
      _
    // Predicated region
    $region22: #{lstm_model_forward.1} parent=1 // pred_check
      _
    $region23: #{lstm_model_forward.1} parent=1 // pred_check_branch
      %66 = sbr.rel (0) target = $region25
    $region24: #{lstm_model_forward.1} parent=1 // pred_region
      _
    $region25: #{lstm_model_forward.1} parent=1 // pred_fallthru
      _
    // Predicated region
    $region26: #{lstm_model_forward.1} parent=1 // pred_check
      _
    $region27: #{lstm_model_forward.1} parent=1 // pred_check_branch
      %68 = sbr.rel (0) target = $region29
    $region28: #{lstm_model_forward.1} parent=1 // pred_region
      _
    $region29: #{lstm_model_forward.1} parent=1 // pred_fallthru
      _
    // Predicated region
    $region30: #{lstm_model_forward.1} parent=1 // pred_check
      _
    $region31: #{lstm_model_forward.1} parent=1 // pred_check_branch
      %70 = sbr.rel (0) target = $region33
    $region32: #{lstm_model_forward.1} parent=1 // pred_region
      _
    $region33: #{lstm_model_forward.1} parent=1 // pred_fallthru
      _
    // Predicated region
    $region34: #{lstm_model_forward.1} parent=1 // pred_check
      _
    $region35: #{lstm_model_forward.1} parent=1 // pred_check_branch
      %72 = sbr.rel (0) target = $region37
    $region36: #{lstm_model_forward.1} parent=1 // pred_region
      %s74 = ssub.s32 16, 16
      %75 = vsyncadd [#allocation10], %s74
      %s77 = sshll.u32 [#allocation9], 4
      %s78 = int_to_ptr.vmem [resolvable:$true] %s77
      %80 = dma.hbm_to_vmem [thread:$0]  %s8, 16, %s78, [#allocation10]
    $region37: #{lstm_model_forward.1} parent=1 // pred_fallthru
      _
    // Predicated region
    $region38: #{lstm_model_forward.1} parent=1 // pred_check
      _
    $region39: #{lstm_model_forward.1} parent=1 // pred_check_branch
      %82 = sbr.rel (0) target = $region41
    $region40: #{lstm_model_forward.1} parent=1 // pred_region
      _
    $region41: #{lstm_model_forward.1} parent=1 // pred_fallthru
      _
    // Predicated region
    $region42: #{lstm_model_forward.1} parent=1 // pred_check
      _
    $region43: #{lstm_model_forward.1} parent=1 // pred_check_branch
      %84 = sbr.rel (0) target = $region45
    $region44: #{lstm_model_forward.1} parent=1 // pred_region
      %85 = dma.done [#allocation4], 512
    $region45: #{lstm_model_forward.1} parent=1 // pred_fallthru
      _
    // Predicated region
    $region46: #{lstm_model_forward.1} parent=1 // pred_check
      _
    $region47: #{lstm_model_forward.1} parent=1 // pred_check_branch
      %87 = sbr.rel (0) target = $region49
    $region48: #{lstm_model_forward.1} parent=1 // pred_region
      %88 = dma.done [#allocation7], 512
    $region49: #{lstm_model_forward.1} parent=1 // pred_fallthru
      _
    // Predicated region
    $region50: #{lstm_model_forward.1} parent=1 // pred_check
      _
    $region51: #{lstm_model_forward.1} parent=1 // pred_check_branch
      %90 = sbr.rel (0) target = $region53
    $region52: #{lstm_model_forward.1} parent=1 // pred_region
      %91 = dma.done [#allocation7], 512
    $region53: #{lstm_model_forward.1} parent=1 // pred_fallthru
      _
    // Predicated region
    $region54: #{lstm_model_forward.1} parent=1 // pred_check
      _
    $region55: #{lstm_model_forward.1} parent=1 // pred_check_branch
      %93 = sbr.rel (0) target = $region57
    $region56: #{lstm_model_forward.1} parent=1 // pred_region
      %94 = dma.done [#allocation10], 16
    $region57: #{lstm_model_forward.1} parent=1 // pred_fallthru
      _
    %v95 = vld [vmem:[#allocation3] sm:$0xff]
    %v96 = vld [vmem:[#allocation3 + $0x8] sm:$0xff]
    %v97 = vld [vmem:[#allocation3 + $0x10] sm:$0xff]
    %v98 = vld [vmem:[#allocation3 + $0x18] sm:$0xff]
    %v99 = vld [vmem:[#allocation6] sm:$0xff]
    %v100 = vld [vmem:[#allocation6 + $0x8] sm:$0xff]
    %v101 = vld [vmem:[#allocation6 + $0x10] sm:$0xff]
    %v102 = vld [vmem:[#allocation6 + $0x18] sm:$0xff]
    %v103 = vld [vmem:[#allocation8] sm:$0xff]
    %v104 = vld [vmem:[#allocation8 + $0x8] sm:$0xff]
    %v105 = vld [vmem:[#allocation8 + $0x10] sm:$0xff]
    %v106 = vld [vmem:[#allocation8 + $0x18] sm:$0xff]
    %v107 = vld [vmem:[%s5] sm:$0x1]
    %v108 = vld [vmem:[%s0] sm:$0xff]
    %v109 = vld [vmem:[%s0 + $0x8] sm:$0xff]
    %v110 = vlaneseq
    %v111 = vand.u32 %v110, 127
    %112 = vset.pattern.permute.xlu0 0
    %113 = vperm.xlu0 %112, %v108
    %v114 = vpop.permute.xlu0 %113
    %115 = vset.pattern.permute.xlu0 0
    %116 = vperm.xlu0 %115, %v109
    %v117 = vpop.permute.xlu0 %116
    %vm118 = vcmp.eq.s32.totalorder %v114, %v111
    %vm119 = vcmp.eq.s32.totalorder %v117, %v111
    %v120 = vsel %vm118, 1, 0
    %v121 = vsel %vm119, 1, 0
    %v122 = vcvt.s32.f32 %v120
    %v123 = vcvt.s32.f32 %v121
    %v124 = vld [vmem:[%s1] sm:$0xff]
    %v125 = vld [vmem:[%s1 + $0x8] sm:$0xff]
    %v126 = vld [vmem:[%s1 + $0x10] sm:$0xff]
    %v127 = vld [vmem:[%s1 + $0x18] sm:$0xff]
    %v128 = vld [vmem:[%s1 + $0x20] sm:$0xff]
    %vm129 = vcmask 326656
    %v131 = vsel %vm129, %v122, 0
    %v134 = vsel %vm129, %v123, 0
    %136 = vmatprep.subr.mxu0 0.0
    %137 = vmatpush1.msra.mxu0 %v124
    %138 = vmatprep.subr.mxu0 0.0
    %139 = vmatpush1.msra.mxu0 %v125
    %140 = vmatprep.subr.mxu0 0.0
    %141 = vmatpush1.msra.mxu0 %v126
    %142 = vmatprep.subr.mxu0 0.0
    %143 = vmatpush1.msra.mxu0 %v127
    %144 = vmatprep.subr.mxu0 0.0
    %145 = vmatpush1.msra.mxu0 %v128
    %146 = vmatprep.subr.mxu0 0.0
    %147 = vmatpush1.msra.mxu0 0.0
    %148 = vmatprep.subr.mxu0 0.0
    %149 = vmatpush1.msra.mxu0 0.0
    %150 = vmatprep.subr.mxu0 0.0
    %151 = vmatpush1.msra.mxu0 0.0
    %152 = vmatprep.subr.mxu0 0.0
    %153 = vmatpush1.msra.mxu0 0.0
    %154 = vmatprep.subr.mxu0 0.0
    %155 = vmatpush1.msra.mxu0 0.0
    %156 = vmatprep.subr.mxu0 0.0
    %157 = vmatpush1.msra.mxu0 0.0
    %158 = vmatprep.subr.mxu0 0.0
    %159 = vmatpush1.msra.mxu0 0.0
    %160 = vmatprep.subr.mxu0 0.0
    %161 = vmatpush1.msra.mxu0 0.0
    %162 = vmatprep.subr.mxu0 0.0
    %163 = vmatpush1.msra.mxu0 0.0
    %164 = vmatprep.subr.mxu0 0.0
    %165 = vmatpush1.msra.mxu0 0.0
    %166 = vmatprep.subr.mxu0 0.0
    %167 = vmatpush1.msra.mxu0 0.0
    %168 = vmatprep.subr.mxu0 0.0
    %169 = vmatpush1.msra.mxu0 0.0
    %170 = vmatprep.subr.mxu0 0.0
    %171 = vmatpush1.msra.mxu0 0.0
    %172 = vmatprep.subr.mxu0 0.0
    %173 = vmatpush1.msra.mxu0 0.0
    %174 = vmatprep.subr.mxu0 0.0
    %175 = vmatpush1.msra.mxu0 0.0
    %176 = vmatprep.subr.mxu0 0.0
    %177 = vmatpush1.msra.mxu0 0.0
    %178 = vmatprep.subr.mxu0 0.0
    %179 = vmatpush1.msra.mxu0 0.0
    %180 = vmatprep.subr.mxu0 0.0
    %181 = vmatpush1.msra.mxu0 0.0
    %182 = vmatprep.subr.mxu0 0.0
    %183 = vmatpush1.msra.mxu0 0.0
    %184 = vmatprep.subr.mxu0 0.0
    %185 = vmatpush1.msra.mxu0 0.0
    %186 = vmatprep.subr.mxu0 0.0
    %187 = vmatpush1.msra.mxu0 0.0
    %188 = vmatprep.subr.mxu0 0.0
    %189 = vmatpush1.msra.mxu0 0.0
    %190 = vmatprep.subr.mxu0 0.0
    %191 = vmatpush1.msra.mxu0 0.0
    %192 = vmatprep.subr.mxu0 0.0
    %193 = vmatpush1.msra.mxu0 0.0
    %194 = vmatprep.subr.mxu0 0.0
    %195 = vmatpush1.msra.mxu0 0.0
    %196 = vmatprep.subr.mxu0 0.0
    %197 = vmatpush1.msra.mxu0 0.0
    %198 = vmatprep.subr.mxu0 0.0
    %199 = vmatpush1.msra.mxu0 0.0
    %200 = vmatprep.mubr.f32.mxu0 0.0
    %201 = vmatmul.mubr.f32.gmra.mrb[0].mxu0 %v131
    %v202 = vpop.f32.mrb[0].mxu0
    %v203 = vadd.f32 0.0, %v202
    %v204 = vpop.f32.mrb[0].mxu0
    %205 = vmatprep.mubr.f32.mxu0 0.0
    %206 = vmatmul.mubr.f32.gmra.mrb[0].mxu0 %v134
    %v207 = vpop.f32.mrb[0].mxu0
    %v208 = vadd.f32 0.0, %v207
    %v209 = vpop.f32.mrb[0].mxu0
    %210 = vdwg.mxu0
    %v211 = vld [vmem:[%s6] sm:$0x3]
    %s212 = scalar_lea.vmem %s6, 2
    %v213 = vld [vmem:[%s212] sm:$0x3]
    %v214 = vld [vmem:[%s7] sm:$0x3]
    %s215 = scalar_lea.vmem %s7, 2
    %v216 = vld [vmem:[%s215] sm:$0x3]
    %vm217 = vcmask 261120
    %v219 = vsel %vm217, %v211, 0
    %221 = vmatprep.subr.mxu0 0.0
    %222 = vmatpush1.msra.mxu0 %v95
    %223 = vmatprep.subr.mxu0 0.0
    %224 = vmatpush1.msra.mxu0 %v96
    %225 = vmatprep.subr.mxu0 0.0
    %226 = vmatpush1.msra.mxu0 %v97
    %227 = vmatprep.subr.mxu0 0.0
    %228 = vmatpush1.msra.mxu0 %v98
    %229 = vmatprep.subr.mxu0 0.0
    %230 = vmatpush1.msra.mxu0 0.0
    %231 = vmatprep.subr.mxu0 0.0
    %232 = vmatpush1.msra.mxu0 0.0
    %233 = vmatprep.subr.mxu0 0.0
    %234 = vmatpush1.msra.mxu0 0.0
    %235 = vmatprep.subr.mxu0 0.0
    %236 = vmatpush1.msra.mxu0 0.0
    %237 = vmatprep.subr.mxu0 0.0
    %238 = vmatpush1.msra.mxu0 0.0
    %239 = vmatprep.subr.mxu0 0.0
    %240 = vmatpush1.msra.mxu0 0.0
    %241 = vmatprep.subr.mxu0 0.0
    %242 = vmatpush1.msra.mxu0 0.0
    %243 = vmatprep.subr.mxu0 0.0
    %244 = vmatpush1.msra.mxu0 0.0
    %245 = vmatprep.subr.mxu0 0.0
    %246 = vmatpush1.msra.mxu0 0.0
    %247 = vmatprep.subr.mxu0 0.0
    %248 = vmatpush1.msra.mxu0 0.0
    %249 = vmatprep.subr.mxu0 0.0
    %250 = vmatpush1.msra.mxu0 0.0
    %251 = vmatprep.subr.mxu0 0.0
    %252 = vmatpush1.msra.mxu0 0.0
    %253 = vmatprep.subr.mxu0 0.0
    %254 = vmatpush1.msra.mxu0 0.0
    %255 = vmatprep.subr.mxu0 0.0
    %256 = vmatpush1.msra.mxu0 0.0
    %257 = vmatprep.subr.mxu0 0.0
    %258 = vmatpush1.msra.mxu0 0.0
    %259 = vmatprep.subr.mxu0 0.0
    %260 = vmatpush1.msra.mxu0 0.0
    %261 = vmatprep.subr.mxu0 0.0
    %262 = vmatpush1.msra.mxu0 0.0
    %263 = vmatprep.subr.mxu0 0.0
    %264 = vmatpush1.msra.mxu0 0.0
    %265 = vmatprep.subr.mxu0 0.0
    %266 = vmatpush1.msra.mxu0 0.0
    %267 = vmatprep.subr.mxu0 0.0
    %268 = vmatpush1.msra.mxu0 0.0
    %269 = vmatprep.subr.mxu0 0.0
    %270 = vmatpush1.msra.mxu0 0.0
    %271 = vmatprep.subr.mxu0 0.0
    %272 = vmatpush1.msra.mxu0 0.0
    %273 = vmatprep.subr.mxu0 0.0
    %274 = vmatpush1.msra.mxu0 0.0
    %275 = vmatprep.subr.mxu0 0.0
    %276 = vmatpush1.msra.mxu0 0.0
    %277 = vmatprep.subr.mxu0 0.0
    %278 = vmatpush1.msra.mxu0 0.0
    %279 = vmatprep.subr.mxu0 0.0
    %280 = vmatpush1.msra.mxu0 0.0
    %281 = vmatprep.subr.mxu0 0.0
    %282 = vmatpush1.msra.mxu0 0.0
    %283 = vmatprep.subr.mxu0 0.0
    %284 = vmatpush1.msra.mxu0 0.0
    %285 = vmatprep.mubr.f32.mxu0 0.0
    %286 = vmatmul.mubr.f32.gmra.mrb[0].mxu0 %v219
    %v287 = vpop.f32.mrb[0].mxu0
    %v288 = vadd.f32 0.0, %v287
    %v289 = vpop.f32.mrb[0].mxu0
    %290 = vdwg.mxu0
    %v291 = vadd.f32 %v203, %v288
    %v292 = vxor.u32 %v291, 2147483648
    %v293 = vmul.f32 %v292, 1.442695
    %v294 = vpow.pop %v293
    %v295 = vadd.f32 %v294, 1.0
    %v296 = vrcp.pop %v295
    %v297 = vmul.f32 1.0, %v296
    %v298 = vmul.f32 %v297, 2.0
    %v299 = vsub.f32 %v298, 1.0
    %301 = vrot.lane.b32.xlu0 %v214, 32
    %v302 = vpop.permute.xlu0 %301
    %v304 = vmul.f32 %v297, %v302
    %306 = vrot.lane.b32.xlu0 %v299, 64
    %v307 = vpop.permute.xlu0 %306
    %v309 = vmul.f32 %v297, %v307
    %311 = vrot.lane.b32.xlu0 %v309, 32
    %v312 = vpop.permute.xlu0 %311
    %v314 = vadd.f32 %v304, %v312
    %v315 = vtanh.pop %v314
    %317 = vrot.lane.b32.xlu0 %v315, 64
    %v318 = vpop.permute.xlu0 %317
    %v320 = vmul.f32 %v297, %v318
    %322 = vrot.lane.b32.xlu0 %v320, 32
    %v323 = vpop.permute.xlu0 %322
    %v324 = vsel %vm217, %v323, 0
    %326 = vmatprep.subr.mxu0 0.0
    %327 = vmatpush1.msra.mxu0 %v95
    %328 = vmatprep.subr.mxu0 0.0
    %329 = vmatpush1.msra.mxu0 %v96
    %330 = vmatprep.subr.mxu0 0.0
    %331 = vmatpush1.msra.mxu0 %v97
    %332 = vmatprep.subr.mxu0 0.0
    %333 = vmatpush1.msra.mxu0 %v98
    %334 = vmatprep.subr.mxu0 0.0
    %335 = vmatpush1.msra.mxu0 0.0
    %336 = vmatprep.subr.mxu0 0.0
    %337 = vmatpush1.msra.mxu0 0.0
    %338 = vmatprep.subr.mxu0 0.0
    %339 = vmatpush1.msra.mxu0 0.0
    %340 = vmatprep.subr.mxu0 0.0
    %341 = vmatpush1.msra.mxu0 0.0
    %342 = vmatprep.subr.mxu0 0.0
    %343 = vmatpush1.msra.mxu0 0.0
    %344 = vmatprep.subr.mxu0 0.0
    %345 = vmatpush1.msra.mxu0 0.0
    %346 = vmatprep.subr.mxu0 0.0
    %347 = vmatpush1.msra.mxu0 0.0
    %348 = vmatprep.subr.mxu0 0.0
    %349 = vmatpush1.msra.mxu0 0.0
    %350 = vmatprep.subr.mxu0 0.0
    %351 = vmatpush1.msra.mxu0 0.0
    %352 = vmatprep.subr.mxu0 0.0
    %353 = vmatpush1.msra.mxu0 0.0
    %354 = vmatprep.subr.mxu0 0.0
    %355 = vmatpush1.msra.mxu0 0.0
    %356 = vmatprep.subr.mxu0 0.0
    %357 = vmatpush1.msra.mxu0 0.0
    %358 = vmatprep.subr.mxu0 0.0
    %359 = vmatpush1.msra.mxu0 0.0
    %360 = vmatprep.subr.mxu0 0.0
    %361 = vmatpush1.msra.mxu0 0.0
    %362 = vmatprep.subr.mxu0 0.0
    %363 = vmatpush1.msra.mxu0 0.0
    %364 = vmatprep.subr.mxu0 0.0
    %365 = vmatpush1.msra.mxu0 0.0
    %366 = vmatprep.subr.mxu0 0.0
    %367 = vmatpush1.msra.mxu0 0.0
    %368 = vmatprep.subr.mxu0 0.0
    %369 = vmatpush1.msra.mxu0 0.0
    %370 = vmatprep.subr.mxu0 0.0
    %371 = vmatpush1.msra.mxu0 0.0
    %372 = vmatprep.subr.mxu0 0.0
    %373 = vmatpush1.msra.mxu0 0.0
    %374 = vmatprep.subr.mxu0 0.0
    %375 = vmatpush1.msra.mxu0 0.0
    %376 = vmatprep.subr.mxu0 0.0
    %377 = vmatpush1.msra.mxu0 0.0
    %378 = vmatprep.subr.mxu0 0.0
    %379 = vmatpush1.msra.mxu0 0.0
    %380 = vmatprep.subr.mxu0 0.0
    %381 = vmatpush1.msra.mxu0 0.0
    %382 = vmatprep.subr.mxu0 0.0
    %383 = vmatpush1.msra.mxu0 0.0
    %384 = vmatprep.subr.mxu0 0.0
    %385 = vmatpush1.msra.mxu0 0.0
    %386 = vmatprep.subr.mxu0 0.0
    %387 = vmatpush1.msra.mxu0 0.0
    %388 = vmatprep.subr.mxu0 0.0
    %389 = vmatpush1.msra.mxu0 0.0
    %390 = vmatprep.mubr.f32.mxu0 0.0
    %391 = vmatmul.mubr.f32.gmra.mrb[0].mxu0 %v324
    %v392 = vpop.f32.mrb[0].mxu0
    %v393 = vadd.f32 0.0, %v392
    %v394 = vpop.f32.mrb[0].mxu0
    %395 = vdwg.mxu0
    %v397 = vrot.slane %v393, 6
    %v399 = vadd.f32 %v203, %v397
    %v400 = vxor.u32 %v399, 2147483648
    %v401 = vmul.f32 %v400, 1.442695
    %v402 = vpow.pop %v401
    %v403 = vadd.f32 %v402, 1.0
    %v404 = vrcp.pop %v403
    %v405 = vmul.f32 1.0, %v404
    %v406 = vmul.f32 %v405, 2.0
    %v407 = vsub.f32 %v406, 1.0
    %v409 = vrot.slane %v314, 6
    %v411 = vmul.f32 %v405, %v409
    %413 = vrot.lane.b32.xlu0 %v407, 64
    %v414 = vpop.permute.xlu0 %413
    %v416 = vmul.f32 %v405, %v414
    %418 = vrot.lane.b32.xlu0 %v416, 32
    %v419 = vpop.permute.xlu0 %418
    %v421 = vadd.f32 %v411, %v419
    %v422 = vtanh.pop %v421
    %424 = vrot.lane.b32.xlu0 %v422, 64
    %v425 = vpop.permute.xlu0 %424
    %v427 = vmul.f32 %v405, %v425
    %v429 = vlaneseq
    %v430 = vshrl.u32 %v429, 7
    %v431 = vsub.s32 0, %v430
    %v432 = vrot.slane %v107, %v431
    %434 = vmatprep.subr.mxu0 0.0
    %435 = vmatpush1.msra.mxu0 %v99
    %436 = vmatprep.subr.mxu0 0.0
    %437 = vmatpush1.msra.mxu0 %v100
    %438 = vmatprep.subr.mxu0 0.0
    %439 = vmatpush1.msra.mxu0 %v101
    %440 = vmatprep.subr.mxu0 0.0
    %441 = vmatpush1.msra.mxu0 %v102
    %442 = vmatprep.subr.mxu0 0.0
    %443 = vmatpush1.msra.mxu0 0.0
    %444 = vmatprep.subr.mxu0 0.0
    %445 = vmatpush1.msra.mxu0 0.0
    %446 = vmatprep.subr.mxu0 0.0
    %447 = vmatpush1.msra.mxu0 0.0
    %448 = vmatprep.subr.mxu0 0.0
    %449 = vmatpush1.msra.mxu0 0.0
    %450 = vmatprep.subr.mxu0 0.0
    %451 = vmatpush1.msra.mxu0 0.0
    %452 = vmatprep.subr.mxu0 0.0
    %453 = vmatpush1.msra.mxu0 0.0
    %454 = vmatprep.subr.mxu0 0.0
    %455 = vmatpush1.msra.mxu0 0.0
    %456 = vmatprep.subr.mxu0 0.0
    %457 = vmatpush1.msra.mxu0 0.0
    %458 = vmatprep.subr.mxu0 0.0
    %459 = vmatpush1.msra.mxu0 0.0
    %460 = vmatprep.subr.mxu0 0.0
    %461 = vmatpush1.msra.mxu0 0.0
    %462 = vmatprep.subr.mxu0 0.0
    %463 = vmatpush1.msra.mxu0 0.0
    %464 = vmatprep.subr.mxu0 0.0
    %465 = vmatpush1.msra.mxu0 0.0
    %466 = vmatprep.subr.mxu0 0.0
    %467 = vmatpush1.msra.mxu0 0.0
    %468 = vmatprep.subr.mxu0 0.0
    %469 = vmatpush1.msra.mxu0 0.0
    %470 = vmatprep.subr.mxu0 0.0
    %471 = vmatpush1.msra.mxu0 0.0
    %472 = vmatprep.subr.mxu0 0.0
    %473 = vmatpush1.msra.mxu0 0.0
    %474 = vmatprep.subr.mxu0 0.0
    %475 = vmatpush1.msra.mxu0 0.0
    %476 = vmatprep.subr.mxu0 0.0
    %477 = vmatpush1.msra.mxu0 0.0
    %478 = vmatprep.subr.mxu0 0.0
    %479 = vmatpush1.msra.mxu0 0.0
    %480 = vmatprep.subr.mxu0 0.0
    %481 = vmatpush1.msra.mxu0 0.0
    %482 = vmatprep.subr.mxu0 0.0
    %483 = vmatpush1.msra.mxu0 0.0
    %484 = vmatprep.subr.mxu0 0.0
    %485 = vmatpush1.msra.mxu0 0.0
    %486 = vmatprep.subr.mxu0 0.0
    %487 = vmatpush1.msra.mxu0 0.0
    %488 = vmatprep.subr.mxu0 0.0
    %489 = vmatpush1.msra.mxu0 0.0
    %490 = vmatprep.subr.mxu0 0.0
    %491 = vmatpush1.msra.mxu0 0.0
    %492 = vmatprep.subr.mxu0 0.0
    %493 = vmatpush1.msra.mxu0 0.0
    %494 = vmatprep.subr.mxu0 0.0
    %495 = vmatpush1.msra.mxu0 0.0
    %496 = vmatprep.subr.mxu0 0.0
    %497 = vmatpush1.msra.mxu0 0.0
    %498 = vmatprep.mubr.f32.mxu0 0.0
    %499 = vmatmul.mubr.f32.gmra.mrb[0].mxu0 %v324
    %v500 = vpop.f32.mrb[0].mxu0
    %v501 = vadd.f32 %v432, %v500
    %v502 = vpop.f32.mrb[0].mxu0
    %503 = vdwg.mxu0
    %v505 = vsel %vm217, %v213, 0
    %507 = vmatprep.subr.mxu0 0.0
    %508 = vmatpush1.msra.mxu0 %v103
    %509 = vmatprep.subr.mxu0 0.0
    %510 = vmatpush1.msra.mxu0 %v104
    %511 = vmatprep.subr.mxu0 0.0
    %512 = vmatpush1.msra.mxu0 %v105
    %513 = vmatprep.subr.mxu0 0.0
    %514 = vmatpush1.msra.mxu0 %v106
    %515 = vmatprep.subr.mxu0 0.0
    %516 = vmatpush1.msra.mxu0 0.0
    %517 = vmatprep.subr.mxu0 0.0
    %518 = vmatpush1.msra.mxu0 0.0
    %519 = vmatprep.subr.mxu0 0.0
    %520 = vmatpush1.msra.mxu0 0.0
    %521 = vmatprep.subr.mxu0 0.0
    %522 = vmatpush1.msra.mxu0 0.0
    %523 = vmatprep.subr.mxu0 0.0
    %524 = vmatpush1.msra.mxu0 0.0
    %525 = vmatprep.subr.mxu0 0.0
    %526 = vmatpush1.msra.mxu0 0.0
    %527 = vmatprep.subr.mxu0 0.0
    %528 = vmatpush1.msra.mxu0 0.0
    %529 = vmatprep.subr.mxu0 0.0
    %530 = vmatpush1.msra.mxu0 0.0
    %531 = vmatprep.subr.mxu0 0.0
    %532 = vmatpush1.msra.mxu0 0.0
    %533 = vmatprep.subr.mxu0 0.0
    %534 = vmatpush1.msra.mxu0 0.0
    %535 = vmatprep.subr.mxu0 0.0
    %536 = vmatpush1.msra.mxu0 0.0
    %537 = vmatprep.subr.mxu0 0.0
    %538 = vmatpush1.msra.mxu0 0.0
    %539 = vmatprep.subr.mxu0 0.0
    %540 = vmatpush1.msra.mxu0 0.0
    %541 = vmatprep.subr.mxu0 0.0
    %542 = vmatpush1.msra.mxu0 0.0
    %543 = vmatprep.subr.mxu0 0.0
    %544 = vmatpush1.msra.mxu0 0.0
    %545 = vmatprep.subr.mxu0 0.0
    %546 = vmatpush1.msra.mxu0 0.0
    %547 = vmatprep.subr.mxu0 0.0
    %548 = vmatpush1.msra.mxu0 0.0
    %549 = vmatprep.subr.mxu0 0.0
    %550 = vmatpush1.msra.mxu0 0.0
    %551 = vmatprep.subr.mxu0 0.0
    %552 = vmatpush1.msra.mxu0 0.0
    %553 = vmatprep.subr.mxu0 0.0
    %554 = vmatpush1.msra.mxu0 0.0
    %555 = vmatprep.subr.mxu0 0.0
    %556 = vmatpush1.msra.mxu0 0.0
    %557 = vmatprep.subr.mxu0 0.0
    %558 = vmatpush1.msra.mxu0 0.0
    %559 = vmatprep.subr.mxu0 0.0
    %560 = vmatpush1.msra.mxu0 0.0
    %561 = vmatprep.subr.mxu0 0.0
    %562 = vmatpush1.msra.mxu0 0.0
    %563 = vmatprep.subr.mxu0 0.0
    %564 = vmatpush1.msra.mxu0 0.0
    %565 = vmatprep.subr.mxu0 0.0
    %566 = vmatpush1.msra.mxu0 0.0
    %567 = vmatprep.subr.mxu0 0.0
    %568 = vmatpush1.msra.mxu0 0.0
    %569 = vmatprep.subr.mxu0 0.0
    %570 = vmatpush1.msra.mxu0 0.0
    %571 = vmatprep.mubr.f32.mxu0 0.0
    %572 = vmatmul.mubr.f32.gmra.mrb[0].mxu0 %v505
    %v573 = vpop.f32.mrb[0].mxu0
    %v574 = vadd.f32 0.0, %v573
    %v575 = vpop.f32.mrb[0].mxu0
    %576 = vdwg.mxu0
    %v577 = vadd.f32 %v501, %v574
    %v578 = vxor.u32 %v577, 2147483648
    %v579 = vmul.f32 %v578, 1.442695
    %v580 = vpow.pop %v579
    %v581 = vadd.f32 %v580, 1.0
    %v582 = vrcp.pop %v581
    %v583 = vmul.f32 1.0, %v582
    %v584 = vmul.f32 %v583, 2.0
    %v585 = vsub.f32 %v584, 1.0
    %587 = vrot.lane.b32.xlu0 %v216, 32
    %v588 = vpop.permute.xlu0 %587
    %v590 = vmul.f32 %v583, %v588
    %592 = vrot.lane.b32.xlu0 %v585, 64
    %v593 = vpop.permute.xlu0 %592
    %v595 = vmul.f32 %v583, %v593
    %597 = vrot.lane.b32.xlu0 %v595, 32
    %v598 = vpop.permute.xlu0 %597
    %v600 = vadd.f32 %v590, %v598
    %v601 = vtanh.pop %v600
    %603 = vrot.lane.b32.xlu0 %v601, 64
    %v604 = vpop.permute.xlu0 %603
    %v606 = vmul.f32 %v583, %v604
    %v608 = vrot.slane %v427, 2
    %609 = vrot.lane.b32.xlu0 %v608, 32
    %v610 = vpop.permute.xlu0 %609
    %v611 = vsel %vm217, %v610, 0
    %613 = vmatprep.subr.mxu0 0.0
    %614 = vmatpush1.msra.mxu0 %v95
    %615 = vmatprep.subr.mxu0 0.0
    %616 = vmatpush1.msra.mxu0 %v96
    %617 = vmatprep.subr.mxu0 0.0
    %618 = vmatpush1.msra.mxu0 %v97
    %619 = vmatprep.subr.mxu0 0.0
    %620 = vmatpush1.msra.mxu0 %v98
    %621 = vmatprep.subr.mxu0 0.0
    %622 = vmatpush1.msra.mxu0 0.0
    %623 = vmatprep.subr.mxu0 0.0
    %624 = vmatpush1.msra.mxu0 0.0
    %625 = vmatprep.subr.mxu0 0.0
    %626 = vmatpush1.msra.mxu0 0.0
    %627 = vmatprep.subr.mxu0 0.0
    %628 = vmatpush1.msra.mxu0 0.0
    %629 = vmatprep.subr.mxu0 0.0
    %630 = vmatpush1.msra.mxu0 0.0
    %631 = vmatprep.subr.mxu0 0.0
    %632 = vmatpush1.msra.mxu0 0.0
    %633 = vmatprep.subr.mxu0 0.0
    %634 = vmatpush1.msra.mxu0 0.0
    %635 = vmatprep.subr.mxu0 0.0
    %636 = vmatpush1.msra.mxu0 0.0
    %637 = vmatprep.subr.mxu0 0.0
    %638 = vmatpush1.msra.mxu0 0.0
    %639 = vmatprep.subr.mxu0 0.0
    %640 = vmatpush1.msra.mxu0 0.0
    %641 = vmatprep.subr.mxu0 0.0
    %642 = vmatpush1.msra.mxu0 0.0
    %643 = vmatprep.subr.mxu0 0.0
    %644 = vmatpush1.msra.mxu0 0.0
    %645 = vmatprep.subr.mxu0 0.0
    %646 = vmatpush1.msra.mxu0 0.0
    %647 = vmatprep.subr.mxu0 0.0
    %648 = vmatpush1.msra.mxu0 0.0
    %649 = vmatprep.subr.mxu0 0.0
    %650 = vmatpush1.msra.mxu0 0.0
    %651 = vmatprep.subr.mxu0 0.0
    %652 = vmatpush1.msra.mxu0 0.0
    %653 = vmatprep.subr.mxu0 0.0
    %654 = vmatpush1.msra.mxu0 0.0
    %655 = vmatprep.subr.mxu0 0.0
    %656 = vmatpush1.msra.mxu0 0.0
    %657 = vmatprep.subr.mxu0 0.0
    %658 = vmatpush1.msra.mxu0 0.0
    %659 = vmatprep.subr.mxu0 0.0
    %660 = vmatpush1.msra.mxu0 0.0
    %661 = vmatprep.subr.mxu0 0.0
    %662 = vmatpush1.msra.mxu0 0.0
    %663 = vmatprep.subr.mxu0 0.0
    %664 = vmatpush1.msra.mxu0 0.0
    %665 = vmatprep.subr.mxu0 0.0
    %666 = vmatpush1.msra.mxu0 0.0
    %667 = vmatprep.subr.mxu0 0.0
    %668 = vmatpush1.msra.mxu0 0.0
    %669 = vmatprep.subr.mxu0 0.0
    %670 = vmatpush1.msra.mxu0 0.0
    %671 = vmatprep.subr.mxu0 0.0
    %672 = vmatpush1.msra.mxu0 0.0
    %673 = vmatprep.subr.mxu0 0.0
    %674 = vmatpush1.msra.mxu0 0.0
    %675 = vmatprep.subr.mxu0 0.0
    %676 = vmatpush1.msra.mxu0 0.0
    %677 = vmatprep.mubr.f32.mxu0 0.0
    %678 = vmatmul.mubr.f32.gmra.mrb[0].mxu0 %v611
    %v679 = vpop.f32.mrb[0].mxu0
    %v680 = vadd.f32 0.0, %v679
    %v681 = vpop.f32.mrb[0].mxu0
    %682 = vdwg.mxu0
    %v684 = vrot.slane %v680, 4
    %v686 = vadd.f32 %v203, %v684
    %v687 = vxor.u32 %v686, 2147483648
    %v688 = vmul.f32 %v687, 1.442695
    %v689 = vpow.pop %v688
    %v690 = vadd.f32 %v689, 1.0
    %v691 = vrcp.pop %v690
    %v692 = vmul.f32 1.0, %v691
    %v693 = vmul.f32 %v692, 2.0
    %v694 = vsub.f32 %v693, 1.0
    %v696 = vrot.slane %v421, 6
    %v698 = vmul.f32 %v692, %v696
    %700 = vrot.lane.b32.xlu0 %v694, 64
    %v701 = vpop.permute.xlu0 %700
    %v703 = vmul.f32 %v692, %v701
    %705 = vrot.lane.b32.xlu0 %v703, 32
    %v706 = vpop.permute.xlu0 %705
    %v708 = vadd.f32 %v698, %v706
    %v709 = vtanh.pop %v708
    %711 = vrot.lane.b32.xlu0 %v709, 64
    %v712 = vpop.permute.xlu0 %711
    %v714 = vmul.f32 %v692, %v712
    %715 = vmatprep.subr.mxu0 0.0
    %716 = vmatpush1.msra.mxu0 %v99
    %717 = vmatprep.subr.mxu0 0.0
    %718 = vmatpush1.msra.mxu0 %v100
    %719 = vmatprep.subr.mxu0 0.0
    %720 = vmatpush1.msra.mxu0 %v101
    %721 = vmatprep.subr.mxu0 0.0
    %722 = vmatpush1.msra.mxu0 %v102
    %723 = vmatprep.subr.mxu0 0.0
    %724 = vmatpush1.msra.mxu0 0.0
    %725 = vmatprep.subr.mxu0 0.0
    %726 = vmatpush1.msra.mxu0 0.0
    %727 = vmatprep.subr.mxu0 0.0
    %728 = vmatpush1.msra.mxu0 0.0
    %729 = vmatprep.subr.mxu0 0.0
    %730 = vmatpush1.msra.mxu0 0.0
    %731 = vmatprep.subr.mxu0 0.0
    %732 = vmatpush1.msra.mxu0 0.0
    %733 = vmatprep.subr.mxu0 0.0
    %734 = vmatpush1.msra.mxu0 0.0
    %735 = vmatprep.subr.mxu0 0.0
    %736 = vmatpush1.msra.mxu0 0.0
    %737 = vmatprep.subr.mxu0 0.0
    %738 = vmatpush1.msra.mxu0 0.0
    %739 = vmatprep.subr.mxu0 0.0
    %740 = vmatpush1.msra.mxu0 0.0
    %741 = vmatprep.subr.mxu0 0.0
    %742 = vmatpush1.msra.mxu0 0.0
    %743 = vmatprep.subr.mxu0 0.0
    %744 = vmatpush1.msra.mxu0 0.0
    %745 = vmatprep.subr.mxu0 0.0
    %746 = vmatpush1.msra.mxu0 0.0
    %747 = vmatprep.subr.mxu0 0.0
    %748 = vmatpush1.msra.mxu0 0.0
    %749 = vmatprep.subr.mxu0 0.0
    %750 = vmatpush1.msra.mxu0 0.0
    %751 = vmatprep.subr.mxu0 0.0
    %752 = vmatpush1.msra.mxu0 0.0
    %753 = vmatprep.subr.mxu0 0.0
    %754 = vmatpush1.msra.mxu0 0.0
    %755 = vmatprep.subr.mxu0 0.0
    %756 = vmatpush1.msra.mxu0 0.0
    %757 = vmatprep.subr.mxu0 0.0
    %758 = vmatpush1.msra.mxu0 0.0
    %759 = vmatprep.subr.mxu0 0.0
    %760 = vmatpush1.msra.mxu0 0.0
    %761 = vmatprep.subr.mxu0 0.0
    %762 = vmatpush1.msra.mxu0 0.0
    %763 = vmatprep.subr.mxu0 0.0
    %764 = vmatpush1.msra.mxu0 0.0
    %765 = vmatprep.subr.mxu0 0.0
    %766 = vmatpush1.msra.mxu0 0.0
    %767 = vmatprep.subr.mxu0 0.0
    %768 = vmatpush1.msra.mxu0 0.0
    %769 = vmatprep.subr.mxu0 0.0
    %770 = vmatpush1.msra.mxu0 0.0
    %771 = vmatprep.subr.mxu0 0.0
    %772 = vmatpush1.msra.mxu0 0.0
    %773 = vmatprep.subr.mxu0 0.0
    %774 = vmatpush1.msra.mxu0 0.0
    %775 = vmatprep.subr.mxu0 0.0
    %776 = vmatpush1.msra.mxu0 0.0
    %777 = vmatprep.subr.mxu0 0.0
    %778 = vmatpush1.msra.mxu0 0.0
    %779 = vmatprep.mubr.f32.mxu0 0.0
    %780 = vmatmul.mubr.f32.gmra.mrb[0].mxu0 %v611
    %v781 = vpop.f32.mrb[0].mxu0
    %v782 = vadd.f32 %v432, %v781
    %v783 = vpop.f32.mrb[0].mxu0
    %784 = vdwg.mxu0
    %786 = vrot.lane.b32.xlu0 %v606, 32
    %v787 = vpop.permute.xlu0 %786
    %v788 = vsel %vm217, %v787, 0
    %790 = vmatprep.subr.mxu0 0.0
    %791 = vmatpush1.msra.mxu0 %v103
    %792 = vmatprep.subr.mxu0 0.0
    %793 = vmatpush1.msra.mxu0 %v104
    %794 = vmatprep.subr.mxu0 0.0
    %795 = vmatpush1.msra.mxu0 %v105
    %796 = vmatprep.subr.mxu0 0.0
    %797 = vmatpush1.msra.mxu0 %v106
    %798 = vmatprep.subr.mxu0 0.0
    %799 = vmatpush1.msra.mxu0 0.0
    %800 = vmatprep.subr.mxu0 0.0
    %801 = vmatpush1.msra.mxu0 0.0
    %802 = vmatprep.subr.mxu0 0.0
    %803 = vmatpush1.msra.mxu0 0.0
    %804 = vmatprep.subr.mxu0 0.0
    %805 = vmatpush1.msra.mxu0 0.0
    %806 = vmatprep.subr.mxu0 0.0
    %807 = vmatpush1.msra.mxu0 0.0
    %808 = vmatprep.subr.mxu0 0.0
    %809 = vmatpush1.msra.mxu0 0.0
    %810 = vmatprep.subr.mxu0 0.0
    %811 = vmatpush1.msra.mxu0 0.0
    %812 = vmatprep.subr.mxu0 0.0
    %813 = vmatpush1.msra.mxu0 0.0
    %814 = vmatprep.subr.mxu0 0.0
    %815 = vmatpush1.msra.mxu0 0.0
    %816 = vmatprep.subr.mxu0 0.0
    %817 = vmatpush1.msra.mxu0 0.0
    %818 = vmatprep.subr.mxu0 0.0
    %819 = vmatpush1.msra.mxu0 0.0
    %820 = vmatprep.subr.mxu0 0.0
    %821 = vmatpush1.msra.mxu0 0.0
    %822 = vmatprep.subr.mxu0 0.0
    %823 = vmatpush1.msra.mxu0 0.0
    %824 = vmatprep.subr.mxu0 0.0
    %825 = vmatpush1.msra.mxu0 0.0
    %826 = vmatprep.subr.mxu0 0.0
    %827 = vmatpush1.msra.mxu0 0.0
    %828 = vmatprep.subr.mxu0 0.0
    %829 = vmatpush1.msra.mxu0 0.0
    %830 = vmatprep.subr.mxu0 0.0
    %831 = vmatpush1.msra.mxu0 0.0
    %832 = vmatprep.subr.mxu0 0.0
    %833 = vmatpush1.msra.mxu0 0.0
    %834 = vmatprep.subr.mxu0 0.0
    %835 = vmatpush1.msra.mxu0 0.0
    %836 = vmatprep.subr.mxu0 0.0
    %837 = vmatpush1.msra.mxu0 0.0
    %838 = vmatprep.subr.mxu0 0.0
    %839 = vmatpush1.msra.mxu0 0.0
    %840 = vmatprep.subr.mxu0 0.0
    %841 = vmatpush1.msra.mxu0 0.0
    %842 = vmatprep.subr.mxu0 0.0
    %843 = vmatpush1.msra.mxu0 0.0
    %844 = vmatprep.subr.mxu0 0.0
    %845 = vmatpush1.msra.mxu0 0.0
    %846 = vmatprep.subr.mxu0 0.0
    %847 = vmatpush1.msra.mxu0 0.0
    %848 = vmatprep.subr.mxu0 0.0
    %849 = vmatpush1.msra.mxu0 0.0
    %850 = vmatprep.subr.mxu0 0.0
    %851 = vmatpush1.msra.mxu0 0.0
    %852 = vmatprep.subr.mxu0 0.0
    %853 = vmatpush1.msra.mxu0 0.0
    %854 = vmatprep.mubr.f32.mxu0 0.0
    %855 = vmatmul.mubr.f32.gmra.mrb[0].mxu0 %v788
    %v856 = vpop.f32.mrb[0].mxu0
    %v857 = vadd.f32 0.0, %v856
    %v858 = vpop.f32.mrb[0].mxu0
    %859 = vdwg.mxu0
    %v860 = vadd.f32 %v782, %v857
    %v861 = vxor.u32 %v860, 2147483648
    %v862 = vmul.f32 %v861, 1.442695
    %v863 = vpow.pop %v862
    %v864 = vadd.f32 %v863, 1.0
    %v865 = vrcp.pop %v864
    %v866 = vmul.f32 1.0, %v865
    %v867 = vmul.f32 %v866, 2.0
    %v868 = vsub.f32 %v867, 1.0
    %v869 = vmul.f32 %v866, %v600
    %871 = vrot.lane.b32.xlu0 %v868, 64
    %v872 = vpop.permute.xlu0 %871
    %v874 = vmul.f32 %v866, %v872
    %876 = vrot.lane.b32.xlu0 %v874, 32
    %v877 = vpop.permute.xlu0 %876
    %v879 = vadd.f32 %v869, %v877
    %v880 = vtanh.pop %v879
    %882 = vrot.lane.b32.xlu0 %v880, 64
    %v883 = vpop.permute.xlu0 %882
    %v885 = vmul.f32 %v866, %v883
    %v887 = vrot.slane %v714, 4
    %888 = vrot.lane.b32.xlu0 %v887, 32
    %v889 = vpop.permute.xlu0 %888
    %v890 = vsel %vm217, %v889, 0
    %892 = vmatprep.subr.mxu0 0.0
    %893 = vmatpush1.msra.mxu0 %v95
    %894 = vmatprep.subr.mxu0 0.0
    %895 = vmatpush1.msra.mxu0 %v96
    %896 = vmatprep.subr.mxu0 0.0
    %897 = vmatpush1.msra.mxu0 %v97
    %898 = vmatprep.subr.mxu0 0.0
    %899 = vmatpush1.msra.mxu0 %v98
    %900 = vmatprep.subr.mxu0 0.0
    %901 = vmatpush1.msra.mxu0 0.0
    %902 = vmatprep.subr.mxu0 0.0
    %903 = vmatpush1.msra.mxu0 0.0
    %904 = vmatprep.subr.mxu0 0.0
    %905 = vmatpush1.msra.mxu0 0.0
    %906 = vmatprep.subr.mxu0 0.0
    %907 = vmatpush1.msra.mxu0 0.0
    %908 = vmatprep.subr.mxu0 0.0
    %909 = vmatpush1.msra.mxu0 0.0
    %910 = vmatprep.subr.mxu0 0.0
    %911 = vmatpush1.msra.mxu0 0.0
    %912 = vmatprep.subr.mxu0 0.0
    %913 = vmatpush1.msra.mxu0 0.0
    %914 = vmatprep.subr.mxu0 0.0
    %915 = vmatpush1.msra.mxu0 0.0
    %916 = vmatprep.subr.mxu0 0.0
    %917 = vmatpush1.msra.mxu0 0.0
    %918 = vmatprep.subr.mxu0 0.0
    %919 = vmatpush1.msra.mxu0 0.0
    %920 = vmatprep.subr.mxu0 0.0
    %921 = vmatpush1.msra.mxu0 0.0
    %922 = vmatprep.subr.mxu0 0.0
    %923 = vmatpush1.msra.mxu0 0.0
    %924 = vmatprep.subr.mxu0 0.0
    %925 = vmatpush1.msra.mxu0 0.0
    %926 = vmatprep.subr.mxu0 0.0
    %927 = vmatpush1.msra.mxu0 0.0
    %928 = vmatprep.subr.mxu0 0.0
    %929 = vmatpush1.msra.mxu0 0.0
    %930 = vmatprep.subr.mxu0 0.0
    %931 = vmatpush1.msra.mxu0 0.0
    %932 = vmatprep.subr.mxu0 0.0
    %933 = vmatpush1.msra.mxu0 0.0
    %934 = vmatprep.subr.mxu0 0.0
    %935 = vmatpush1.msra.mxu0 0.0
    %936 = vmatprep.subr.mxu0 0.0
    %937 = vmatpush1.msra.mxu0 0.0
    %938 = vmatprep.subr.mxu0 0.0
    %939 = vmatpush1.msra.mxu0 0.0
    %940 = vmatprep.subr.mxu0 0.0
    %941 = vmatpush1.msra.mxu0 0.0
    %942 = vmatprep.subr.mxu0 0.0
    %943 = vmatpush1.msra.mxu0 0.0
    %944 = vmatprep.subr.mxu0 0.0
    %945 = vmatpush1.msra.mxu0 0.0
    %946 = vmatprep.subr.mxu0 0.0
    %947 = vmatpush1.msra.mxu0 0.0
    %948 = vmatprep.subr.mxu0 0.0
    %949 = vmatpush1.msra.mxu0 0.0
    %950 = vmatprep.subr.mxu0 0.0
    %951 = vmatpush1.msra.mxu0 0.0
    %952 = vmatprep.subr.mxu0 0.0
    %953 = vmatpush1.msra.mxu0 0.0
    %954 = vmatprep.subr.mxu0 0.0
    %955 = vmatpush1.msra.mxu0 0.0
    %956 = vmatprep.mubr.f32.mxu0 0.0
    %957 = vmatmul.mubr.f32.gmra.mrb[0].mxu0 %v890
    %v958 = vpop.f32.mrb[0].mxu0
    %v959 = vadd.f32 0.0, %v958
    %v960 = vpop.f32.mrb[0].mxu0
    %961 = vdwg.mxu0
    %v963 = vrot.slane %v959, 2
    %v965 = vadd.f32 %v203, %v963
    %v966 = vxor.u32 %v965, 2147483648
    %v967 = vmul.f32 %v966, 1.442695
    %v968 = vpow.pop %v967
    %v969 = vadd.f32 %v968, 1.0
    %v970 = vrcp.pop %v969
    %v971 = vmul.f32 1.0, %v970
    %v972 = vmul.f32 %v971, 2.0
    %v973 = vsub.f32 %v972, 1.0
    %v975 = vrot.slane %v708, 6
    %v977 = vmul.f32 %v971, %v975
    %979 = vrot.lane.b32.xlu0 %v973, 64
    %v980 = vpop.permute.xlu0 %979
    %v982 = vmul.f32 %v971, %v980
    %984 = vrot.lane.b32.xlu0 %v982, 32
    %v985 = vpop.permute.xlu0 %984
    %v987 = vadd.f32 %v977, %v985
    %v988 = vtanh.pop %v987
    %990 = vrot.lane.b32.xlu0 %v988, 64
    %v991 = vpop.permute.xlu0 %990
    %v993 = vmul.f32 %v971, %v991
    %994 = vmatprep.subr.mxu0 0.0
    %995 = vmatpush1.msra.mxu0 %v99
    %996 = vmatprep.subr.mxu0 0.0
    %997 = vmatpush1.msra.mxu0 %v100
    %998 = vmatprep.subr.mxu0 0.0
    %999 = vmatpush1.msra.mxu0 %v101
    %1000 = vmatprep.subr.mxu0 0.0
    %1001 = vmatpush1.msra.mxu0 %v102
    %1002 = vmatprep.subr.mxu0 0.0
    %1003 = vmatpush1.msra.mxu0 0.0
    %1004 = vmatprep.subr.mxu0 0.0
    %1005 = vmatpush1.msra.mxu0 0.0
    %1006 = vmatprep.subr.mxu0 0.0
    %1007 = vmatpush1.msra.mxu0 0.0
    %1008 = vmatprep.subr.mxu0 0.0
    %1009 = vmatpush1.msra.mxu0 0.0
    %1010 = vmatprep.subr.mxu0 0.0
    %1011 = vmatpush1.msra.mxu0 0.0
    %1012 = vmatprep.subr.mxu0 0.0
    %1013 = vmatpush1.msra.mxu0 0.0
    %1014 = vmatprep.subr.mxu0 0.0
    %1015 = vmatpush1.msra.mxu0 0.0
    %1016 = vmatprep.subr.mxu0 0.0
    %1017 = vmatpush1.msra.mxu0 0.0
    %1018 = vmatprep.subr.mxu0 0.0
    %1019 = vmatpush1.msra.mxu0 0.0
    %1020 = vmatprep.subr.mxu0 0.0
    %1021 = vmatpush1.msra.mxu0 0.0
    %1022 = vmatprep.subr.mxu0 0.0
    %1023 = vmatpush1.msra.mxu0 0.0
    %1024 = vmatprep.subr.mxu0 0.0
    %1025 = vmatpush1.msra.mxu0 0.0
    %1026 = vmatprep.subr.mxu0 0.0
    %1027 = vmatpush1.msra.mxu0 0.0
    %1028 = vmatprep.subr.mxu0 0.0
    %1029 = vmatpush1.msra.mxu0 0.0
    %1030 = vmatprep.subr.mxu0 0.0
    %1031 = vmatpush1.msra.mxu0 0.0
    %1032 = vmatprep.subr.mxu0 0.0
    %1033 = vmatpush1.msra.mxu0 0.0
    %1034 = vmatprep.subr.mxu0 0.0
    %1035 = vmatpush1.msra.mxu0 0.0
    %1036 = vmatprep.subr.mxu0 0.0
    %1037 = vmatpush1.msra.mxu0 0.0
    %1038 = vmatprep.subr.mxu0 0.0
    %1039 = vmatpush1.msra.mxu0 0.0
    %1040 = vmatprep.subr.mxu0 0.0
    %1041 = vmatpush1.msra.mxu0 0.0
    %1042 = vmatprep.subr.mxu0 0.0
    %1043 = vmatpush1.msra.mxu0 0.0
    %1044 = vmatprep.subr.mxu0 0.0
    %1045 = vmatpush1.msra.mxu0 0.0
    %1046 = vmatprep.subr.mxu0 0.0
    %1047 = vmatpush1.msra.mxu0 0.0
    %1048 = vmatprep.subr.mxu0 0.0
    %1049 = vmatpush1.msra.mxu0 0.0
    %1050 = vmatprep.subr.mxu0 0.0
    %1051 = vmatpush1.msra.mxu0 0.0
    %1052 = vmatprep.subr.mxu0 0.0
    %1053 = vmatpush1.msra.mxu0 0.0
    %1054 = vmatprep.subr.mxu0 0.0
    %1055 = vmatpush1.msra.mxu0 0.0
    %1056 = vmatprep.subr.mxu0 0.0
    %1057 = vmatpush1.msra.mxu0 0.0
    %1058 = vmatprep.mubr.f32.mxu0 0.0
    %1059 = vmatmul.mubr.f32.gmra.mrb[0].mxu0 %v890
    %v1060 = vpop.f32.mrb[0].mxu0
    %v1061 = vadd.f32 %v432, %v1060
    %v1062 = vpop.f32.mrb[0].mxu0
    %1063 = vdwg.mxu0
    %1065 = vrot.lane.b32.xlu0 %v885, 32
    %v1066 = vpop.permute.xlu0 %1065
    %v1067 = vsel %vm217, %v1066, 0
    %1069 = vmatprep.subr.mxu0 0.0
    %1070 = vmatpush1.msra.mxu0 %v103
    %1071 = vmatprep.subr.mxu0 0.0
    %1072 = vmatpush1.msra.mxu0 %v104
    %1073 = vmatprep.subr.mxu0 0.0
    %1074 = vmatpush1.msra.mxu0 %v105
    %1075 = vmatprep.subr.mxu0 0.0
    %1076 = vmatpush1.msra.mxu0 %v106
    %1077 = vmatprep.subr.mxu0 0.0
    %1078 = vmatpush1.msra.mxu0 0.0
    %1079 = vmatprep.subr.mxu0 0.0
    %1080 = vmatpush1.msra.mxu0 0.0
    %1081 = vmatprep.subr.mxu0 0.0
    %1082 = vmatpush1.msra.mxu0 0.0
    %1083 = vmatprep.subr.mxu0 0.0
    %1084 = vmatpush1.msra.mxu0 0.0
    %1085 = vmatprep.subr.mxu0 0.0
    %1086 = vmatpush1.msra.mxu0 0.0
    %1087 = vmatprep.subr.mxu0 0.0
    %1088 = vmatpush1.msra.mxu0 0.0
    %1089 = vmatprep.subr.mxu0 0.0
    %1090 = vmatpush1.msra.mxu0 0.0
    %1091 = vmatprep.subr.mxu0 0.0
    %1092 = vmatpush1.msra.mxu0 0.0
    %1093 = vmatprep.subr.mxu0 0.0
    %1094 = vmatpush1.msra.mxu0 0.0
    %1095 = vmatprep.subr.mxu0 0.0
    %1096 = vmatpush1.msra.mxu0 0.0
    %1097 = vmatprep.subr.mxu0 0.0
    %1098 = vmatpush1.msra.mxu0 0.0
    %1099 = vmatprep.subr.mxu0 0.0
    %1100 = vmatpush1.msra.mxu0 0.0
    %1101 = vmatprep.subr.mxu0 0.0
    %1102 = vmatpush1.msra.mxu0 0.0
    %1103 = vmatprep.subr.mxu0 0.0
    %1104 = vmatpush1.msra.mxu0 0.0
    %1105 = vmatprep.subr.mxu0 0.0
    %1106 = vmatpush1.msra.mxu0 0.0
    %1107 = vmatprep.subr.mxu0 0.0
    %1108 = vmatpush1.msra.mxu0 0.0
    %1109 = vmatprep.subr.mxu0 0.0
    %1110 = vmatpush1.msra.mxu0 0.0
    %1111 = vmatprep.subr.mxu0 0.0
    %1112 = vmatpush1.msra.mxu0 0.0
    %1113 = vmatprep.subr.mxu0 0.0
    %1114 = vmatpush1.msra.mxu0 0.0
    %1115 = vmatprep.subr.mxu0 0.0
    %1116 = vmatpush1.msra.mxu0 0.0
    %1117 = vmatprep.subr.mxu0 0.0
    %1118 = vmatpush1.msra.mxu0 0.0
    %1119 = vmatprep.subr.mxu0 0.0
    %1120 = vmatpush1.msra.mxu0 0.0
    %1121 = vmatprep.subr.mxu0 0.0
    %1122 = vmatpush1.msra.mxu0 0.0
    %1123 = vmatprep.subr.mxu0 0.0
    %1124 = vmatpush1.msra.mxu0 0.0
    %1125 = vmatprep.subr.mxu0 0.0
    %1126 = vmatpush1.msra.mxu0 0.0
    %1127 = vmatprep.subr.mxu0 0.0
    %1128 = vmatpush1.msra.mxu0 0.0
    %1129 = vmatprep.subr.mxu0 0.0
    %1130 = vmatpush1.msra.mxu0 0.0
    %1131 = vmatprep.subr.mxu0 0.0
    %1132 = vmatpush1.msra.mxu0 0.0
    %1133 = vmatprep.mubr.f32.mxu0 0.0
    %1134 = vmatmul.mubr.f32.gmra.mrb[0].mxu0 %v1067
    %v1135 = vpop.f32.mrb[0].mxu0
    %v1136 = vadd.f32 0.0, %v1135
    %v1137 = vpop.f32.mrb[0].mxu0
    %1138 = vdwg.mxu0
    %v1139 = vadd.f32 %v1061, %v1136
    %v1140 = vxor.u32 %v1139, 2147483648
    %v1141 = vmul.f32 %v1140, 1.442695
    %v1142 = vpow.pop %v1141
    %v1143 = vadd.f32 %v1142, 1.0
    %v1144 = vrcp.pop %v1143
    %v1145 = vmul.f32 1.0, %v1144
    %v1146 = vmul.f32 %v1145, 2.0
    %v1147 = vsub.f32 %v1146, 1.0
    %v1148 = vmul.f32 %v1145, %v879
    %1150 = vrot.lane.b32.xlu0 %v1147, 64
    %v1151 = vpop.permute.xlu0 %1150
    %v1153 = vmul.f32 %v1145, %v1151
    %1155 = vrot.lane.b32.xlu0 %v1153, 32
    %v1156 = vpop.permute.xlu0 %1155
    %v1158 = vadd.f32 %v1148, %v1156
    %v1159 = vtanh.pop %v1158
    %1161 = vrot.lane.b32.xlu0 %v1159, 64
    %v1162 = vpop.permute.xlu0 %1161
    %v1164 = vmul.f32 %v1145, %v1162
    %v1166 = vrot.slane %v993, 6
    %1167 = vrot.lane.b32.xlu0 %v1166, 32
    %v1168 = vpop.permute.xlu0 %1167
    %v1169 = vsel %vm217, %v1168, 0
    %1171 = vmatprep.subr.mxu0 0.0
    %1172 = vmatpush1.msra.mxu0 %v95
    %1173 = vmatprep.subr.mxu0 0.0
    %1174 = vmatpush1.msra.mxu0 %v96
    %1175 = vmatprep.subr.mxu0 0.0
    %1176 = vmatpush1.msra.mxu0 %v97
    %1177 = vmatprep.subr.mxu0 0.0
    %1178 = vmatpush1.msra.mxu0 %v98
    %1179 = vmatprep.subr.mxu0 0.0
    %1180 = vmatpush1.msra.mxu0 0.0
    %1181 = vmatprep.subr.mxu0 0.0
    %1182 = vmatpush1.msra.mxu0 0.0
    %1183 = vmatprep.subr.mxu0 0.0
    %1184 = vmatpush1.msra.mxu0 0.0
    %1185 = vmatprep.subr.mxu0 0.0
    %1186 = vmatpush1.msra.mxu0 0.0
    %1187 = vmatprep.subr.mxu0 0.0
    %1188 = vmatpush1.msra.mxu0 0.0
    %1189 = vmatprep.subr.mxu0 0.0
    %1190 = vmatpush1.msra.mxu0 0.0
    %1191 = vmatprep.subr.mxu0 0.0
    %1192 = vmatpush1.msra.mxu0 0.0
    %1193 = vmatprep.subr.mxu0 0.0
    %1194 = vmatpush1.msra.mxu0 0.0
    %1195 = vmatprep.subr.mxu0 0.0
    %1196 = vmatpush1.msra.mxu0 0.0
    %1197 = vmatprep.subr.mxu0 0.0
    %1198 = vmatpush1.msra.mxu0 0.0
    %1199 = vmatprep.subr.mxu0 0.0
    %1200 = vmatpush1.msra.mxu0 0.0
    %1201 = vmatprep.subr.mxu0 0.0
    %1202 = vmatpush1.msra.mxu0 0.0
    %1203 = vmatprep.subr.mxu0 0.0
    %1204 = vmatpush1.msra.mxu0 0.0
    %1205 = vmatprep.subr.mxu0 0.0
    %1206 = vmatpush1.msra.mxu0 0.0
    %1207 = vmatprep.subr.mxu0 0.0
    %1208 = vmatpush1.msra.mxu0 0.0
    %1209 = vmatprep.subr.mxu0 0.0
    %1210 = vmatpush1.msra.mxu0 0.0
    %1211 = vmatprep.subr.mxu0 0.0
    %1212 = vmatpush1.msra.mxu0 0.0
    %1213 = vmatprep.subr.mxu0 0.0
    %1214 = vmatpush1.msra.mxu0 0.0
    %1215 = vmatprep.subr.mxu0 0.0
    %1216 = vmatpush1.msra.mxu0 0.0
    %1217 = vmatprep.subr.mxu0 0.0
    %1218 = vmatpush1.msra.mxu0 0.0
    %1219 = vmatprep.subr.mxu0 0.0
    %1220 = vmatpush1.msra.mxu0 0.0
    %1221 = vmatprep.subr.mxu0 0.0
    %1222 = vmatpush1.msra.mxu0 0.0
    %1223 = vmatprep.subr.mxu0 0.0
    %1224 = vmatpush1.msra.mxu0 0.0
    %1225 = vmatprep.subr.mxu0 0.0
    %1226 = vmatpush1.msra.mxu0 0.0
    %1227 = vmatprep.subr.mxu0 0.0
    %1228 = vmatpush1.msra.mxu0 0.0
    %1229 = vmatprep.subr.mxu0 0.0
    %1230 = vmatpush1.msra.mxu0 0.0
    %1231 = vmatprep.subr.mxu0 0.0
    %1232 = vmatpush1.msra.mxu0 0.0
    %1233 = vmatprep.subr.mxu0 0.0
    %1234 = vmatpush1.msra.mxu0 0.0
    %1235 = vmatprep.mubr.f32.mxu0 0.0
    %1236 = vmatmul.mubr.f32.gmra.mrb[0].mxu0 %v1169
    %v1237 = vpop.f32.mrb[0].mxu0
    %v1238 = vadd.f32 0.0, %v1237
    %v1239 = vpop.f32.mrb[0].mxu0
    %1240 = vdwg.mxu0
    %v1241 = vadd.f32 %v208, %v1238
    %v1242 = vxor.u32 %v1241, 2147483648
    %v1243 = vmul.f32 %v1242, 1.442695
    %v1244 = vpow.pop %v1243
    %v1245 = vadd.f32 %v1244, 1.0
    %v1246 = vrcp.pop %v1245
    %v1247 = vmul.f32 1.0, %v1246
    %v1248 = vmul.f32 %v1247, 2.0
    %v1249 = vsub.f32 %v1248, 1.0
    %v1251 = vrot.slane %v987, 6
    %v1253 = vmul.f32 %v1247, %v1251
    %1255 = vrot.lane.b32.xlu0 %v1249, 64
    %v1256 = vpop.permute.xlu0 %1255
    %v1258 = vmul.f32 %v1247, %v1256
    %1260 = vrot.lane.b32.xlu0 %v1258, 32
    %v1261 = vpop.permute.xlu0 %1260
    %v1263 = vadd.f32 %v1253, %v1261
    %v1264 = vtanh.pop %v1263
    %1266 = vrot.lane.b32.xlu0 %v1264, 64
    %v1267 = vpop.permute.xlu0 %1266
    %v1269 = vmul.f32 %v1247, %v1267
    %1270 = vmatprep.subr.mxu0 0.0
    %1271 = vmatpush1.msra.mxu0 %v99
    %1272 = vmatprep.subr.mxu0 0.0
    %1273 = vmatpush1.msra.mxu0 %v100
    %1274 = vmatprep.subr.mxu0 0.0
    %1275 = vmatpush1.msra.mxu0 %v101
    %1276 = vmatprep.subr.mxu0 0.0
    %1277 = vmatpush1.msra.mxu0 %v102
    %1278 = vmatprep.subr.mxu0 0.0
    %1279 = vmatpush1.msra.mxu0 0.0
    %1280 = vmatprep.subr.mxu0 0.0
    %1281 = vmatpush1.msra.mxu0 0.0
    %1282 = vmatprep.subr.mxu0 0.0
    %1283 = vmatpush1.msra.mxu0 0.0
    %1284 = vmatprep.subr.mxu0 0.0
    %1285 = vmatpush1.msra.mxu0 0.0
    %1286 = vmatprep.subr.mxu0 0.0
    %1287 = vmatpush1.msra.mxu0 0.0
    %1288 = vmatprep.subr.mxu0 0.0
    %1289 = vmatpush1.msra.mxu0 0.0
    %1290 = vmatprep.subr.mxu0 0.0
    %1291 = vmatpush1.msra.mxu0 0.0
    %1292 = vmatprep.subr.mxu0 0.0
    %1293 = vmatpush1.msra.mxu0 0.0
    %1294 = vmatprep.subr.mxu0 0.0
    %1295 = vmatpush1.msra.mxu0 0.0
    %1296 = vmatprep.subr.mxu0 0.0
    %1297 = vmatpush1.msra.mxu0 0.0
    %1298 = vmatprep.subr.mxu0 0.0
    %1299 = vmatpush1.msra.mxu0 0.0
    %1300 = vmatprep.subr.mxu0 0.0
    %1301 = vmatpush1.msra.mxu0 0.0
    %1302 = vmatprep.subr.mxu0 0.0
    %1303 = vmatpush1.msra.mxu0 0.0
    %1304 = vmatprep.subr.mxu0 0.0
    %1305 = vmatpush1.msra.mxu0 0.0
    %1306 = vmatprep.subr.mxu0 0.0
    %1307 = vmatpush1.msra.mxu0 0.0
    %1308 = vmatprep.subr.mxu0 0.0
    %1309 = vmatpush1.msra.mxu0 0.0
    %1310 = vmatprep.subr.mxu0 0.0
    %1311 = vmatpush1.msra.mxu0 0.0
    %1312 = vmatprep.subr.mxu0 0.0
    %1313 = vmatpush1.msra.mxu0 0.0
    %1314 = vmatprep.subr.mxu0 0.0
    %1315 = vmatpush1.msra.mxu0 0.0
    %1316 = vmatprep.subr.mxu0 0.0
    %1317 = vmatpush1.msra.mxu0 0.0
    %1318 = vmatprep.subr.mxu0 0.0
    %1319 = vmatpush1.msra.mxu0 0.0
    %1320 = vmatprep.subr.mxu0 0.0
    %1321 = vmatpush1.msra.mxu0 0.0
    %1322 = vmatprep.subr.mxu0 0.0
    %1323 = vmatpush1.msra.mxu0 0.0
    %1324 = vmatprep.subr.mxu0 0.0
    %1325 = vmatpush1.msra.mxu0 0.0
    %1326 = vmatprep.subr.mxu0 0.0
    %1327 = vmatpush1.msra.mxu0 0.0
    %1328 = vmatprep.subr.mxu0 0.0
    %1329 = vmatpush1.msra.mxu0 0.0
    %1330 = vmatprep.subr.mxu0 0.0
    %1331 = vmatpush1.msra.mxu0 0.0
    %1332 = vmatprep.subr.mxu0 0.0
    %1333 = vmatpush1.msra.mxu0 0.0
    %1334 = vmatprep.mubr.f32.mxu0 0.0
    %1335 = vmatmul.mubr.f32.gmra.mrb[0].mxu0 %v1169
    %v1336 = vpop.f32.mrb[0].mxu0
    %v1337 = vadd.f32 %v432, %v1336
    %v1338 = vpop.f32.mrb[0].mxu0
    %1339 = vdwg.mxu0
    %1341 = vrot.lane.b32.xlu0 %v1164, 32
    %v1342 = vpop.permute.xlu0 %1341
    %v1343 = vsel %vm217, %v1342, 0
    %1345 = vmatprep.subr.mxu0 0.0
    %1346 = vmatpush1.msra.mxu0 %v103
    %1347 = vmatprep.subr.mxu0 0.0
    %1348 = vmatpush1.msra.mxu0 %v104
    %1349 = vmatprep.subr.mxu0 0.0
    %1350 = vmatpush1.msra.mxu0 %v105
    %1351 = vmatprep.subr.mxu0 0.0
    %1352 = vmatpush1.msra.mxu0 %v106
    %1353 = vmatprep.subr.mxu0 0.0
    %1354 = vmatpush1.msra.mxu0 0.0
    %1355 = vmatprep.subr.mxu0 0.0
    %1356 = vmatpush1.msra.mxu0 0.0
    %1357 = vmatprep.subr.mxu0 0.0
    %1358 = vmatpush1.msra.mxu0 0.0
    %1359 = vmatprep.subr.mxu0 0.0
    %1360 = vmatpush1.msra.mxu0 0.0
    %1361 = vmatprep.subr.mxu0 0.0
    %1362 = vmatpush1.msra.mxu0 0.0
    %1363 = vmatprep.subr.mxu0 0.0
    %1364 = vmatpush1.msra.mxu0 0.0
    %1365 = vmatprep.subr.mxu0 0.0
    %1366 = vmatpush1.msra.mxu0 0.0
    %1367 = vmatprep.subr.mxu0 0.0
    %1368 = vmatpush1.msra.mxu0 0.0
    %1369 = vmatprep.subr.mxu0 0.0
    %1370 = vmatpush1.msra.mxu0 0.0
    %1371 = vmatprep.subr.mxu0 0.0
    %1372 = vmatpush1.msra.mxu0 0.0
    %1373 = vmatprep.subr.mxu0 0.0
    %1374 = vmatpush1.msra.mxu0 0.0
    %1375 = vmatprep.subr.mxu0 0.0
    %1376 = vmatpush1.msra.mxu0 0.0
    %1377 = vmatprep.subr.mxu0 0.0
    %1378 = vmatpush1.msra.mxu0 0.0
    %1379 = vmatprep.subr.mxu0 0.0
    %1380 = vmatpush1.msra.mxu0 0.0
    %1381 = vmatprep.subr.mxu0 0.0
    %1382 = vmatpush1.msra.mxu0 0.0
    %1383 = vmatprep.subr.mxu0 0.0
    %1384 = vmatpush1.msra.mxu0 0.0
    %1385 = vmatprep.subr.mxu0 0.0
    %1386 = vmatpush1.msra.mxu0 0.0
    %1387 = vmatprep.subr.mxu0 0.0
    %1388 = vmatpush1.msra.mxu0 0.0
    %1389 = vmatprep.subr.mxu0 0.0
    %1390 = vmatpush1.msra.mxu0 0.0
    %1391 = vmatprep.subr.mxu0 0.0
    %1392 = vmatpush1.msra.mxu0 0.0
    %1393 = vmatprep.subr.mxu0 0.0
    %1394 = vmatpush1.msra.mxu0 0.0
    %1395 = vmatprep.subr.mxu0 0.0
    %1396 = vmatpush1.msra.mxu0 0.0
    %1397 = vmatprep.subr.mxu0 0.0
    %1398 = vmatpush1.msra.mxu0 0.0
    %1399 = vmatprep.subr.mxu0 0.0
    %1400 = vmatpush1.msra.mxu0 0.0
    %1401 = vmatprep.subr.mxu0 0.0
    %1402 = vmatpush1.msra.mxu0 0.0
    %1403 = vmatprep.subr.mxu0 0.0
    %1404 = vmatpush1.msra.mxu0 0.0
    %1405 = vmatprep.subr.mxu0 0.0
    %1406 = vmatpush1.msra.mxu0 0.0
    %1407 = vmatprep.subr.mxu0 0.0
    %1408 = vmatpush1.msra.mxu0 0.0
    %1409 = vmatprep.mubr.f32.mxu0 0.0
    %1410 = vmatmul.mubr.f32.gmra.mrb[0].mxu0 %v1343
    %v1411 = vpop.f32.mrb[0].mxu0
    %v1412 = vadd.f32 0.0, %v1411
    %v1413 = vpop.f32.mrb[0].mxu0
    %1414 = vdwg.mxu0
    %v1415 = vadd.f32 %v1337, %v1412
    %v1416 = vxor.u32 %v1415, 2147483648
    %v1417 = vmul.f32 %v1416, 1.442695
    %v1418 = vpow.pop %v1417
    %v1419 = vadd.f32 %v1418, 1.0
    %v1420 = vrcp.pop %v1419
    %v1421 = vmul.f32 1.0, %v1420
    %v1422 = vmul.f32 %v1421, 2.0
    %v1423 = vsub.f32 %v1422, 1.0
    %v1424 = vmul.f32 %v1421, %v1158
    %1426 = vrot.lane.b32.xlu0 %v1423, 64
    %v1427 = vpop.permute.xlu0 %1426
    %v1429 = vmul.f32 %v1421, %v1427
    %1431 = vrot.lane.b32.xlu0 %v1429, 32
    %v1432 = vpop.permute.xlu0 %1431
    %v1434 = vadd.f32 %v1424, %v1432
    %v1435 = vtanh.pop %v1434
    %1437 = vrot.lane.b32.xlu0 %v1435, 64
    %v1438 = vpop.permute.xlu0 %1437
    %v1440 = vmul.f32 %v1421, %v1438
    %1442 = vrot.lane.b32.xlu0 %v1269, 32
    %v1443 = vpop.permute.xlu0 %1442
    %v1444 = vsel %vm217, %v1443, 0
    %1446 = vmatprep.subr.mxu0 0.0
    %1447 = vmatpush1.msra.mxu0 %v95
    %1448 = vmatprep.subr.mxu0 0.0
    %1449 = vmatpush1.msra.mxu0 %v96
    %1450 = vmatprep.subr.mxu0 0.0
    %1451 = vmatpush1.msra.mxu0 %v97
    %1452 = vmatprep.subr.mxu0 0.0
    %1453 = vmatpush1.msra.mxu0 %v98
    %1454 = vmatprep.subr.mxu0 0.0
    %1455 = vmatpush1.msra.mxu0 0.0
    %1456 = vmatprep.subr.mxu0 0.0
    %1457 = vmatpush1.msra.mxu0 0.0
    %1458 = vmatprep.subr.mxu0 0.0
    %1459 = vmatpush1.msra.mxu0 0.0
    %1460 = vmatprep.subr.mxu0 0.0
    %1461 = vmatpush1.msra.mxu0 0.0
    %1462 = vmatprep.subr.mxu0 0.0
    %1463 = vmatpush1.msra.mxu0 0.0
    %1464 = vmatprep.subr.mxu0 0.0
    %1465 = vmatpush1.msra.mxu0 0.0
    %1466 = vmatprep.subr.mxu0 0.0
    %1467 = vmatpush1.msra.mxu0 0.0
    %1468 = vmatprep.subr.mxu0 0.0
    %1469 = vmatpush1.msra.mxu0 0.0
    %1470 = vmatprep.subr.mxu0 0.0
    %1471 = vmatpush1.msra.mxu0 0.0
    %1472 = vmatprep.subr.mxu0 0.0
    %1473 = vmatpush1.msra.mxu0 0.0
    %1474 = vmatprep.subr.mxu0 0.0
    %1475 = vmatpush1.msra.mxu0 0.0
    %1476 = vmatprep.subr.mxu0 0.0
    %1477 = vmatpush1.msra.mxu0 0.0
    %1478 = vmatprep.subr.mxu0 0.0
    %1479 = vmatpush1.msra.mxu0 0.0
    %1480 = vmatprep.subr.mxu0 0.0
    %1481 = vmatpush1.msra.mxu0 0.0
    %1482 = vmatprep.subr.mxu0 0.0
    %1483 = vmatpush1.msra.mxu0 0.0
    %1484 = vmatprep.subr.mxu0 0.0
    %1485 = vmatpush1.msra.mxu0 0.0
    %1486 = vmatprep.subr.mxu0 0.0
    %1487 = vmatpush1.msra.mxu0 0.0
    %1488 = vmatprep.subr.mxu0 0.0
    %1489 = vmatpush1.msra.mxu0 0.0
    %1490 = vmatprep.subr.mxu0 0.0
    %1491 = vmatpush1.msra.mxu0 0.0
    %1492 = vmatprep.subr.mxu0 0.0
    %1493 = vmatpush1.msra.mxu0 0.0
    %1494 = vmatprep.subr.mxu0 0.0
    %1495 = vmatpush1.msra.mxu0 0.0
    %1496 = vmatprep.subr.mxu0 0.0
    %1497 = vmatpush1.msra.mxu0 0.0
    %1498 = vmatprep.subr.mxu0 0.0
    %1499 = vmatpush1.msra.mxu0 0.0
    %1500 = vmatprep.subr.mxu0 0.0
    %1501 = vmatpush1.msra.mxu0 0.0
    %1502 = vmatprep.subr.mxu0 0.0
    %1503 = vmatpush1.msra.mxu0 0.0
    %1504 = vmatprep.subr.mxu0 0.0
    %1505 = vmatpush1.msra.mxu0 0.0
    %1506 = vmatprep.subr.mxu0 0.0
    %1507 = vmatpush1.msra.mxu0 0.0
    %1508 = vmatprep.subr.mxu0 0.0
    %1509 = vmatpush1.msra.mxu0 0.0
    %1510 = vmatprep.mubr.f32.mxu0 0.0
    %1511 = vmatmul.mubr.f32.gmra.mrb[0].mxu0 %v1444
    %v1512 = vpop.f32.mrb[0].mxu0
    %v1513 = vadd.f32 0.0, %v1512
    %v1514 = vpop.f32.mrb[0].mxu0
    %1515 = vdwg.mxu0
    %v1517 = vrot.slane %v1513, 6
    %v1519 = vadd.f32 %v208, %v1517
    %v1520 = vxor.u32 %v1519, 2147483648
    %v1521 = vmul.f32 %v1520, 1.442695
    %v1522 = vpow.pop %v1521
    %v1523 = vadd.f32 %v1522, 1.0
    %v1524 = vrcp.pop %v1523
    %v1525 = vmul.f32 1.0, %v1524
    %v1526 = vmul.f32 %v1525, 2.0
    %v1527 = vsub.f32 %v1526, 1.0
    %v1529 = vrot.slane %v1263, 6
    %v1531 = vmul.f32 %v1525, %v1529
    %1533 = vrot.lane.b32.xlu0 %v1527, 64
    %v1534 = vpop.permute.xlu0 %1533
    %v1536 = vmul.f32 %v1525, %v1534
    %1538 = vrot.lane.b32.xlu0 %v1536, 32
    %v1539 = vpop.permute.xlu0 %1538
    %v1541 = vadd.f32 %v1531, %v1539
    %v1542 = vtanh.pop %v1541
    %1544 = vrot.lane.b32.xlu0 %v1542, 64
    %v1545 = vpop.permute.xlu0 %1544
    %v1547 = vmul.f32 %v1525, %v1545
    %1548 = vmatprep.subr.mxu0 0.0
    %1549 = vmatpush1.msra.mxu0 %v99
    %1550 = vmatprep.subr.mxu0 0.0
    %1551 = vmatpush1.msra.mxu0 %v100
    %1552 = vmatprep.subr.mxu0 0.0
    %1553 = vmatpush1.msra.mxu0 %v101
    %1554 = vmatprep.subr.mxu0 0.0
    %1555 = vmatpush1.msra.mxu0 %v102
    %1556 = vmatprep.subr.mxu0 0.0
    %1557 = vmatpush1.msra.mxu0 0.0
    %1558 = vmatprep.subr.mxu0 0.0
    %1559 = vmatpush1.msra.mxu0 0.0
    %1560 = vmatprep.subr.mxu0 0.0
    %1561 = vmatpush1.msra.mxu0 0.0
    %1562 = vmatprep.subr.mxu0 0.0
    %1563 = vmatpush1.msra.mxu0 0.0
    %1564 = vmatprep.subr.mxu0 0.0
    %1565 = vmatpush1.msra.mxu0 0.0
    %1566 = vmatprep.subr.mxu0 0.0
    %1567 = vmatpush1.msra.mxu0 0.0
    %1568 = vmatprep.subr.mxu0 0.0
    %1569 = vmatpush1.msra.mxu0 0.0
    %1570 = vmatprep.subr.mxu0 0.0
    %1571 = vmatpush1.msra.mxu0 0.0
    %1572 = vmatprep.subr.mxu0 0.0
    %1573 = vmatpush1.msra.mxu0 0.0
    %1574 = vmatprep.subr.mxu0 0.0
    %1575 = vmatpush1.msra.mxu0 0.0
    %1576 = vmatprep.subr.mxu0 0.0
    %1577 = vmatpush1.msra.mxu0 0.0
    %1578 = vmatprep.subr.mxu0 0.0
    %1579 = vmatpush1.msra.mxu0 0.0
    %1580 = vmatprep.subr.mxu0 0.0
    %1581 = vmatpush1.msra.mxu0 0.0
    %1582 = vmatprep.subr.mxu0 0.0
    %1583 = vmatpush1.msra.mxu0 0.0
    %1584 = vmatprep.subr.mxu0 0.0
    %1585 = vmatpush1.msra.mxu0 0.0
    %1586 = vmatprep.subr.mxu0 0.0
    %1587 = vmatpush1.msra.mxu0 0.0
    %1588 = vmatprep.subr.mxu0 0.0
    %1589 = vmatpush1.msra.mxu0 0.0
    %1590 = vmatprep.subr.mxu0 0.0
    %1591 = vmatpush1.msra.mxu0 0.0
    %1592 = vmatprep.subr.mxu0 0.0
    %1593 = vmatpush1.msra.mxu0 0.0
    %1594 = vmatprep.subr.mxu0 0.0
    %1595 = vmatpush1.msra.mxu0 0.0
    %1596 = vmatprep.subr.mxu0 0.0
    %1597 = vmatpush1.msra.mxu0 0.0
    %1598 = vmatprep.subr.mxu0 0.0
    %1599 = vmatpush1.msra.mxu0 0.0
    %1600 = vmatprep.subr.mxu0 0.0
    %1601 = vmatpush1.msra.mxu0 0.0
    %1602 = vmatprep.subr.mxu0 0.0
    %1603 = vmatpush1.msra.mxu0 0.0
    %1604 = vmatprep.subr.mxu0 0.0
    %1605 = vmatpush1.msra.mxu0 0.0
    %1606 = vmatprep.subr.mxu0 0.0
    %1607 = vmatpush1.msra.mxu0 0.0
    %1608 = vmatprep.subr.mxu0 0.0
    %1609 = vmatpush1.msra.mxu0 0.0
    %1610 = vmatprep.subr.mxu0 0.0
    %1611 = vmatpush1.msra.mxu0 0.0
    %1612 = vmatprep.mubr.f32.mxu0 0.0
    %1613 = vmatmul.mubr.f32.gmra.mrb[0].mxu0 %v1444
    %v1614 = vpop.f32.mrb[0].mxu0
    %v1615 = vadd.f32 %v432, %v1614
    %v1616 = vpop.f32.mrb[0].mxu0
    %1617 = vdwg.mxu0
    %1619 = vrot.lane.b32.xlu0 %v1440, 32
    %v1620 = vpop.permute.xlu0 %1619
    %v1621 = vsel %vm217, %v1620, 0
    %1623 = vmatprep.subr.mxu0 0.0
    %1624 = vmatpush1.msra.mxu0 %v103
    %1625 = vmatprep.subr.mxu0 0.0
    %1626 = vmatpush1.msra.mxu0 %v104
    %1627 = vmatprep.subr.mxu0 0.0
    %1628 = vmatpush1.msra.mxu0 %v105
    %1629 = vmatprep.subr.mxu0 0.0
    %1630 = vmatpush1.msra.mxu0 %v106
    %1631 = vmatprep.subr.mxu0 0.0
    %1632 = vmatpush1.msra.mxu0 0.0
    %1633 = vmatprep.subr.mxu0 0.0
    %1634 = vmatpush1.msra.mxu0 0.0
    %1635 = vmatprep.subr.mxu0 0.0
    %1636 = vmatpush1.msra.mxu0 0.0
    %1637 = vmatprep.subr.mxu0 0.0
    %1638 = vmatpush1.msra.mxu0 0.0
    %1639 = vmatprep.subr.mxu0 0.0
    %1640 = vmatpush1.msra.mxu0 0.0
    %1641 = vmatprep.subr.mxu0 0.0
    %1642 = vmatpush1.msra.mxu0 0.0
    %1643 = vmatprep.subr.mxu0 0.0
    %1644 = vmatpush1.msra.mxu0 0.0
    %1645 = vmatprep.subr.mxu0 0.0
    %1646 = vmatpush1.msra.mxu0 0.0
    %1647 = vmatprep.subr.mxu0 0.0
    %1648 = vmatpush1.msra.mxu0 0.0
    %1649 = vmatprep.subr.mxu0 0.0
    %1650 = vmatpush1.msra.mxu0 0.0
    %1651 = vmatprep.subr.mxu0 0.0
    %1652 = vmatpush1.msra.mxu0 0.0
    %1653 = vmatprep.subr.mxu0 0.0
    %1654 = vmatpush1.msra.mxu0 0.0
    %1655 = vmatprep.subr.mxu0 0.0
    %1656 = vmatpush1.msra.mxu0 0.0
    %1657 = vmatprep.subr.mxu0 0.0
    %1658 = vmatpush1.msra.mxu0 0.0
    %1659 = vmatprep.subr.mxu0 0.0
    %1660 = vmatpush1.msra.mxu0 0.0
    %1661 = vmatprep.subr.mxu0 0.0
    %1662 = vmatpush1.msra.mxu0 0.0
    %1663 = vmatprep.subr.mxu0 0.0
    %1664 = vmatpush1.msra.mxu0 0.0
    %1665 = vmatprep.subr.mxu0 0.0
    %1666 = vmatpush1.msra.mxu0 0.0
    %1667 = vmatprep.subr.mxu0 0.0
    %1668 = vmatpush1.msra.mxu0 0.0
    %1669 = vmatprep.subr.mxu0 0.0
    %1670 = vmatpush1.msra.mxu0 0.0
    %1671 = vmatprep.subr.mxu0 0.0
    %1672 = vmatpush1.msra.mxu0 0.0
    %1673 = vmatprep.subr.mxu0 0.0
    %1674 = vmatpush1.msra.mxu0 0.0
    %1675 = vmatprep.subr.mxu0 0.0
    %1676 = vmatpush1.msra.mxu0 0.0
    %1677 = vmatprep.subr.mxu0 0.0
    %1678 = vmatpush1.msra.mxu0 0.0
    %1679 = vmatprep.subr.mxu0 0.0
    %1680 = vmatpush1.msra.mxu0 0.0
    %1681 = vmatprep.subr.mxu0 0.0
    %1682 = vmatpush1.msra.mxu0 0.0
    %1683 = vmatprep.subr.mxu0 0.0
    %1684 = vmatpush1.msra.mxu0 0.0
    %1685 = vmatprep.subr.mxu0 0.0
    %1686 = vmatpush1.msra.mxu0 0.0
    %1687 = vmatprep.mubr.f32.mxu0 0.0
    %1688 = vmatmul.mubr.f32.gmra.mrb[0].mxu0 %v1621
    %v1689 = vpop.f32.mrb[0].mxu0
    %v1690 = vadd.f32 0.0, %v1689
    %v1691 = vpop.f32.mrb[0].mxu0
    %1692 = vdwg.mxu0
    %v1693 = vadd.f32 %v1615, %v1690
    %v1694 = vxor.u32 %v1693, 2147483648
    %v1695 = vmul.f32 %v1694, 1.442695
    %v1696 = vpow.pop %v1695
    %v1697 = vadd.f32 %v1696, 1.0
    %v1698 = vrcp.pop %v1697
    %v1699 = vmul.f32 1.0, %v1698
    %v1700 = vmul.f32 %v1699, 2.0
    %v1701 = vsub.f32 %v1700, 1.0
    %v1702 = vmul.f32 %v1699, %v1434
    %1704 = vrot.lane.b32.xlu0 %v1701, 64
    %v1705 = vpop.permute.xlu0 %1704
    %v1707 = vmul.f32 %v1699, %v1705
    %1709 = vrot.lane.b32.xlu0 %v1707, 32
    %v1710 = vpop.permute.xlu0 %1709
    %v1712 = vadd.f32 %v1702, %v1710
    %v1713 = vtanh.pop %v1712
    %1715 = vrot.lane.b32.xlu0 %v1713, 64
    %v1716 = vpop.permute.xlu0 %1715
    %v1718 = vmul.f32 %v1699, %v1716
    %v1720 = vrot.slane %v1547, 2
    %1721 = vrot.lane.b32.xlu0 %v1720, 32
    %v1722 = vpop.permute.xlu0 %1721
    %v1723 = vsel %vm217, %v1722, 0
    %1725 = vmatprep.subr.mxu0 0.0
    %1726 = vmatpush1.msra.mxu0 %v95
    %1727 = vmatprep.subr.mxu0 0.0
    %1728 = vmatpush1.msra.mxu0 %v96
    %1729 = vmatprep.subr.mxu0 0.0
    %1730 = vmatpush1.msra.mxu0 %v97
    %1731 = vmatprep.subr.mxu0 0.0
    %1732 = vmatpush1.msra.mxu0 %v98
    %1733 = vmatprep.subr.mxu0 0.0
    %1734 = vmatpush1.msra.mxu0 0.0
    %1735 = vmatprep.subr.mxu0 0.0
    %1736 = vmatpush1.msra.mxu0 0.0
    %1737 = vmatprep.subr.mxu0 0.0
    %1738 = vmatpush1.msra.mxu0 0.0
    %1739 = vmatprep.subr.mxu0 0.0
    %1740 = vmatpush1.msra.mxu0 0.0
    %1741 = vmatprep.subr.mxu0 0.0
    %1742 = vmatpush1.msra.mxu0 0.0
    %1743 = vmatprep.subr.mxu0 0.0
    %1744 = vmatpush1.msra.mxu0 0.0
    %1745 = vmatprep.subr.mxu0 0.0
    %1746 = vmatpush1.msra.mxu0 0.0
    %1747 = vmatprep.subr.mxu0 0.0
    %1748 = vmatpush1.msra.mxu0 0.0
    %1749 = vmatprep.subr.mxu0 0.0
    %1750 = vmatpush1.msra.mxu0 0.0
    %1751 = vmatprep.subr.mxu0 0.0
    %1752 = vmatpush1.msra.mxu0 0.0
    %1753 = vmatprep.subr.mxu0 0.0
    %1754 = vmatpush1.msra.mxu0 0.0
    %1755 = vmatprep.subr.mxu0 0.0
    %1756 = vmatpush1.msra.mxu0 0.0
    %1757 = vmatprep.subr.mxu0 0.0
    %1758 = vmatpush1.msra.mxu0 0.0
    %1759 = vmatprep.subr.mxu0 0.0
    %1760 = vmatpush1.msra.mxu0 0.0
    %1761 = vmatprep.subr.mxu0 0.0
    %1762 = vmatpush1.msra.mxu0 0.0
    %1763 = vmatprep.subr.mxu0 0.0
    %1764 = vmatpush1.msra.mxu0 0.0
    %1765 = vmatprep.subr.mxu0 0.0
    %1766 = vmatpush1.msra.mxu0 0.0
    %1767 = vmatprep.subr.mxu0 0.0
    %1768 = vmatpush1.msra.mxu0 0.0
    %1769 = vmatprep.subr.mxu0 0.0
    %1770 = vmatpush1.msra.mxu0 0.0
    %1771 = vmatprep.subr.mxu0 0.0
    %1772 = vmatpush1.msra.mxu0 0.0
    %1773 = vmatprep.subr.mxu0 0.0
    %1774 = vmatpush1.msra.mxu0 0.0
    %1775 = vmatprep.subr.mxu0 0.0
    %1776 = vmatpush1.msra.mxu0 0.0
    %1777 = vmatprep.subr.mxu0 0.0
    %1778 = vmatpush1.msra.mxu0 0.0
    %1779 = vmatprep.subr.mxu0 0.0
    %1780 = vmatpush1.msra.mxu0 0.0
    %1781 = vmatprep.subr.mxu0 0.0
    %1782 = vmatpush1.msra.mxu0 0.0
    %1783 = vmatprep.subr.mxu0 0.0
    %1784 = vmatpush1.msra.mxu0 0.0
    %1785 = vmatprep.subr.mxu0 0.0
    %1786 = vmatpush1.msra.mxu0 0.0
    %1787 = vmatprep.subr.mxu0 0.0
    %1788 = vmatpush1.msra.mxu0 0.0
    %1789 = vmatprep.mubr.f32.mxu0 0.0
    %1790 = vmatmul.mubr.f32.gmra.mrb[0].mxu0 %v1723
    %v1791 = vpop.f32.mrb[0].mxu0
    %v1792 = vadd.f32 0.0, %v1791
    %v1793 = vpop.f32.mrb[0].mxu0
    %1794 = vdwg.mxu0
    %v1796 = vrot.slane %v1792, 4
    %v1798 = vadd.f32 %v208, %v1796
    %v1799 = vxor.u32 %v1798, 2147483648
    %v1800 = vmul.f32 %v1799, 1.442695
    %v1801 = vpow.pop %v1800
    %v1802 = vadd.f32 %v1801, 1.0
    %v1803 = vrcp.pop %v1802
    %v1804 = vmul.f32 1.0, %v1803
    %v1805 = vmul.f32 %v1804, 2.0
    %v1806 = vsub.f32 %v1805, 1.0
    %v1808 = vrot.slane %v1541, 6
    %v1810 = vmul.f32 %v1804, %v1808
    %1812 = vrot.lane.b32.xlu0 %v1806, 64
    %v1813 = vpop.permute.xlu0 %1812
    %v1815 = vmul.f32 %v1804, %v1813
    %1817 = vrot.lane.b32.xlu0 %v1815, 32
    %v1818 = vpop.permute.xlu0 %1817
    %v1820 = vadd.f32 %v1810, %v1818
    %v1821 = vtanh.pop %v1820
    %1823 = vrot.lane.b32.xlu0 %v1821, 64
    %v1824 = vpop.permute.xlu0 %1823
    %v1826 = vmul.f32 %v1804, %v1824
    %1827 = vmatprep.subr.mxu0 0.0
    %1828 = vmatpush1.msra.mxu0 %v99
    %1829 = vmatprep.subr.mxu0 0.0
    %1830 = vmatpush1.msra.mxu0 %v100
    %1831 = vmatprep.subr.mxu0 0.0
    %1832 = vmatpush1.msra.mxu0 %v101
    %1833 = vmatprep.subr.mxu0 0.0
    %1834 = vmatpush1.msra.mxu0 %v102
    %1835 = vmatprep.subr.mxu0 0.0
    %1836 = vmatpush1.msra.mxu0 0.0
    %1837 = vmatprep.subr.mxu0 0.0
    %1838 = vmatpush1.msra.mxu0 0.0
    %1839 = vmatprep.subr.mxu0 0.0
    %1840 = vmatpush1.msra.mxu0 0.0
    %1841 = vmatprep.subr.mxu0 0.0
    %1842 = vmatpush1.msra.mxu0 0.0
    %1843 = vmatprep.subr.mxu0 0.0
    %1844 = vmatpush1.msra.mxu0 0.0
    %1845 = vmatprep.subr.mxu0 0.0
    %1846 = vmatpush1.msra.mxu0 0.0
    %1847 = vmatprep.subr.mxu0 0.0
    %1848 = vmatpush1.msra.mxu0 0.0
    %1849 = vmatprep.subr.mxu0 0.0
    %1850 = vmatpush1.msra.mxu0 0.0
    %1851 = vmatprep.subr.mxu0 0.0
    %1852 = vmatpush1.msra.mxu0 0.0
    %1853 = vmatprep.subr.mxu0 0.0
    %1854 = vmatpush1.msra.mxu0 0.0
    %1855 = vmatprep.subr.mxu0 0.0
    %1856 = vmatpush1.msra.mxu0 0.0
    %1857 = vmatprep.subr.mxu0 0.0
    %1858 = vmatpush1.msra.mxu0 0.0
    %1859 = vmatprep.subr.mxu0 0.0
    %1860 = vmatpush1.msra.mxu0 0.0
    %1861 = vmatprep.subr.mxu0 0.0
    %1862 = vmatpush1.msra.mxu0 0.0
    %1863 = vmatprep.subr.mxu0 0.0
    %1864 = vmatpush1.msra.mxu0 0.0
    %1865 = vmatprep.subr.mxu0 0.0
    %1866 = vmatpush1.msra.mxu0 0.0
    %1867 = vmatprep.subr.mxu0 0.0
    %1868 = vmatpush1.msra.mxu0 0.0
    %1869 = vmatprep.subr.mxu0 0.0
    %1870 = vmatpush1.msra.mxu0 0.0
    %1871 = vmatprep.subr.mxu0 0.0
    %1872 = vmatpush1.msra.mxu0 0.0
    %1873 = vmatprep.subr.mxu0 0.0
    %1874 = vmatpush1.msra.mxu0 0.0
    %1875 = vmatprep.subr.mxu0 0.0
    %1876 = vmatpush1.msra.mxu0 0.0
    %1877 = vmatprep.subr.mxu0 0.0
    %1878 = vmatpush1.msra.mxu0 0.0
    %1879 = vmatprep.subr.mxu0 0.0
    %1880 = vmatpush1.msra.mxu0 0.0
    %1881 = vmatprep.subr.mxu0 0.0
    %1882 = vmatpush1.msra.mxu0 0.0
    %1883 = vmatprep.subr.mxu0 0.0
    %1884 = vmatpush1.msra.mxu0 0.0
    %1885 = vmatprep.subr.mxu0 0.0
    %1886 = vmatpush1.msra.mxu0 0.0
    %1887 = vmatprep.subr.mxu0 0.0
    %1888 = vmatpush1.msra.mxu0 0.0
    %1889 = vmatprep.subr.mxu0 0.0
    %1890 = vmatpush1.msra.mxu0 0.0
    %1891 = vmatprep.mubr.f32.mxu0 0.0
    %1892 = vmatmul.mubr.f32.gmra.mrb[0].mxu0 %v1723
    %v1893 = vpop.f32.mrb[0].mxu0
    %v1894 = vadd.f32 %v432, %v1893
    %v1895 = vpop.f32.mrb[0].mxu0
    %1896 = vdwg.mxu0
    %1898 = vrot.lane.b32.xlu0 %v1718, 32
    %v1899 = vpop.permute.xlu0 %1898
    %v1900 = vsel %vm217, %v1899, 0
    %1902 = vmatprep.subr.mxu0 0.0
    %1903 = vmatpush1.msra.mxu0 %v103
    %1904 = vmatprep.subr.mxu0 0.0
    %1905 = vmatpush1.msra.mxu0 %v104
    %1906 = vmatprep.subr.mxu0 0.0
    %1907 = vmatpush1.msra.mxu0 %v105
    %1908 = vmatprep.subr.mxu0 0.0
    %1909 = vmatpush1.msra.mxu0 %v106
    %1910 = vmatprep.subr.mxu0 0.0
    %1911 = vmatpush1.msra.mxu0 0.0
    %1912 = vmatprep.subr.mxu0 0.0
    %1913 = vmatpush1.msra.mxu0 0.0
    %1914 = vmatprep.subr.mxu0 0.0
    %1915 = vmatpush1.msra.mxu0 0.0
    %1916 = vmatprep.subr.mxu0 0.0
    %1917 = vmatpush1.msra.mxu0 0.0
    %1918 = vmatprep.subr.mxu0 0.0
    %1919 = vmatpush1.msra.mxu0 0.0
    %1920 = vmatprep.subr.mxu0 0.0
    %1921 = vmatpush1.msra.mxu0 0.0
    %1922 = vmatprep.subr.mxu0 0.0
    %1923 = vmatpush1.msra.mxu0 0.0
    %1924 = vmatprep.subr.mxu0 0.0
    %1925 = vmatpush1.msra.mxu0 0.0
    %1926 = vmatprep.subr.mxu0 0.0
    %1927 = vmatpush1.msra.mxu0 0.0
    %1928 = vmatprep.subr.mxu0 0.0
    %1929 = vmatpush1.msra.mxu0 0.0
    %1930 = vmatprep.subr.mxu0 0.0
    %1931 = vmatpush1.msra.mxu0 0.0
    %1932 = vmatprep.subr.mxu0 0.0
    %1933 = vmatpush1.msra.mxu0 0.0
    %1934 = vmatprep.subr.mxu0 0.0
    %1935 = vmatpush1.msra.mxu0 0.0
    %1936 = vmatprep.subr.mxu0 0.0
    %1937 = vmatpush1.msra.mxu0 0.0
    %1938 = vmatprep.subr.mxu0 0.0
    %1939 = vmatpush1.msra.mxu0 0.0
    %1940 = vmatprep.subr.mxu0 0.0
    %1941 = vmatpush1.msra.mxu0 0.0
    %1942 = vmatprep.subr.mxu0 0.0
    %1943 = vmatpush1.msra.mxu0 0.0
    %1944 = vmatprep.subr.mxu0 0.0
    %1945 = vmatpush1.msra.mxu0 0.0
    %1946 = vmatprep.subr.mxu0 0.0
    %1947 = vmatpush1.msra.mxu0 0.0
    %1948 = vmatprep.subr.mxu0 0.0
    %1949 = vmatpush1.msra.mxu0 0.0
    %1950 = vmatprep.subr.mxu0 0.0
    %1951 = vmatpush1.msra.mxu0 0.0
    %1952 = vmatprep.subr.mxu0 0.0
    %1953 = vmatpush1.msra.mxu0 0.0
    %1954 = vmatprep.subr.mxu0 0.0
    %1955 = vmatpush1.msra.mxu0 0.0
    %1956 = vmatprep.subr.mxu0 0.0
    %1957 = vmatpush1.msra.mxu0 0.0
    %1958 = vmatprep.subr.mxu0 0.0
    %1959 = vmatpush1.msra.mxu0 0.0
    %1960 = vmatprep.subr.mxu0 0.0
    %1961 = vmatpush1.msra.mxu0 0.0
    %1962 = vmatprep.subr.mxu0 0.0
    %1963 = vmatpush1.msra.mxu0 0.0
    %1964 = vmatprep.subr.mxu0 0.0
    %1965 = vmatpush1.msra.mxu0 0.0
    %1966 = vmatprep.mubr.f32.mxu0 0.0
    %1967 = vmatmul.mubr.f32.gmra.mrb[0].mxu0 %v1900
    %v1968 = vpop.f32.mrb[0].mxu0
    %v1969 = vadd.f32 0.0, %v1968
    %v1970 = vpop.f32.mrb[0].mxu0
    %1971 = vdwg.mxu0
    %v1972 = vadd.f32 %v1894, %v1969
    %v1973 = vxor.u32 %v1972, 2147483648
    %v1974 = vmul.f32 %v1973, 1.442695
    %v1975 = vpow.pop %v1974
    %v1976 = vadd.f32 %v1975, 1.0
    %v1977 = vrcp.pop %v1976
    %v1978 = vmul.f32 1.0, %v1977
    %v1979 = vmul.f32 %v1978, 2.0
    %v1980 = vsub.f32 %v1979, 1.0
    %v1981 = vmul.f32 %v1978, %v1712
    %1983 = vrot.lane.b32.xlu0 %v1980, 64
    %v1984 = vpop.permute.xlu0 %1983
    %v1986 = vmul.f32 %v1978, %v1984
    %1988 = vrot.lane.b32.xlu0 %v1986, 32
    %v1989 = vpop.permute.xlu0 %1988
    %v1991 = vadd.f32 %v1981, %v1989
    %v1992 = vtanh.pop %v1991
    %1994 = vrot.lane.b32.xlu0 %v1992, 64
    %v1995 = vpop.permute.xlu0 %1994
    %v1997 = vmul.f32 %v1978, %v1995
    %v1999 = vrot.slane %v1826, 4
    %2000 = vrot.lane.b32.xlu0 %v1999, 32
    %v2001 = vpop.permute.xlu0 %2000
    %v2002 = vsel %vm217, %v2001, 0
    %2004 = vmatprep.subr.mxu0 0.0
    %2005 = vmatpush1.msra.mxu0 %v95
    %2006 = vmatprep.subr.mxu0 0.0
    %2007 = vmatpush1.msra.mxu0 %v96
    %2008 = vmatprep.subr.mxu0 0.0
    %2009 = vmatpush1.msra.mxu0 %v97
    %2010 = vmatprep.subr.mxu0 0.0
    %2011 = vmatpush1.msra.mxu0 %v98
    %2012 = vmatprep.subr.mxu0 0.0
    %2013 = vmatpush1.msra.mxu0 0.0
    %2014 = vmatprep.subr.mxu0 0.0
    %2015 = vmatpush1.msra.mxu0 0.0
    %2016 = vmatprep.subr.mxu0 0.0
    %2017 = vmatpush1.msra.mxu0 0.0
    %2018 = vmatprep.subr.mxu0 0.0
    %2019 = vmatpush1.msra.mxu0 0.0
    %2020 = vmatprep.subr.mxu0 0.0
    %2021 = vmatpush1.msra.mxu0 0.0
    %2022 = vmatprep.subr.mxu0 0.0
    %2023 = vmatpush1.msra.mxu0 0.0
    %2024 = vmatprep.subr.mxu0 0.0
    %2025 = vmatpush1.msra.mxu0 0.0
    %2026 = vmatprep.subr.mxu0 0.0
    %2027 = vmatpush1.msra.mxu0 0.0
    %2028 = vmatprep.subr.mxu0 0.0
    %2029 = vmatpush1.msra.mxu0 0.0
    %2030 = vmatprep.subr.mxu0 0.0
    %2031 = vmatpush1.msra.mxu0 0.0
    %2032 = vmatprep.subr.mxu0 0.0
    %2033 = vmatpush1.msra.mxu0 0.0
    %2034 = vmatprep.subr.mxu0 0.0
    %2035 = vmatpush1.msra.mxu0 0.0
    %2036 = vmatprep.subr.mxu0 0.0
    %2037 = vmatpush1.msra.mxu0 0.0
    %2038 = vmatprep.subr.mxu0 0.0
    %2039 = vmatpush1.msra.mxu0 0.0
    %2040 = vmatprep.subr.mxu0 0.0
    %2041 = vmatpush1.msra.mxu0 0.0
    %2042 = vmatprep.subr.mxu0 0.0
    %2043 = vmatpush1.msra.mxu0 0.0
    %2044 = vmatprep.subr.mxu0 0.0
    %2045 = vmatpush1.msra.mxu0 0.0
    %2046 = vmatprep.subr.mxu0 0.0
    %2047 = vmatpush1.msra.mxu0 0.0
    %2048 = vmatprep.subr.mxu0 0.0
    %2049 = vmatpush1.msra.mxu0 0.0
    %2050 = vmatprep.subr.mxu0 0.0
    %2051 = vmatpush1.msra.mxu0 0.0
    %2052 = vmatprep.subr.mxu0 0.0
    %2053 = vmatpush1.msra.mxu0 0.0
    %2054 = vmatprep.subr.mxu0 0.0
    %2055 = vmatpush1.msra.mxu0 0.0
    %2056 = vmatprep.subr.mxu0 0.0
    %2057 = vmatpush1.msra.mxu0 0.0
    %2058 = vmatprep.subr.mxu0 0.0
    %2059 = vmatpush1.msra.mxu0 0.0
    %2060 = vmatprep.subr.mxu0 0.0
    %2061 = vmatpush1.msra.mxu0 0.0
    %2062 = vmatprep.subr.mxu0 0.0
    %2063 = vmatpush1.msra.mxu0 0.0
    %2064 = vmatprep.subr.mxu0 0.0
    %2065 = vmatpush1.msra.mxu0 0.0
    %2066 = vmatprep.subr.mxu0 0.0
    %2067 = vmatpush1.msra.mxu0 0.0
    %2068 = vmatprep.mubr.f32.mxu0 0.0
    %2069 = vmatmul.mubr.f32.gmra.mrb[0].mxu0 %v2002
    %v2070 = vpop.f32.mrb[0].mxu0
    %v2071 = vadd.f32 0.0, %v2070
    %v2072 = vpop.f32.mrb[0].mxu0
    %2073 = vdwg.mxu0
    %v2075 = vrot.slane %v2071, 2
    %v2077 = vadd.f32 %v208, %v2075
    %v2078 = vxor.u32 %v2077, 2147483648
    %v2079 = vmul.f32 %v2078, 1.442695
    %v2080 = vpow.pop %v2079
    %v2081 = vadd.f32 %v2080, 1.0
    %v2082 = vrcp.pop %v2081
    %v2083 = vmul.f32 1.0, %v2082
    %v2084 = vmul.f32 %v2083, 2.0
    %v2085 = vsub.f32 %v2084, 1.0
    %v2087 = vrot.slane %v1820, 6
    %v2089 = vmul.f32 %v2083, %v2087
    %2091 = vrot.lane.b32.xlu0 %v2085, 64
    %v2092 = vpop.permute.xlu0 %2091
    %v2094 = vmul.f32 %v2083, %v2092
    %2096 = vrot.lane.b32.xlu0 %v2094, 32
    %v2097 = vpop.permute.xlu0 %2096
    %v2099 = vadd.f32 %v2089, %v2097
    %v2100 = vtanh.pop %v2099
    %2102 = vrot.lane.b32.xlu0 %v2100, 64
    %v2103 = vpop.permute.xlu0 %2102
    %v2105 = vmul.f32 %v2083, %v2103
    %2106 = vmatprep.subr.mxu0 0.0
    %2107 = vmatpush1.msra.mxu0 %v99
    %2108 = vmatprep.subr.mxu0 0.0
    %2109 = vmatpush1.msra.mxu0 %v100
    %2110 = vmatprep.subr.mxu0 0.0
    %2111 = vmatpush1.msra.mxu0 %v101
    %2112 = vmatprep.subr.mxu0 0.0
    %2113 = vmatpush1.msra.mxu0 %v102
    %2114 = vmatprep.subr.mxu0 0.0
    %2115 = vmatpush1.msra.mxu0 0.0
    %2116 = vmatprep.subr.mxu0 0.0
    %2117 = vmatpush1.msra.mxu0 0.0
    %2118 = vmatprep.subr.mxu0 0.0
    %2119 = vmatpush1.msra.mxu0 0.0
    %2120 = vmatprep.subr.mxu0 0.0
    %2121 = vmatpush1.msra.mxu0 0.0
    %2122 = vmatprep.subr.mxu0 0.0
    %2123 = vmatpush1.msra.mxu0 0.0
    %2124 = vmatprep.subr.mxu0 0.0
    %2125 = vmatpush1.msra.mxu0 0.0
    %2126 = vmatprep.subr.mxu0 0.0
    %2127 = vmatpush1.msra.mxu0 0.0
    %2128 = vmatprep.subr.mxu0 0.0
    %2129 = vmatpush1.msra.mxu0 0.0
    %2130 = vmatprep.subr.mxu0 0.0
    %2131 = vmatpush1.msra.mxu0 0.0
    %2132 = vmatprep.subr.mxu0 0.0
    %2133 = vmatpush1.msra.mxu0 0.0
    %2134 = vmatprep.subr.mxu0 0.0
    %2135 = vmatpush1.msra.mxu0 0.0
    %2136 = vmatprep.subr.mxu0 0.0
    %2137 = vmatpush1.msra.mxu0 0.0
    %2138 = vmatprep.subr.mxu0 0.0
    %2139 = vmatpush1.msra.mxu0 0.0
    %2140 = vmatprep.subr.mxu0 0.0
    %2141 = vmatpush1.msra.mxu0 0.0
    %2142 = vmatprep.subr.mxu0 0.0
    %2143 = vmatpush1.msra.mxu0 0.0
    %2144 = vmatprep.subr.mxu0 0.0
    %2145 = vmatpush1.msra.mxu0 0.0
    %2146 = vmatprep.subr.mxu0 0.0
    %2147 = vmatpush1.msra.mxu0 0.0
    %2148 = vmatprep.subr.mxu0 0.0
    %2149 = vmatpush1.msra.mxu0 0.0
    %2150 = vmatprep.subr.mxu0 0.0
    %2151 = vmatpush1.msra.mxu0 0.0
    %2152 = vmatprep.subr.mxu0 0.0
    %2153 = vmatpush1.msra.mxu0 0.0
    %2154 = vmatprep.subr.mxu0 0.0
    %2155 = vmatpush1.msra.mxu0 0.0
    %2156 = vmatprep.subr.mxu0 0.0
    %2157 = vmatpush1.msra.mxu0 0.0
    %2158 = vmatprep.subr.mxu0 0.0
    %2159 = vmatpush1.msra.mxu0 0.0
    %2160 = vmatprep.subr.mxu0 0.0
    %2161 = vmatpush1.msra.mxu0 0.0
    %2162 = vmatprep.subr.mxu0 0.0
    %2163 = vmatpush1.msra.mxu0 0.0
    %2164 = vmatprep.subr.mxu0 0.0
    %2165 = vmatpush1.msra.mxu0 0.0
    %2166 = vmatprep.subr.mxu0 0.0
    %2167 = vmatpush1.msra.mxu0 0.0
    %2168 = vmatprep.subr.mxu0 0.0
    %2169 = vmatpush1.msra.mxu0 0.0
    %2170 = vmatprep.mubr.f32.mxu0 0.0
    %2171 = vmatmul.mubr.f32.gmra.mrb[0].mxu0 %v2002
    %v2172 = vpop.f32.mrb[0].mxu0
    %v2173 = vadd.f32 %v432, %v2172
    %v2174 = vpop.f32.mrb[0].mxu0
    %2175 = vdwg.mxu0
    %2177 = vrot.lane.b32.xlu0 %v1997, 32
    %v2178 = vpop.permute.xlu0 %2177
    %v2179 = vsel %vm217, %v2178, 0
    %2181 = vmatprep.subr.mxu0 0.0
    %2182 = vmatpush1.msra.mxu0 %v103
    %2183 = vmatprep.subr.mxu0 0.0
    %2184 = vmatpush1.msra.mxu0 %v104
    %2185 = vmatprep.subr.mxu0 0.0
    %2186 = vmatpush1.msra.mxu0 %v105
    %2187 = vmatprep.subr.mxu0 0.0
    %2188 = vmatpush1.msra.mxu0 %v106
    %2189 = vmatprep.subr.mxu0 0.0
    %2190 = vmatpush1.msra.mxu0 0.0
    %2191 = vmatprep.subr.mxu0 0.0
    %2192 = vmatpush1.msra.mxu0 0.0
    %2193 = vmatprep.subr.mxu0 0.0
    %2194 = vmatpush1.msra.mxu0 0.0
    %2195 = vmatprep.subr.mxu0 0.0
    %2196 = vmatpush1.msra.mxu0 0.0
    %2197 = vmatprep.subr.mxu0 0.0
    %2198 = vmatpush1.msra.mxu0 0.0
    %2199 = vmatprep.subr.mxu0 0.0
    %2200 = vmatpush1.msra.mxu0 0.0
    %2201 = vmatprep.subr.mxu0 0.0
    %2202 = vmatpush1.msra.mxu0 0.0
    %2203 = vmatprep.subr.mxu0 0.0
    %2204 = vmatpush1.msra.mxu0 0.0
    %2205 = vmatprep.subr.mxu0 0.0
    %2206 = vmatpush1.msra.mxu0 0.0
    %2207 = vmatprep.subr.mxu0 0.0
    %2208 = vmatpush1.msra.mxu0 0.0
    %2209 = vmatprep.subr.mxu0 0.0
    %2210 = vmatpush1.msra.mxu0 0.0
    %2211 = vmatprep.subr.mxu0 0.0
    %2212 = vmatpush1.msra.mxu0 0.0
    %2213 = vmatprep.subr.mxu0 0.0
    %2214 = vmatpush1.msra.mxu0 0.0
    %2215 = vmatprep.subr.mxu0 0.0
    %2216 = vmatpush1.msra.mxu0 0.0
    %2217 = vmatprep.subr.mxu0 0.0
    %2218 = vmatpush1.msra.mxu0 0.0
    %2219 = vmatprep.subr.mxu0 0.0
    %2220 = vmatpush1.msra.mxu0 0.0
    %2221 = vmatprep.subr.mxu0 0.0
    %2222 = vmatpush1.msra.mxu0 0.0
    %2223 = vmatprep.subr.mxu0 0.0
    %2224 = vmatpush1.msra.mxu0 0.0
    %2225 = vmatprep.subr.mxu0 0.0
    %2226 = vmatpush1.msra.mxu0 0.0
    %2227 = vmatprep.subr.mxu0 0.0
    %2228 = vmatpush1.msra.mxu0 0.0
    %2229 = vmatprep.subr.mxu0 0.0
    %2230 = vmatpush1.msra.mxu0 0.0
    %2231 = vmatprep.subr.mxu0 0.0
    %2232 = vmatpush1.msra.mxu0 0.0
    %2233 = vmatprep.subr.mxu0 0.0
    %2234 = vmatpush1.msra.mxu0 0.0
    %2235 = vmatprep.subr.mxu0 0.0
    %2236 = vmatpush1.msra.mxu0 0.0
    %2237 = vmatprep.subr.mxu0 0.0
    %2238 = vmatpush1.msra.mxu0 0.0
    %2239 = vmatprep.subr.mxu0 0.0
    %2240 = vmatpush1.msra.mxu0 0.0
    %2241 = vmatprep.subr.mxu0 0.0
    %2242 = vmatpush1.msra.mxu0 0.0
    %2243 = vmatprep.subr.mxu0 0.0
    %2244 = vmatpush1.msra.mxu0 0.0
    %2245 = vmatprep.mubr.f32.mxu0 0.0
    %2246 = vmatmul.mubr.f32.gmra.mrb[0].mxu0 %v2179
    %v2247 = vpop.f32.mrb[0].mxu0
    %v2248 = vadd.f32 0.0, %v2247
    %v2249 = vpop.f32.mrb[0].mxu0
    %2250 = vdwg.mxu0
    %v2251 = vadd.f32 %v2173, %v2248
    %v2252 = vxor.u32 %v2251, 2147483648
    %v2253 = vmul.f32 %v2252, 1.442695
    %v2254 = vpow.pop %v2253
    %v2255 = vadd.f32 %v2254, 1.0
    %v2256 = vrcp.pop %v2255
    %v2257 = vmul.f32 1.0, %v2256
    %v2258 = vmul.f32 %v2257, 2.0
    %v2259 = vsub.f32 %v2258, 1.0
    %v2260 = vmul.f32 %v2257, %v1991
    %2262 = vrot.lane.b32.xlu0 %v2259, 64
    %v2263 = vpop.permute.xlu0 %2262
    %v2265 = vmul.f32 %v2257, %v2263
    %2267 = vrot.lane.b32.xlu0 %v2265, 32
    %v2268 = vpop.permute.xlu0 %2267
    %v2270 = vadd.f32 %v2260, %v2268
    %v2271 = vtanh.pop %v2270
    %2273 = vrot.lane.b32.xlu0 %v2271, 64
    %v2274 = vpop.permute.xlu0 %2273
    %v2276 = vmul.f32 %v2257, %v2274
    %v2278 = vrot.slane %v2105, 6
    %2279 = vrot.lane.b32.xlu0 %v2278, 32
    %v2280 = vpop.permute.xlu0 %2279
    %v2281 = vsel %vm217, %v2280, 0
    %2283 = vmatprep.subr.mxu0 0.0
    %2284 = vmatpush1.msra.mxu0 %v99
    %2285 = vmatprep.subr.mxu0 0.0
    %2286 = vmatpush1.msra.mxu0 %v100
    %2287 = vmatprep.subr.mxu0 0.0
    %2288 = vmatpush1.msra.mxu0 %v101
    %2289 = vmatprep.subr.mxu0 0.0
    %2290 = vmatpush1.msra.mxu0 %v102
    %2291 = vmatprep.subr.mxu0 0.0
    %2292 = vmatpush1.msra.mxu0 0.0
    %2293 = vmatprep.subr.mxu0 0.0
    %2294 = vmatpush1.msra.mxu0 0.0
    %2295 = vmatprep.subr.mxu0 0.0
    %2296 = vmatpush1.msra.mxu0 0.0
    %2297 = vmatprep.subr.mxu0 0.0
    %2298 = vmatpush1.msra.mxu0 0.0
    %2299 = vmatprep.subr.mxu0 0.0
    %2300 = vmatpush1.msra.mxu0 0.0
    %2301 = vmatprep.subr.mxu0 0.0
    %2302 = vmatpush1.msra.mxu0 0.0
    %2303 = vmatprep.subr.mxu0 0.0
    %2304 = vmatpush1.msra.mxu0 0.0
    %2305 = vmatprep.subr.mxu0 0.0
    %2306 = vmatpush1.msra.mxu0 0.0
    %2307 = vmatprep.subr.mxu0 0.0
    %2308 = vmatpush1.msra.mxu0 0.0
    %2309 = vmatprep.subr.mxu0 0.0
    %2310 = vmatpush1.msra.mxu0 0.0
    %2311 = vmatprep.subr.mxu0 0.0
    %2312 = vmatpush1.msra.mxu0 0.0
    %2313 = vmatprep.subr.mxu0 0.0
    %2314 = vmatpush1.msra.mxu0 0.0
    %2315 = vmatprep.subr.mxu0 0.0
    %2316 = vmatpush1.msra.mxu0 0.0
    %2317 = vmatprep.subr.mxu0 0.0
    %2318 = vmatpush1.msra.mxu0 0.0
    %2319 = vmatprep.subr.mxu0 0.0
    %2320 = vmatpush1.msra.mxu0 0.0
    %2321 = vmatprep.subr.mxu0 0.0
    %2322 = vmatpush1.msra.mxu0 0.0
    %2323 = vmatprep.subr.mxu0 0.0
    %2324 = vmatpush1.msra.mxu0 0.0
    %2325 = vmatprep.subr.mxu0 0.0
    %2326 = vmatpush1.msra.mxu0 0.0
    %2327 = vmatprep.subr.mxu0 0.0
    %2328 = vmatpush1.msra.mxu0 0.0
    %2329 = vmatprep.subr.mxu0 0.0
    %2330 = vmatpush1.msra.mxu0 0.0
    %2331 = vmatprep.subr.mxu0 0.0
    %2332 = vmatpush1.msra.mxu0 0.0
    %2333 = vmatprep.subr.mxu0 0.0
    %2334 = vmatpush1.msra.mxu0 0.0
    %2335 = vmatprep.subr.mxu0 0.0
    %2336 = vmatpush1.msra.mxu0 0.0
    %2337 = vmatprep.subr.mxu0 0.0
    %2338 = vmatpush1.msra.mxu0 0.0
    %2339 = vmatprep.subr.mxu0 0.0
    %2340 = vmatpush1.msra.mxu0 0.0
    %2341 = vmatprep.subr.mxu0 0.0
    %2342 = vmatpush1.msra.mxu0 0.0
    %2343 = vmatprep.subr.mxu0 0.0
    %2344 = vmatpush1.msra.mxu0 0.0
    %2345 = vmatprep.subr.mxu0 0.0
    %2346 = vmatpush1.msra.mxu0 0.0
    %2347 = vmatprep.mubr.f32.mxu0 0.0
    %2348 = vmatmul.mubr.f32.gmra.mrb[0].mxu0 %v2281
    %v2349 = vpop.f32.mrb[0].mxu0
    %v2350 = vadd.f32 %v432, %v2349
    %v2351 = vpop.f32.mrb[0].mxu0
    %2352 = vdwg.mxu0
    %2354 = vrot.lane.b32.xlu0 %v2276, 32
    %v2355 = vpop.permute.xlu0 %2354
    %v2356 = vsel %vm217, %v2355, 0
    %2358 = vmatprep.subr.mxu0 0.0
    %2359 = vmatpush1.msra.mxu0 %v103
    %2360 = vmatprep.subr.mxu0 0.0
    %2361 = vmatpush1.msra.mxu0 %v104
    %2362 = vmatprep.subr.mxu0 0.0
    %2363 = vmatpush1.msra.mxu0 %v105
    %2364 = vmatprep.subr.mxu0 0.0
    %2365 = vmatpush1.msra.mxu0 %v106
    %2366 = vmatprep.subr.mxu0 0.0
    %2367 = vmatpush1.msra.mxu0 0.0
    %2368 = vmatprep.subr.mxu0 0.0
    %2369 = vmatpush1.msra.mxu0 0.0
    %2370 = vmatprep.subr.mxu0 0.0
    %2371 = vmatpush1.msra.mxu0 0.0
    %2372 = vmatprep.subr.mxu0 0.0
    %2373 = vmatpush1.msra.mxu0 0.0
    %2374 = vmatprep.subr.mxu0 0.0
    %2375 = vmatpush1.msra.mxu0 0.0
    %2376 = vmatprep.subr.mxu0 0.0
    %2377 = vmatpush1.msra.mxu0 0.0
    %2378 = vmatprep.subr.mxu0 0.0
    %2379 = vmatpush1.msra.mxu0 0.0
    %2380 = vmatprep.subr.mxu0 0.0
    %2381 = vmatpush1.msra.mxu0 0.0
    %2382 = vmatprep.subr.mxu0 0.0
    %2383 = vmatpush1.msra.mxu0 0.0
    %2384 = vmatprep.subr.mxu0 0.0
    %2385 = vmatpush1.msra.mxu0 0.0
    %2386 = vmatprep.subr.mxu0 0.0
    %2387 = vmatpush1.msra.mxu0 0.0
    %2388 = vmatprep.subr.mxu0 0.0
    %2389 = vmatpush1.msra.mxu0 0.0
    %2390 = vmatprep.subr.mxu0 0.0
    %2391 = vmatpush1.msra.mxu0 0.0
    %2392 = vmatprep.subr.mxu0 0.0
    %2393 = vmatpush1.msra.mxu0 0.0
    %2394 = vmatprep.subr.mxu0 0.0
    %2395 = vmatpush1.msra.mxu0 0.0
    %2396 = vmatprep.subr.mxu0 0.0
    %2397 = vmatpush1.msra.mxu0 0.0
    %2398 = vmatprep.subr.mxu0 0.0
    %2399 = vmatpush1.msra.mxu0 0.0
    %2400 = vmatprep.subr.mxu0 0.0
    %2401 = vmatpush1.msra.mxu0 0.0
    %2402 = vmatprep.subr.mxu0 0.0
    %2403 = vmatpush1.msra.mxu0 0.0
    %2404 = vmatprep.subr.mxu0 0.0
    %2405 = vmatpush1.msra.mxu0 0.0
    %2406 = vmatprep.subr.mxu0 0.0
    %2407 = vmatpush1.msra.mxu0 0.0
    %2408 = vmatprep.subr.mxu0 0.0
    %2409 = vmatpush1.msra.mxu0 0.0
    %2410 = vmatprep.subr.mxu0 0.0
    %2411 = vmatpush1.msra.mxu0 0.0
    %2412 = vmatprep.subr.mxu0 0.0
    %2413 = vmatpush1.msra.mxu0 0.0
    %2414 = vmatprep.subr.mxu0 0.0
    %2415 = vmatpush1.msra.mxu0 0.0
    %2416 = vmatprep.subr.mxu0 0.0
    %2417 = vmatpush1.msra.mxu0 0.0
    %2418 = vmatprep.subr.mxu0 0.0
    %2419 = vmatpush1.msra.mxu0 0.0
    %2420 = vmatprep.subr.mxu0 0.0
    %2421 = vmatpush1.msra.mxu0 0.0
    %2422 = vmatprep.mubr.f32.mxu0 0.0
    %2423 = vmatmul.mubr.f32.gmra.mrb[0].mxu0 %v2356
    %v2424 = vpop.f32.mrb[0].mxu0
    %v2425 = vadd.f32 0.0, %v2424
    %v2426 = vpop.f32.mrb[0].mxu0
    %2427 = vdwg.mxu0
    %v2428 = vadd.f32 %v2350, %v2425
    %v2429 = vxor.u32 %v2428, 2147483648
    %v2430 = vmul.f32 %v2429, 1.442695
    %v2431 = vpow.pop %v2430
    %v2432 = vadd.f32 %v2431, 1.0
    %v2433 = vrcp.pop %v2432
    %v2434 = vmul.f32 1.0, %v2433
    %v2435 = vmul.f32 %v2434, 2.0
    %v2436 = vsub.f32 %v2435, 1.0
    %v2437 = vmul.f32 %v2434, %v2270
    %2439 = vrot.lane.b32.xlu0 %v2436, 64
    %v2440 = vpop.permute.xlu0 %2439
    %v2442 = vmul.f32 %v2434, %v2440
    %2444 = vrot.lane.b32.xlu0 %v2442, 32
    %v2445 = vpop.permute.xlu0 %2444
    %v2447 = vadd.f32 %v2437, %v2445
    %v2448 = vtanh.pop %v2447
    %2450 = vrot.lane.b32.xlu0 %v2448, 64
    %v2451 = vpop.permute.xlu0 %2450
    %v2453 = vmul.f32 %v2434, %v2451
    %2454 = vrot.lane.b32.xlu0 %v2105, 32
    %v2455 = vpop.permute.xlu0 %2454
    %vm2457 = vcmask 261126
    %2458 = vst.msk [vmem:[#allocation11 - $0x6] sm:$0xc0] %vm2457, %v2455
    %2460 = vrot.lane.b32.xlu0 %v2099, 96
    %v2461 = vpop.permute.xlu0 %2460
    %2463 = vst.msk [vmem:[#allocation12 - $0x6] sm:$0xc0] %vm2457, %v2461
    %2465 = vrot.lane.b32.xlu0 %v2453, 32
    %v2466 = vpop.permute.xlu0 %2465
    %s2468 = scalar_lea.vmem [#allocation11], 2
    %vm2469 = vcmask 254976
    %2470 = vst.msk [vmem:[%s2468] sm:$0x3] %vm2469, %v2466
    %2472 = vrot.lane.b32.xlu0 %v2447, 96
    %v2473 = vpop.permute.xlu0 %2472
    %s2475 = scalar_lea.vmem [#allocation12], 2
    %2476 = vst.msk [vmem:[%s2475] sm:$0x3] %vm2469, %v2473
    %v2477 = vld [vmem:[#allocation9] sm:$0x1]
    %v2479 = vlaneseq
    %v2480 = vshrl.u32 %v2479, 7
    %v2481 = vsub.s32 0, %v2480
    %v2482 = vrot.slane %v2477, %v2481
    %2483 = vrot.lane.b32.xlu0 %v2482, 96
    %v2484 = vpop.permute.xlu0 %2483
    %v2486 = vmul.f32 %v2453, %v2484
    %2488 = vrot.lane.b32.xlu0 %v2486, 32
    %v2489 = vpop.permute.xlu0 %2488
    %v2491 = vsel %vm2469, %v2489, 0.0
    %2492 = vadd.xlane.f32.xlu0 %v2491
    %v2493 = vpop.xlane.xlu0 %2492
    %v2494 = vld [vmem:[#allocation2] sm:$0x1]
    %v2496 = vlaneseq
    %v2497 = vshrl.u32 %v2496, 7
    %v2498 = vsub.s32 0, %v2497
    %v2499 = vrot.slane %v2494, %v2498
    %v2501 = vadd.f32 %v2493, %v2499
    %v2502 = vxor.u32 %v2501, 2147483648
    %v2503 = vmul.f32 %v2502, 1.442695
    %v2504 = vpow.pop %v2503
    %v2505 = vadd.f32 %v2504, 1.0
    %v2506 = vrcp.pop %v2505
    %v2507 = vmul.f32 1.0, %v2506
    %vm2508 = vcmask 1024
    %2509 = vst.msk [vmem:[%s10] sm:$0x3] %vm2508, %v2507
    // Predicated region
    $region58: #{lstm_model_forward.1} parent=1 // pred_check
      _
    $region59: #{lstm_model_forward.1} parent=1 // pred_check_branch
      %2511 = sbr.rel (0) target = $region61
    $region60: #{lstm_model_forward.1} parent=1 // pred_region
      _
    $region61: #{lstm_model_forward.1} parent=1 // pred_fallthru
      _
    // Predicated region
    $region62: #{lstm_model_forward.1} parent=1 // pred_check
      _
    $region63: #{lstm_model_forward.1} parent=1 // pred_check_branch
      %2513 = sbr.rel (0) target = $region65
    $region64: #{lstm_model_forward.1} parent=1 // pred_region
      %s2515 = ssub.s32 64, 64
      %2516 = vsyncadd [#allocation5], %s2515
      %s2517 = sshll.u32 [#allocation11], 4
      %s2518 = int_to_ptr.vmem [resolvable:$true] %s2517
      %2523 = dma.vmem_to_hbm [thread:$0]  %s2518, 64, %s11, [#allocation5], 32, 32, 2
    $region65: #{lstm_model_forward.1} parent=1 // pred_fallthru
      _
    // Predicated region
    $region66: #{lstm_model_forward.1} parent=1 // pred_check
      _
    $region67: #{lstm_model_forward.1} parent=1 // pred_check_branch
      %2525 = sbr.rel (0) target = $region69
    $region68: #{lstm_model_forward.1} parent=1 // pred_region
      %s2527 = ssub.s32 64, 64
      %2528 = vsyncadd [#allocation13], %s2527
      %s2529 = sshll.u32 [#allocation12], 4
      %s2530 = int_to_ptr.vmem [resolvable:$true] %s2529
      %2535 = dma.vmem_to_hbm [thread:$0]  %s2530, 64, %s12, [#allocation13], 32, 32, 2
    $region69: #{lstm_model_forward.1} parent=1 // pred_fallthru
      _
    // Predicated region
    $region70: #{lstm_model_forward.1} parent=1 // pred_check
      _
    $region71: #{lstm_model_forward.1} parent=1 // pred_check_branch
      %2537 = sbr.rel (0) target = $region73
    $region72: #{lstm_model_forward.1} parent=1 // pred_region
      _
    $region73: #{lstm_model_forward.1} parent=1 // pred_fallthru
      _
    // Predicated region
    $region74: #{lstm_model_forward.1} parent=1 // pred_check
      _
    $region75: #{lstm_model_forward.1} parent=1 // pred_check_branch
      %2539 = sbr.rel (0) target = $region77
    $region76: #{lstm_model_forward.1} parent=1 // pred_region
      %2540 = dma.done [#allocation5], 64
    $region77: #{lstm_model_forward.1} parent=1 // pred_fallthru
      _
    // Predicated region
    $region78: #{lstm_model_forward.1} parent=1 // pred_check
      _
    $region79: #{lstm_model_forward.1} parent=1 // pred_check_branch
      %2542 = sbr.rel (0) target = $region81
    $region80: #{lstm_model_forward.1} parent=1 // pred_region
      %2543 = dma.done [#allocation13], 64
    $region81: #{lstm_model_forward.1} parent=1 // pred_fallthru
      _
    %2544 = vsyncpa [#allocation4], 1
    %2545 = vsyncpa [#allocation7], 1
    %2546 = vsyncpa [#allocation10], 1
    %2547 = vsyncpa [#allocation5], 1
    %2548 = vsyncpa [#allocation13], 1

</llo_original>
